<compile_context>
chip_gen: v7x
topology: tpu7x:2x2x1
jax: 0.10.0
libtpu: 0.0.40
codegen_flags: <defaults>
</compile_context>

<pallas_src>
import functools
import math

import jax
import jax.numpy as jnp
from jax.experimental import pallas as pl
from jax.experimental.pallas import tpu as pltpu

# ---------------- small deterministic BERT config ----------------
VOCAB = 128
HIDDEN = 32
LAYERS = 2
HEADS = 2
HEAD_DIM = HIDDEN // HEADS
INTERMEDIATE = 64
MAX_POS = 64
TYPE_VOCAB = 2
LN_EPS = 1e-12
B, S = 2, 8

_SQRT1_2 = 1.0 / math.sqrt(2.0)


# ---------------- in-kernel helpers (operate on values, not refs) ----------------
def _gelu(x):  # exact (erf) GELU, HF BERT default, f32
    return 0.5 * x * (1.0 + jax.lax.erf(x * _SQRT1_2))


def _ln(x, g, b, eps):  # f32 LayerNorm over last dim
    mu = jnp.mean(x, axis=-1, keepdims=True)
    xc = x - mu
    var = jnp.mean(xc * xc, axis=-1, keepdims=True)
    return xc * jax.lax.rsqrt(var + eps) * g + b


# ---------------- fused encoder-stack kernel (grid over layers) ----------------
def _encoder_stack_kernel(
    xemb_ref, mask_ref, embg_ref, embb_ref,
    wqkv_ref, bqkv_ref, wo_ref, bo_ref, ln1g_ref, ln1b_ref,
    w1_ref, b1_ref, w2_ref, b2_ref, ln2g_ref, ln2b_ref,
    o_ref, x_vmem, *, heads, head_dim, eps,
):
    l = pl.program_id(0)

    @pl.when(l == 0)
    def _():
        # embeddings LayerNorm fused into the first grid step; afterwards the
        # activation stays resident in VMEM for the whole encoder stack.
        x_vmem[...] = _ln(xemb_ref[...], embg_ref[...], embb_ref[...], eps)

    x = x_vmem[...]                        # (M, H) f32, M = B*S folded into rows
    xb = x.astype(jnp.bfloat16)
    mask = mask_ref[...]                   # (M, M) additive f32, block-diag over batch
    scale = 1.0 / math.sqrt(head_dim)

    # ---- self-attention; per-head weights indexed on the leading axis ----
    attn = bo_ref[0]                       # (1, H) f32 output bias, broadcasts over rows
    for h in range(heads):                 # heads=2: short static unroll
        q = jnp.dot(xb, wqkv_ref[h], preferred_element_type=jnp.float32) + bqkv_ref[h]
        k = jnp.dot(xb, wqkv_ref[heads + h], preferred_element_type=jnp.float32) + bqkv_ref[heads + h]
        v = jnp.dot(xb, wqkv_ref[2 * heads + h], preferred_element_type=jnp.float32) + bqkv_ref[2 * heads + h]

        s = jax.lax.dot_general(q.astype(jnp.bfloat16), k.astype(jnp.bfloat16),
                                (((1,), (1,)), ((), ())),
                                preferred_element_type=jnp.float32)      # (M, M) f32
        s = s * scale + mask               # mask add in f32
        s = s - jnp.max(s, axis=-1, keepdims=True)
        p = jnp.exp(s)
        # approx reciprocal on the EUP slot; denominator >= 1 after max-subtraction
        p = p * pl.reciprocal(jnp.sum(p, axis=-1, keepdims=True), approx=True)

        ctx = jnp.dot(p.astype(jnp.bfloat16), v.astype(jnp.bfloat16),
                      preferred_element_type=jnp.float32)                # (M, Dh)
        # ctx @ Wo == sum_h ctx_h @ Wo[h*Dh:(h+1)*Dh, :] (Wo row blocks pre-split host-side)
        attn = attn + jnp.dot(ctx.astype(jnp.bfloat16), wo_ref[h],
                              preferred_element_type=jnp.float32)

    # ---- residual + LayerNorm ----
    x1 = _ln(x + attn, ln1g_ref[0], ln1b_ref[0], eps)

    # ---- FFN + residual + LayerNorm ----
    hmid = _gelu(jnp.dot(x1.astype(jnp.bfloat16), w1_ref[0],
                         preferred_element_type=jnp.float32) + b1_ref[0])
    ffn = jnp.dot(hmid.astype(jnp.bfloat16), w2_ref[0],
                  preferred_element_type=jnp.float32) + b2_ref[0]
    x2 = _ln(x1 + ffn, ln2g_ref[0], ln2b_ref[0], eps)

    x_vmem[...] = x2                       # carry activation to the next layer (VMEM only)

    @pl.when(l == pl.num_programs(0) - 1)
    def _():
        o_ref[...] = x2                    # single HBM write at the end of the stack


def encoder_stack(x_emb, add_mask, p):
    M, H = x_emb.shape
    return pl.pallas_call(
        functools.partial(_encoder_stack_kernel,
                          heads=HEADS, head_dim=HEAD_DIM, eps=LN_EPS),
        out_shape=jax.ShapeDtypeStruct((M, H), jnp.float32),
        grid=(LAYERS,),
        in_specs=[
            pl.BlockSpec((M, H), lambda l: (0, 0)),                      # embedding sum (pre-LN)
            pl.BlockSpec((M, M), lambda l: (0, 0)),                      # additive block-diag mask
            pl.BlockSpec((1, H), lambda l: (0, 0)),                      # emb LN gamma
            pl.BlockSpec((1, H), lambda l: (0, 0)),                      # emb LN beta
            pl.BlockSpec((3 * HEADS, H, HEAD_DIM), lambda l: (l, 0, 0)),  # per-head Wq|Wk|Wv (bf16)
            pl.BlockSpec((3 * HEADS, 1, HEAD_DIM), lambda l: (l, 0, 0)),  # per-head bq|bk|bv (f32)
            pl.BlockSpec((HEADS, HEAD_DIM, H), lambda l: (l, 0, 0)),      # per-head Wo rows (bf16)
            pl.BlockSpec((1, 1, H), lambda l: (l, 0, 0)),                # bo
            pl.BlockSpec((1, 1, H), lambda l: (l, 0, 0)),                # attn LN gamma
            pl.BlockSpec((1, 1, H), lambda l: (l, 0, 0)),                # attn LN beta
            pl.BlockSpec((1, H, INTERMEDIATE), lambda l: (l, 0, 0)),     # W1 (bf16)
            pl.BlockSpec((1, 1, INTERMEDIATE), lambda l: (l, 0, 0)),     # b1
            pl.BlockSpec((1, INTERMEDIATE, H), lambda l: (l, 0, 0)),     # W2 (bf16)
            pl.BlockSpec((1, 1, H), lambda l: (l, 0, 0)),                # b2
            pl.BlockSpec((1, 1, H), lambda l: (l, 0, 0)),                # ffn LN gamma
            pl.BlockSpec((1, 1, H), lambda l: (l, 0, 0)),                # ffn LN beta
        ],
        out_specs=pl.BlockSpec((M, H), lambda l: (0, 0)),
        scratch_shapes=[pltpu.VMEM((M, H), jnp.float32)],                # resident activation
        compiler_params=pltpu.CompilerParams(dimension_semantics=("arbitrary",)),
    )(
        x_emb, add_mask, p["emb_ln_g"], p["emb_ln_b"],
        p["enc_wqkv"], p["enc_bqkv"], p["enc_wo"], p["enc_bo"],
        p["enc_ln1g"], p["enc_ln1b"],
        p["enc_w1"], p["enc_b1"], p["enc_w2"], p["enc_b2"],
        p["enc_ln2g"], p["enc_ln2b"],
    )


# ---------------- fused MLM head + pooler/NSP kernel ----------------
def _heads_kernel(seq_ref, cls_ref,
                  mlm_w_ref, mlm_b_ref, mlm_g_ref, mlm_beta_ref,
                  dec_w_ref, dec_b_ref,
                  pool_w_ref, pool_b_ref, nsp_w_ref, nsp_b_ref,
                  mlm_o_ref, nsp_o_ref, *, eps):
    # MLM transform: dense + GELU + LN + tied decoder (lane-dense V=128 output)
    h = jnp.dot(seq_ref[...].astype(jnp.bfloat16), mlm_w_ref[...],
                preferred_element_type=jnp.float32) + mlm_b_ref[...]
    h = _ln(_gelu(h), mlm_g_ref[...], mlm_beta_ref[...], eps)
    mlm_o_ref[...] = jnp.dot(h.astype(jnp.bfloat16), dec_w_ref[...],
                             preferred_element_type=jnp.float32) + dec_b_ref[...]
    # pooler (tanh) + NSP classifier
    pooled = jnp.tanh(jnp.dot(cls_ref[...].astype(jnp.bfloat16), pool_w_ref[...],
                              preferred_element_type=jnp.float32) + pool_b_ref[...])
    nsp_o_ref[...] = jnp.dot(pooled.astype(jnp.bfloat16), nsp_w_ref[...],
                             preferred_element_type=jnp.float32) + nsp_b_ref[...]


def mlm_nsp_heads(seq, cls_tok, p):
    M, H = seq.shape
    V = p["decoder_wt"].shape[1]
    Bb = cls_tok.shape[0]
    return pl.pallas_call(
        functools.partial(_heads_kernel, eps=LN_EPS),
        out_shape=(jax.ShapeDtypeStruct((M, V), jnp.float32),
                   jax.ShapeDtypeStruct((Bb, 2), jnp.float32)),
        grid=(1,),
        in_specs=[
            pl.BlockSpec((M, H), lambda i: (0, 0)),
            pl.BlockSpec((Bb, H), lambda i: (0, 0)),
            pl.BlockSpec((H, H), lambda i: (0, 0)),
            pl.BlockSpec((1, H), lambda i: (0, 0)),
            pl.BlockSpec((1, H), lambda i: (0, 0)),
            pl.BlockSpec((1, H), lambda i: (0, 0)),
            pl.BlockSpec((H, V), lambda i: (0, 0)),
            pl.BlockSpec((1, V), lambda i: (0, 0)),
            pl.BlockSpec((H, H), lambda i: (0, 0)),
            pl.BlockSpec((1, H), lambda i: (0, 0)),
            pl.BlockSpec((H, 2), lambda i: (0, 0)),
            pl.BlockSpec((1, 2), lambda i: (0, 0)),
        ],
        out_specs=(pl.BlockSpec((M, V), lambda i: (0, 0)),
                   pl.BlockSpec((Bb, 2), lambda i: (0, 0))),
    )(seq, cls_tok,
      p["mlm_w"], p["mlm_b"], p["mlm_ln_g"], p["mlm_ln_b"],
      p["decoder_wt"], p["decoder_b"],
      p["pooler_w"], p["pooler_b"], p["nsp_w"], p["nsp_b"])


# ---------------- deterministic parameter init ----------------
def _split_heads_proj(w):
    # (H, H) -> (HEADS, H, Dh); head h gets columns [h*Dh:(h+1)*Dh] (HF layout)
    return w.reshape(HIDDEN, HEADS, HEAD_DIM).transpose(1, 0, 2)


def init_params(key):
    kiter = iter(jax.random.split(key, 128))

    def nrm(shape, scale=0.02):
        return scale * jax.random.normal(next(kiter), shape, dtype=jnp.float32)

    word_emb = nrm((VOCAB, HIDDEN))

    wqkv_layers, wo_layers, w1_layers, w2_layers = [], [], [], []
    for _ in range(LAYERS):
        wq, wk, wv = nrm((HIDDEN, HIDDEN)), nrm((HIDDEN, HIDDEN)), nrm((HIDDEN, HIDDEN))
        wo = nrm((HIDDEN, HIDDEN))
        # per-(kind, head) stacking: rows [kind*HEADS + h], each (H, Dh)
        wqkv_layers.append(jnp.concatenate(
            [_split_heads_proj(wq), _split_heads_proj(wk), _split_heads_proj(wv)], axis=0))
        # Wo split into per-head row blocks: (HEADS, Dh, H)
        wo_layers.append(wo.reshape(HEADS, HEAD_DIM, HIDDEN))
        w1_layers.append(nrm((HIDDEN, INTERMEDIATE)))
        w2_layers.append(nrm((INTERMEDIATE, HIDDEN)))

    p = {
        # embeddings (gathers stay in XLA; LN params consumed by the fused encoder kernel)
        "word_emb": word_emb,
        "pos_emb": nrm((MAX_POS, HIDDEN)),
        "type_emb": nrm((TYPE_VOCAB, HIDDEN)),
        "emb_ln_g": jnp.ones((1, HIDDEN), jnp.float32),
        "emb_ln_b": jnp.zeros((1, HIDDEN), jnp.float32),
        # encoder weights stacked over layers; matmul weights stored bf16 (MXU-native),
        # biases / LayerNorm params kept f32.
        "enc_wqkv": jnp.concatenate(wqkv_layers, axis=0).astype(jnp.bfloat16),  # (L*3*HEADS, H, Dh)
        "enc_bqkv": jnp.zeros((LAYERS * 3 * HEADS, 1, HEAD_DIM), jnp.float32),  # (L*3*HEADS, 1, Dh)
        "enc_wo": jnp.concatenate(wo_layers, axis=0).astype(jnp.bfloat16),      # (L*HEADS, Dh, H)
        "enc_bo": jnp.zeros((LAYERS, 1, HIDDEN), jnp.float32),
        "enc_ln1g": jnp.ones((LAYERS, 1, HIDDEN), jnp.float32),
        "enc_ln1b": jnp.zeros((LAYERS, 1, HIDDEN), jnp.float32),
        "enc_w1": jnp.stack(w1_layers).astype(jnp.bfloat16),                    # (L, H, I)
        "enc_b1": jnp.zeros((LAYERS, 1, INTERMEDIATE), jnp.float32),
        "enc_w2": jnp.stack(w2_layers).astype(jnp.bfloat16),                    # (L, I, H)
        "enc_b2": jnp.zeros((LAYERS, 1, HIDDEN), jnp.float32),
        "enc_ln2g": jnp.ones((LAYERS, 1, HIDDEN), jnp.float32),
        "enc_ln2b": jnp.zeros((LAYERS, 1, HIDDEN), jnp.float32),
        # MLM head (decoder tied to word embeddings at init; forward-only)
        "mlm_w": nrm((HIDDEN, HIDDEN)).astype(jnp.bfloat16),
        "mlm_b": jnp.zeros((1, HIDDEN), jnp.float32),
        "mlm_ln_g": jnp.ones((1, HIDDEN), jnp.float32),
        "mlm_ln_b": jnp.zeros((1, HIDDEN), jnp.float32),
        "decoder_wt": word_emb.T.astype(jnp.bfloat16),
        "decoder_b": jnp.zeros((1, VOCAB), jnp.float32),
        # pooler + NSP
        "pooler_w": nrm((HIDDEN, HIDDEN)).astype(jnp.bfloat16),
        "pooler_b": jnp.zeros((1, HIDDEN), jnp.float32),
        "nsp_w": nrm((HIDDEN, 2)).astype(jnp.bfloat16),
        "nsp_b": jnp.zeros((1, 2), jnp.float32),
    }
    return p


# ---------------- forward pass (BertForPreTraining, eval / no dropout) ----------------
def bert_for_pretraining(params, input_ids, token_type_ids, attention_mask):
    Bb, Ss = input_ids.shape
    M = Bb * Ss

    # --- embeddings: gathers + add are XLA glue; LayerNorm fused into encoder l==0 ---
    we = jnp.take(params["word_emb"], input_ids, axis=0)          # (B,S,H)
    pe = params["pos_emb"][:Ss][None, :, :]                       # (1,S,H)
    te = jnp.take(params["type_emb"], token_type_ids, axis=0)     # (B,S,H)
    x_emb = (we + pe + te).reshape(M, HIDDEN)                     # (B*S, H) pre-LN

    # --- additive attention mask, batch folded into rows: block-diagonal (M, M),
    #     0 = keep (same batch & unpadded key), -1e9 = masked; applied in f32 ---
    att = attention_mask.astype(jnp.float32)                      # (B, S)
    block_diag = jnp.kron(jnp.eye(Bb, dtype=jnp.float32),
                          jnp.ones((Ss, Ss), jnp.float32))        # (M, M)
    add_mask = (1.0 - block_diag * att.reshape(1, M)) * -1e9

    # --- whole encoder stack in ONE pallas_call (grid over layers) ---
    seq = encoder_stack(x_emb, add_mask, params)                  # (M, H)

    # --- MLM head + pooler/NSP fused into one pallas_call ---
    cls_tok = seq.reshape(Bb, Ss, HIDDEN)[:, 0, :]                # (B, H), XLA slice
    prediction_logits, seq_relationship_logits = mlm_nsp_heads(seq, cls_tok, params)

    # TODO(synk): MLM/NSP cross-entropy loss only applies when labels are passed;
    # forward without labels returns the two logits, as here.
    return prediction_logits.reshape(Bb, Ss, VOCAB), seq_relationship_logits


if __name__ == "__main__":
    key = jax.random.PRNGKey(0)
    pkey, ikey = jax.random.split(key)
    params = init_params(pkey)

    input_ids = jax.random.randint(ikey, (B, S), 0, VOCAB, dtype=jnp.int32)
    token_type_ids = jnp.concatenate(
        [jnp.zeros((B, S // 2), jnp.int32), jnp.ones((B, S // 2), jnp.int32)], axis=1
    )
    attention_mask = jnp.ones((B, S), jnp.int32)

    fwd = jax.jit(bert_for_pretraining)
    prediction_logits, seq_relationship_logits = fwd(
        params, input_ids, token_type_ids, attention_mask
    )
    jax.block_until_ready((prediction_logits, seq_relationship_logits))

    assert prediction_logits.shape == (B, S, VOCAB)
    assert seq_relationship_logits.shape == (B, 2)
    print("KERNEL_OK")
</pallas_src>

<mosaic_0001>
module attributes {stable_mosaic.version = 11 : i64} {
  func.func @_heads_kernel(%arg0: i32, %arg1: memref<16x32xf32, #tpu.memory_space<vmem>>, %arg2: memref<2x32xf32, #tpu.memory_space<vmem>>, %arg3: memref<32x32xbf16, #tpu.memory_space<vmem>>, %arg4: memref<1x32xf32, #tpu.memory_space<vmem>>, %arg5: memref<1x32xf32, #tpu.memory_space<vmem>>, %arg6: memref<1x32xf32, #tpu.memory_space<vmem>>, %arg7: memref<32x128xbf16, #tpu.memory_space<vmem>>, %arg8: memref<1x128xf32, #tpu.memory_space<vmem>>, %arg9: memref<32x32xbf16, #tpu.memory_space<vmem>>, %arg10: memref<1x32xf32, #tpu.memory_space<vmem>>, %arg11: memref<32x2xbf16, #tpu.memory_space<vmem>>, %arg12: memref<1x2xf32, #tpu.memory_space<vmem>>, %arg13: memref<16x128xf32, #tpu.memory_space<vmem>>, %arg14: memref<2x2xf32, #tpu.memory_space<vmem>>) attributes {dimension_semantics = [#tpu.dimension_semantics<arbitrary>], iteration_bounds = array<i64: 1>, scalar_prefetch = 0 : i64, scratch_operands = 0 : i64, tpu.core_type = #tpu.core_type<tc>, window_params = [{pipeline_mode = #tpu.pipeline_mode<synchronous>, transform_indices = @transform_0, window_bounds = array<i64: 16, 32>}, {pipeline_mode = #tpu.pipeline_mode<synchronous>, transform_indices = @transform_1, window_bounds = array<i64: 2, 32>}, {pipeline_mode = #tpu.pipeline_mode<synchronous>, transform_indices = @transform_2, window_bounds = array<i64: 32, 32>}, {pipeline_mode = #tpu.pipeline_mode<synchronous>, transform_indices = @transform_3, window_bounds = array<i64: 1, 32>}, {pipeline_mode = #tpu.pipeline_mode<synchronous>, transform_indices = @transform_4, window_bounds = array<i64: 1, 32>}, {pipeline_mode = #tpu.pipeline_mode<synchronous>, transform_indices = @transform_5, window_bounds = array<i64: 1, 32>}, {pipeline_mode = #tpu.pipeline_mode<synchronous>, transform_indices = @transform_6, window_bounds = array<i64: 32, 128>}, {pipeline_mode = #tpu.pipeline_mode<synchronous>, transform_indices = @transform_7, window_bounds = array<i64: 1, 128>}, {pipeline_mode = #tpu.pipeline_mode<synchronous>, transform_indices = @transform_8, window_bounds = array<i64: 32, 32>}, {pipeline_mode = #tpu.pipeline_mode<synchronous>, transform_indices = @transform_9, window_bounds = array<i64: 1, 32>}, {pipeline_mode = #tpu.pipeline_mode<synchronous>, transform_indices = @transform_10, window_bounds = array<i64: 32, 2>}, {pipeline_mode = #tpu.pipeline_mode<synchronous>, transform_indices = @transform_11, window_bounds = array<i64: 1, 2>}, {pipeline_mode = #tpu.pipeline_mode<synchronous>, transform_indices = @transform_12, window_bounds = array<i64: 16, 128>}, {pipeline_mode = #tpu.pipeline_mode<synchronous>, transform_indices = @transform_13, window_bounds = array<i64: 2, 2>}]} {
    %c0 = arith.constant 0 : index
    %c0_0 = arith.constant 0 : index
    %0 = vector.load %arg1[%c0, %c0_0] : memref<16x32xf32, #tpu.memory_space<vmem>>, vector<16x32xf32>
    %1 = arith.truncf %0 : vector<16x32xf32> to vector<16x32xbf16>
    %c0_1 = arith.constant 0 : index
    %c0_2 = arith.constant 0 : index
    %2 = vector.load %arg3[%c0_1, %c0_2] : memref<32x32xbf16, #tpu.memory_space<vmem>>, vector<32x32xbf16>
    %cst = arith.constant dense<0.000000e+00> : vector<16x32xf32>
    %3 = tpu.matmul %1, %2, %cst {dimension_numbers = #tpu.dot_dimension_numbers<[1], [0], [0], [1], [0, 0, 1, 1], [], []>} : vector<16x32xbf16>, vector<32x32xbf16>, vector<16x32xf32> -> vector<16x32xf32>
    %c0_3 = arith.constant 0 : index
    %c0_4 = arith.constant 0 : index
    %4 = vector.load %arg4[%c0_3, %c0_4] : memref<1x32xf32, #tpu.memory_space<vmem>>, vector<1x32xf32>
    %5 = vector.broadcast %4 : vector<1x32xf32> to vector<16x32xf32>
    %6 = arith.addf %3, %5 : vector<16x32xf32>
    %cst_5 = arith.constant 5.000000e-01 : f32
    %7 = vector.broadcast %cst_5 : f32 to vector<16x32xf32>
    %8 = arith.mulf %7, %6 : vector<16x32xf32>
    %cst_6 = arith.constant 0.707106769 : f32
    %9 = vector.broadcast %cst_6 : f32 to vector<16x32xf32>
    %10 = arith.mulf %6, %9 : vector<16x32xf32>
    %11 = math.erf %10 : vector<16x32xf32>
    %cst_7 = arith.constant 1.000000e+00 : f32
    %12 = vector.broadcast %cst_7 : f32 to vector<16x32xf32>
    %13 = arith.addf %12, %11 : vector<16x32xf32>
    %14 = arith.mulf %8, %13 : vector<16x32xf32>
    %c0_8 = arith.constant 0 : index
    %c0_9 = arith.constant 0 : index
    %15 = vector.load %arg5[%c0_8, %c0_9] : memref<1x32xf32, #tpu.memory_space<vmem>>, vector<1x32xf32>
    %c0_10 = arith.constant 0 : index
    %c0_11 = arith.constant 0 : index
    %16 = vector.load %arg6[%c0_10, %c0_11] : memref<1x32xf32, #tpu.memory_space<vmem>>, vector<1x32xf32>
    %cst_12 = arith.constant dense<0.000000e+00> : vector<16xf32>
    %17 = vector.multi_reduction <add>, %14, %cst_12 [1] : vector<16x32xf32> to vector<16xf32>
    %18 = vector.shape_cast %17 : vector<16xf32> to vector<16x1xf32>
    %cst_13 = arith.constant 3.200000e+01 : f32
    %19 = vector.broadcast %cst_13 : f32 to vector<16x1xf32>
    %20 = arith.divf %18, %19 : vector<16x1xf32>
    %21 = vector.broadcast %20 : vector<16x1xf32> to vector<16x32xf32>
    %22 = arith.subf %14, %21 : vector<16x32xf32>
    %23 = arith.mulf %22, %22 : vector<16x32xf32>
    %cst_14 = arith.constant dense<0.000000e+00> : vector<16xf32>
    %24 = vector.multi_reduction <add>, %23, %cst_14 [1] : vector<16x32xf32> to vector<16xf32>
    %25 = vector.shape_cast %24 : vector<16xf32> to vector<16x1xf32>
    %cst_15 = arith.constant 3.200000e+01 : f32
    %26 = vector.broadcast %cst_15 : f32 to vector<16x1xf32>
    %27 = arith.divf %25, %26 : vector<16x1xf32>
    %cst_16 = arith.constant 9.99999996E-13 : f32
    %28 = vector.broadcast %cst_16 : f32 to vector<16x1xf32>
    %29 = arith.addf %27, %28 : vector<16x1xf32>
    %30 = math.rsqrt %29 : vector<16x1xf32>
    %31 = vector.broadcast %30 : vector<16x1xf32> to vector<16x32xf32>
    %32 = arith.mulf %22, %31 : vector<16x32xf32>
    %33 = vector.broadcast %15 : vector<1x32xf32> to vector<16x32xf32>
    %34 = arith.mulf %32, %33 : vector<16x32xf32>
    %35 = vector.broadcast %16 : vector<1x32xf32> to vector<16x32xf32>
    %36 = arith.addf %34, %35 : vector<16x32xf32>
    %37 = arith.truncf %36 : vector<16x32xf32> to vector<16x32xbf16>
    %c0_17 = arith.constant 0 : index
    %c0_18 = arith.constant 0 : index
    %38 = vector.load %arg7[%c0_17, %c0_18] : memref<32x128xbf16, #tpu.memory_space<vmem>>, vector<32x128xbf16>
    %cst_19 = arith.constant dense<0.000000e+00> : vector<16x128xf32>
    %39 = tpu.matmul %37, %38, %cst_19 {dimension_numbers = #tpu.dot_dimension_numbers<[1], [0], [0], [1], [0, 0, 1, 1], [], []>} : vector<16x32xbf16>, vector<32x128xbf16>, vector<16x128xf32> -> vector<16x128xf32>
    %c0_20 = arith.constant 0 : index
    %c0_21 = arith.constant 0 : index
    %40 = vector.load %arg8[%c0_20, %c0_21] : memref<1x128xf32, #tpu.memory_space<vmem>>, vector<1x128xf32>
    %41 = vector.broadcast %40 : vector<1x128xf32> to vector<16x128xf32>
    %42 = arith.addf %39, %41 : vector<16x128xf32>
    %c0_22 = arith.constant 0 : index
    %c0_23 = arith.constant 0 : index
    %43 = vector.load %arg13[%c0_22, %c0_23] : memref<16x128xf32, #tpu.memory_space<vmem>>, vector<16x128xf32>
    tpu.vector_store %arg13[%c0_22, %c0_23], %42 {strides = array<i32>} : memref<16x128xf32, #tpu.memory_space<vmem>>, vector<16x128xf32>,
    %c0_24 = arith.constant 0 : index
    %c0_25 = arith.constant 0 : index
    %44 = vector.load %arg2[%c0_24, %c0_25] : memref<2x32xf32, #tpu.memory_space<vmem>>, vector<2x32xf32>
    %45 = arith.truncf %44 : vector<2x32xf32> to vector<2x32xbf16>
    %c0_26 = arith.constant 0 : index
    %c0_27 = arith.constant 0 : index
    %46 = vector.load %arg9[%c0_26, %c0_27] : memref<32x32xbf16, #tpu.memory_space<vmem>>, vector<32x32xbf16>
    %cst_28 = arith.constant dense<0.000000e+00> : vector<2x32xf32>
    %47 = tpu.matmul %45, %46, %cst_28 {dimension_numbers = #tpu.dot_dimension_numbers<[1], [0], [0], [1], [0, 0, 1, 1], [], []>} : vector<2x32xbf16>, vector<32x32xbf16>, vector<2x32xf32> -> vector<2x32xf32>
    %c0_29 = arith.constant 0 : index
    %c0_30 = arith.constant 0 : index
    %48 = vector.load %arg10[%c0_29, %c0_30] : memref<1x32xf32, #tpu.memory_space<vmem>>, vector<1x32xf32>
    %49 = vector.broadcast %48 : vector<1x32xf32> to vector<2x32xf32>
    %50 = arith.addf %47, %49 : vector<2x32xf32>
    %51 = math.tanh %50 : vector<2x32xf32>
    %52 = arith.truncf %51 : vector<2x32xf32> to vector<2x32xbf16>
    %c0_31 = arith.constant 0 : index
    %c0_32 = arith.constant 0 : index
    %53 = vector.load %arg11[%c0_31, %c0_32] : memref<32x2xbf16, #tpu.memory_space<vmem>>, vector<32x2xbf16>
    %cst_33 = arith.constant dense<0.000000e+00> : vector<2x2xf32>
    %54 = tpu.matmul %52, %53, %cst_33 {dimension_numbers = #tpu.dot_dimension_numbers<[1], [0], [0], [1], [0, 0, 1, 1], [], []>} : vector<2x32xbf16>, vector<32x2xbf16>, vector<2x2xf32> -> vector<2x2xf32>
    %c0_34 = arith.constant 0 : index
    %c0_35 = arith.constant 0 : index
    %55 = vector.load %arg12[%c0_34, %c0_35] : memref<1x2xf32, #tpu.memory_space<vmem>>, vector<1x2xf32>
    %56 = vector.broadcast %55 : vector<1x2xf32> to vector<2x2xf32>
    %57 = arith.addf %54, %56 : vector<2x2xf32>
    %c0_36 = arith.constant 0 : index
    %c0_37 = arith.constant 0 : index
    %58 = vector.load %arg14[%c0_36, %c0_37] : memref<2x2xf32, #tpu.memory_space<vmem>>, vector<2x2xf32>
    tpu.vector_store %arg14[%c0_36, %c0_37], %57 {strides = array<i32>} : memref<2x2xf32, #tpu.memory_space<vmem>>, vector<2x2xf32>,
    return
  }
  func.func @transform_0(%arg0: i32) -> (i32, i32) {
    %c0_i32 = arith.constant 0 : i32
    %c0_i32_0 = arith.constant 0 : i32
    %c0_i32_1 = arith.constant 0 : i32
    return %c0_i32, %c0_i32_0 : i32, i32
  }
  func.func @transform_1(%arg0: i32) -> (i32, i32) {
    %c0_i32 = arith.constant 0 : i32
    %c0_i32_0 = arith.constant 0 : i32
    %c0_i32_1 = arith.constant 0 : i32
    return %c0_i32, %c0_i32_0 : i32, i32
  }
  func.func @transform_2(%arg0: i32) -> (i32, i32) {
    %c0_i32 = arith.constant 0 : i32
    %c0_i32_0 = arith.constant 0 : i32
    %c0_i32_1 = arith.constant 0 : i32
    return %c0_i32, %c0_i32_0 : i32, i32
  }
  func.func @transform_3(%arg0: i32) -> (i32, i32) {
    %c0_i32 = arith.constant 0 : i32
    %c0_i32_0 = arith.constant 0 : i32
    %c0_i32_1 = arith.constant 0 : i32
    return %c0_i32, %c0_i32_0 : i32, i32
  }
  func.func @transform_4(%arg0: i32) -> (i32, i32) {
    %c0_i32 = arith.constant 0 : i32
    %c0_i32_0 = arith.constant 0 : i32
    %c0_i32_1 = arith.constant 0 : i32
    return %c0_i32, %c0_i32_0 : i32, i32
  }
  func.func @transform_5(%arg0: i32) -> (i32, i32) {
    %c0_i32 = arith.constant 0 : i32
    %c0_i32_0 = arith.constant 0 : i32
    %c0_i32_1 = arith.constant 0 : i32
    return %c0_i32, %c0_i32_0 : i32, i32
  }
  func.func @transform_6(%arg0: i32) -> (i32, i32) {
    %c0_i32 = arith.constant 0 : i32
    %c0_i32_0 = arith.constant 0 : i32
    %c0_i32_1 = arith.constant 0 : i32
    return %c0_i32, %c0_i32_0 : i32, i32
  }
  func.func @transform_7(%arg0: i32) -> (i32, i32) {
    %c0_i32 = arith.constant 0 : i32
    %c0_i32_0 = arith.constant 0 : i32
    %c0_i32_1 = arith.constant 0 : i32
    return %c0_i32, %c0_i32_0 : i32, i32
  }
  func.func @transform_8(%arg0: i32) -> (i32, i32) {
    %c0_i32 = arith.constant 0 : i32
    %c0_i32_0 = arith.constant 0 : i32
    %c0_i32_1 = arith.constant 0 : i32
    return %c0_i32, %c0_i32_0 : i32, i32
  }
  func.func @transform_9(%arg0: i32) -> (i32, i32) {
    %c0_i32 = arith.constant 0 : i32
    %c0_i32_0 = arith.constant 0 : i32
    %c0_i32_1 = arith.constant 0 : i32
    return %c0_i32, %c0_i32_0 : i32, i32
  }
  func.func @transform_10(%arg0: i32) -> (i32, i32) {
    %c0_i32 = arith.constant 0 : i32
    %c0_i32_0 = arith.constant 0 : i32
    %c0_i32_1 = arith.constant 0 : i32
    return %c0_i32, %c0_i32_0 : i32, i32
  }
  func.func @transform_11(%arg0: i32) -> (i32, i32) {
    %c0_i32 = arith.constant 0 : i32
    %c0_i32_0 = arith.constant 0 : i32
    %c0_i32_1 = arith.constant 0 : i32
    return %c0_i32, %c0_i32_0 : i32, i32
  }
  func.func @transform_12(%arg0: i32) -> (i32, i32) {
    %c0_i32 = arith.constant 0 : i32
    %c0_i32_0 = arith.constant 0 : i32
    %c0_i32_1 = arith.constant 0 : i32
    return %c0_i32, %c0_i32_0 : i32, i32
  }
  func.func @transform_13(%arg0: i32) -> (i32, i32) {
    %c0_i32 = arith.constant 0 : i32
    %c0_i32_0 = arith.constant 0 : i32
    %c0_i32_1 = arith.constant 0 : i32
    return %c0_i32, %c0_i32_0 : i32, i32
  }
}

module attributes {stable_mosaic.version = 11 : i64} {
  func.func @_encoder_stack_kernel(%arg0: i32, %arg1: memref<16x32xf32, #tpu.memory_space<vmem>>, %arg2: memref<16x16xf32, #tpu.memory_space<vmem>>, %arg3: memref<1x32xf32, #tpu.memory_space<vmem>>, %arg4: memref<1x32xf32, #tpu.memory_space<vmem>>, %arg5: memref<6x32x16xbf16, #tpu.memory_space<vmem>>, %arg6: memref<6x1x16xf32, #tpu.memory_space<vmem>>, %arg7: memref<2x16x32xbf16, #tpu.memory_space<vmem>>, %arg8: memref<1x1x32xf32, #tpu.memory_space<vmem>>, %arg9: memref<1x1x32xf32, #tpu.memory_space<vmem>>, %arg10: memref<1x1x32xf32, #tpu.memory_space<vmem>>, %arg11: memref<1x32x64xbf16, #tpu.memory_space<vmem>>, %arg12: memref<1x1x64xf32, #tpu.memory_space<vmem>>, %arg13: memref<1x64x32xbf16, #tpu.memory_space<vmem>>, %arg14: memref<1x1x32xf32, #tpu.memory_space<vmem>>, %arg15: memref<1x1x32xf32, #tpu.memory_space<vmem>>, %arg16: memref<1x1x32xf32, #tpu.memory_space<vmem>>, %arg17: memref<16x32xf32, #tpu.memory_space<vmem>>, %arg18: memref<16x32xf32, #tpu.memory_space<vmem>>) attributes {dimension_semantics = [#tpu.dimension_semantics<arbitrary>], iteration_bounds = array<i64: 2>, scalar_prefetch = 0 : i64, scratch_operands = 1 : i64, tpu.core_type = #tpu.core_type<tc>, window_params = [{pipeline_mode = #tpu.pipeline_mode<synchronous>, transform_indices = @transform_0, window_bounds = array<i64: 16, 32>}, {pipeline_mode = #tpu.pipeline_mode<synchronous>, transform_indices = @transform_1, window_bounds = array<i64: 16, 16>}, {pipeline_mode = #tpu.pipeline_mode<synchronous>, transform_indices = @transform_2, window_bounds = array<i64: 1, 32>}, {pipeline_mode = #tpu.pipeline_mode<synchronous>, transform_indices = @transform_3, window_bounds = array<i64: 1, 32>}, {transform_indices = @transform_4, window_bounds = array<i64: 6, 32, 16>}, {transform_indices = @transform_5, window_bounds = array<i64: 6, 1, 16>}, {transform_indices = @transform_6, window_bounds = array<i64: 2, 16, 32>}, {transform_indices = @transform_7, window_bounds = array<i64: 1, 1, 32>}, {transform_indices = @transform_8, window_bounds = array<i64: 1, 1, 32>}, {transform_indices = @transform_9, window_bounds = array<i64: 1, 1, 32>}, {transform_indices = @transform_10, window_bounds = array<i64: 1, 32, 64>}, {transform_indices = @transform_11, window_bounds = array<i64: 1, 1, 64>}, {transform_indices = @transform_12, window_bounds = array<i64: 1, 64, 32>}, {transform_indices = @transform_13, window_bounds = array<i64: 1, 1, 32>}, {transform_indices = @transform_14, window_bounds = array<i64: 1, 1, 32>}, {transform_indices = @transform_15, window_bounds = array<i64: 1, 1, 32>}, {pipeline_mode = #tpu.pipeline_mode<synchronous>, transform_indices = @transform_16, window_bounds = array<i64: 16, 32>}]} {
    %c0_i32 = arith.constant 0 : i32
    %0 = arith.cmpi eq, %arg0, %c0_i32 : i32
    %1 = arith.extui %0 : i1 to i32
    %c0_i32_0 = arith.constant 0 : i32
    %2 = arith.cmpi ne, %1, %c0_i32_0 : i32
    scf.if %2 {
      %c0_103 = arith.constant 0 : index
      %c0_104 = arith.constant 0 : index
      %177 = vector.load %arg1[%c0_103, %c0_104] : memref<16x32xf32, #tpu.memory_space<vmem>>, vector<16x32xf32>
      %c0_105 = arith.constant 0 : index
      %c0_106 = arith.constant 0 : index
      %178 = vector.load %arg3[%c0_105, %c0_106] : memref<1x32xf32, #tpu.memory_space<vmem>>, vector<1x32xf32>
      %c0_107 = arith.constant 0 : index
      %c0_108 = arith.constant 0 : index
      %179 = vector.load %arg4[%c0_107, %c0_108] : memref<1x32xf32, #tpu.memory_space<vmem>>, vector<1x32xf32>
      %cst_109 = arith.constant dense<0.000000e+00> : vector<16xf32>
      %180 = vector.multi_reduction <add>, %177, %cst_109 [1] : vector<16x32xf32> to vector<16xf32>
      %181 = vector.shape_cast %180 : vector<16xf32> to vector<16x1xf32>
      %cst_110 = arith.constant 3.200000e+01 : f32
      %182 = vector.broadcast %cst_110 : f32 to vector<16x1xf32>
      %183 = arith.divf %181, %182 : vector<16x1xf32>
      %184 = vector.broadcast %183 : vector<16x1xf32> to vector<16x32xf32>
      %185 = arith.subf %177, %184 : vector<16x32xf32>
      %186 = arith.mulf %185, %185 : vector<16x32xf32>
      %cst_111 = arith.constant dense<0.000000e+00> : vector<16xf32>
      %187 = vector.multi_reduction <add>, %186, %cst_111 [1] : vector<16x32xf32> to vector<16xf32>
      %188 = vector.shape_cast %187 : vector<16xf32> to vector<16x1xf32>
      %cst_112 = arith.constant 3.200000e+01 : f32
      %189 = vector.broadcast %cst_112 : f32 to vector<16x1xf32>
      %190 = arith.divf %188, %189 : vector<16x1xf32>
      %cst_113 = arith.constant 9.99999996E-13 : f32
      %191 = vector.broadcast %cst_113 : f32 to vector<16x1xf32>
      %192 = arith.addf %190, %191 : vector<16x1xf32>
      %193 = math.rsqrt %192 : vector<16x1xf32>
      %194 = vector.broadcast %193 : vector<16x1xf32> to vector<16x32xf32>
      %195 = arith.mulf %185, %194 : vector<16x32xf32>
      %196 = vector.broadcast %178 : vector<1x32xf32> to vector<16x32xf32>
      %197 = arith.mulf %195, %196 : vector<16x32xf32>
      %198 = vector.broadcast %179 : vector<1x32xf32> to vector<16x32xf32>
      %199 = arith.addf %197, %198 : vector<16x32xf32>
      %c0_114 = arith.constant 0 : index
      %c0_115 = arith.constant 0 : index
      %200 = vector.load %arg18[%c0_114, %c0_115] : memref<16x32xf32, #tpu.memory_space<vmem>>, vector<16x32xf32>
      tpu.vector_store %arg18[%c0_114, %c0_115], %199 {strides = array<i32>} : memref<16x32xf32, #tpu.memory_space<vmem>>, vector<16x32xf32>,
    } else {
    }
    %c0 = arith.constant 0 : index
    %c0_1 = arith.constant 0 : index
    %3 = vector.load %arg18[%c0, %c0_1] : memref<16x32xf32, #tpu.memory_space<vmem>>, vector<16x32xf32>
    %4 = arith.truncf %3 : vector<16x32xf32> to vector<16x32xbf16>
    %c0_2 = arith.constant 0 : index
    %c0_3 = arith.constant 0 : index
    %5 = vector.load %arg2[%c0_2, %c0_3] : memref<16x16xf32, #tpu.memory_space<vmem>>, vector<16x16xf32>
    %c0_4 = arith.constant 0 : index
    %c0_5 = arith.constant 0 : index
    %c0_6 = arith.constant 0 : index
    %6 = vector.load %arg8[%c0_4, %c0_5, %c0_6] : memref<1x1x32xf32, #tpu.memory_space<vmem>>, vector<1x1x32xf32>
    %7 = vector.shape_cast %6 : vector<1x1x32xf32> to vector<1x32xf32>
    %c0_7 = arith.constant 0 : index
    %c0_8 = arith.constant 0 : index
    %c0_9 = arith.constant 0 : index
    %8 = vector.load %arg5[%c0_7, %c0_8, %c0_9] : memref<6x32x16xbf16, #tpu.memory_space<vmem>>, vector<1x32x16xbf16>
    %9 = vector.shape_cast %8 : vector<1x32x16xbf16> to vector<32x16xbf16>
    %cst = arith.constant dense<0.000000e+00> : vector<16x16xf32>
    %10 = tpu.matmul %4, %9, %cst {dimension_numbers = #tpu.dot_dimension_numbers<[1], [0], [0], [1], [0, 0, 1, 1], [], []>} : vector<16x32xbf16>, vector<32x16xbf16>, vector<16x16xf32> -> vector<16x16xf32>
    %c0_10 = arith.constant 0 : index
    %c0_11 = arith.constant 0 : index
    %c0_12 = arith.constant 0 : index
    %11 = vector.load %arg6[%c0_10, %c0_11, %c0_12] : memref<6x1x16xf32, #tpu.memory_space<vmem>>, vector<1x1x16xf32>
    %12 = vector.shape_cast %11 : vector<1x1x16xf32> to vector<1x16xf32>
    %13 = vector.broadcast %12 : vector<1x16xf32> to vector<16x16xf32>
    %14 = arith.addf %10, %13 : vector<16x16xf32>
    %c2 = arith.constant 2 : index
    %c0_13 = arith.constant 0 : index
    %c0_14 = arith.constant 0 : index
    %15 = vector.load %arg5[%c2, %c0_13, %c0_14] : memref<6x32x16xbf16, #tpu.memory_space<vmem>>, vector<1x32x16xbf16>
    %16 = vector.shape_cast %15 : vector<1x32x16xbf16> to vector<32x16xbf16>
    %cst_15 = arith.constant dense<0.000000e+00> : vector<16x16xf32>
    %17 = tpu.matmul %4, %16, %cst_15 {dimension_numbers = #tpu.dot_dimension_numbers<[1], [0], [0], [1], [0, 0, 1, 1], [], []>} : vector<16x32xbf16>, vector<32x16xbf16>, vector<16x16xf32> -> vector<16x16xf32>
    %c2_16 = arith.constant 2 : index
    %c0_17 = arith.constant 0 : index
    %c0_18 = arith.constant 0 : index
    %18 = vector.load %arg6[%c2_16, %c0_17, %c0_18] : memref<6x1x16xf32, #tpu.memory_space<vmem>>, vector<1x1x16xf32>
    %19 = vector.shape_cast %18 : vector<1x1x16xf32> to vector<1x16xf32>
    %20 = vector.broadcast %19 : vector<1x16xf32> to vector<16x16xf32>
    %21 = arith.addf %17, %20 : vector<16x16xf32>
    %c4 = arith.constant 4 : index
    %c0_19 = arith.constant 0 : index
    %c0_20 = arith.constant 0 : index
    %22 = vector.load %arg5[%c4, %c0_19, %c0_20] : memref<6x32x16xbf16, #tpu.memory_space<vmem>>, vector<1x32x16xbf16>
    %23 = vector.shape_cast %22 : vector<1x32x16xbf16> to vector<32x16xbf16>
    %cst_21 = arith.constant dense<0.000000e+00> : vector<16x16xf32>
    %24 = tpu.matmul %4, %23, %cst_21 {dimension_numbers = #tpu.dot_dimension_numbers<[1], [0], [0], [1], [0, 0, 1, 1], [], []>} : vector<16x32xbf16>, vector<32x16xbf16>, vector<16x16xf32> -> vector<16x16xf32>
    %c4_22 = arith.constant 4 : index
    %c0_23 = arith.constant 0 : index
    %c0_24 = arith.constant 0 : index
    %25 = vector.load %arg6[%c4_22, %c0_23, %c0_24] : memref<6x1x16xf32, #tpu.memory_space<vmem>>, vector<1x1x16xf32>
    %26 = vector.shape_cast %25 : vector<1x1x16xf32> to vector<1x16xf32>
    %27 = vector.broadcast %26 : vector<1x16xf32> to vector<16x16xf32>
    %28 = arith.addf %24, %27 : vector<16x16xf32>
    %29 = arith.truncf %14 : vector<16x16xf32> to vector<16x16xbf16>
    %30 = arith.truncf %21 : vector<16x16xf32> to vector<16x16xbf16>
    %cst_25 = arith.constant dense<0.000000e+00> : vector<16x16xf32>
    %31 = tpu.matmul %29, %30, %cst_25 {dimension_numbers = #tpu.dot_dimension_numbers<[1], [1], [0], [0], [0, 0, 1, 0], [], []>} : vector<16x16xbf16>, vector<16x16xbf16>, vector<16x16xf32> -> vector<16x16xf32>
    %cst_26 = arith.constant 2.500000e-01 : f32
    %32 = vector.broadcast %cst_26 : f32 to vector<16x16xf32>
    %33 = arith.mulf %31, %32 : vector<16x16xf32>
    %34 = arith.addf %33, %5 : vector<16x16xf32>
    %cst_27 = arith.constant dense<0xFF800000> : vector<16xf32>
    %35 = vector.multi_reduction <maximumf>, %34, %cst_27 [1] : vector<16x16xf32> to vector<16xf32>
    %36 = vector.shape_cast %35 : vector<16xf32> to vector<16x1xf32>
    %37 = vector.broadcast %36 : vector<16x1xf32> to vector<16x16xf32>
    %38 = arith.subf %34, %37 : vector<16x16xf32>
    %39 = math.exp %38 : vector<16x16xf32>
    %cst_28 = arith.constant dense<0.000000e+00> : vector<16xf32>
    %40 = vector.multi_reduction <add>, %39, %cst_28 [1] : vector<16x16xf32> to vector<16xf32>
    %41 = vector.shape_cast %40 : vector<16xf32> to vector<16x1xf32>
    %42 = tpu.reciprocal %41 {approx = true} : vector<16x1xf32> -> vector<16x1xf32>
    %43 = vector.broadcast %42 : vector<16x1xf32> to vector<16x16xf32>
    %44 = arith.mulf %39, %43 : vector<16x16xf32>
    %45 = arith.truncf %44 : vector<16x16xf32> to vector<16x16xbf16>
    %46 = arith.truncf %28 : vector<16x16xf32> to vector<16x16xbf16>
    %cst_29 = arith.constant dense<0.000000e+00> : vector<16x16xf32>
    %47 = tpu.matmul %45, %46, %cst_29 {dimension_numbers = #tpu.dot_dimension_numbers<[1], [0], [0], [1], [0, 0, 1, 1], [], []>} : vector<16x16xbf16>, vector<16x16xbf16>, vector<16x16xf32> -> vector<16x16xf32>
    %48 = arith.truncf %47 : vector<16x16xf32> to vector<16x16xbf16>
    %c0_30 = arith.constant 0 : index
    %c0_31 = arith.constant 0 : index
    %c0_32 = arith.constant 0 : index
    %49 = vector.load %arg7[%c0_30, %c0_31, %c0_32] : memref<2x16x32xbf16, #tpu.memory_space<vmem>>, vector<1x16x32xbf16>
    %50 = vector.shape_cast %49 : vector<1x16x32xbf16> to vector<16x32xbf16>
    %cst_33 = arith.constant dense<0.000000e+00> : vector<16x32xf32>
    %51 = tpu.matmul %48, %50, %cst_33 {dimension_numbers = #tpu.dot_dimension_numbers<[1], [0], [0], [1], [0, 0, 1, 1], [], []>} : vector<16x16xbf16>, vector<16x32xbf16>, vector<16x32xf32> -> vector<16x32xf32>
    %52 = vector.broadcast %7 : vector<1x32xf32> to vector<16x32xf32>
    %53 = arith.addf %52, %51 : vector<16x32xf32>
    %c1 = arith.constant 1 : index
    %c0_34 = arith.constant 0 : index
    %c0_35 = arith.constant 0 : index
    %54 = vector.load %arg5[%c1, %c0_34, %c0_35] : memref<6x32x16xbf16, #tpu.memory_space<vmem>>, vector<1x32x16xbf16>
    %55 = vector.shape_cast %54 : vector<1x32x16xbf16> to vector<32x16xbf16>
    %cst_36 = arith.constant dense<0.000000e+00> : vector<16x16xf32>
    %56 = tpu.matmul %4, %55, %cst_36 {dimension_numbers = #tpu.dot_dimension_numbers<[1], [0], [0], [1], [0, 0, 1, 1], [], []>} : vector<16x32xbf16>, vector<32x16xbf16>, vector<16x16xf32> -> vector<16x16xf32>
    %c1_37 = arith.constant 1 : index
    %c0_38 = arith.constant 0 : index
    %c0_39 = arith.constant 0 : index
    %57 = vector.load %arg6[%c1_37, %c0_38, %c0_39] : memref<6x1x16xf32, #tpu.memory_space<vmem>>, vector<1x1x16xf32>
    %58 = vector.shape_cast %57 : vector<1x1x16xf32> to vector<1x16xf32>
    %59 = vector.broadcast %58 : vector<1x16xf32> to vector<16x16xf32>
    %60 = arith.addf %56, %59 : vector<16x16xf32>
    %c3 = arith.constant 3 : index
    %c0_40 = arith.constant 0 : index
    %c0_41 = arith.constant 0 : index
    %61 = vector.load %arg5[%c3, %c0_40, %c0_41] : memref<6x32x16xbf16, #tpu.memory_space<vmem>>, vector<1x32x16xbf16>
    %62 = vector.shape_cast %61 : vector<1x32x16xbf16> to vector<32x16xbf16>
    %cst_42 = arith.constant dense<0.000000e+00> : vector<16x16xf32>
    %63 = tpu.matmul %4, %62, %cst_42 {dimension_numbers = #tpu.dot_dimension_numbers<[1], [0], [0], [1], [0, 0, 1, 1], [], []>} : vector<16x32xbf16>, vector<32x16xbf16>, vector<16x16xf32> -> vector<16x16xf32>
    %c3_43 = arith.constant 3 : index
    %c0_44 = arith.constant 0 : index
    %c0_45 = arith.constant 0 : index
    %64 = vector.load %arg6[%c3_43, %c0_44, %c0_45] : memref<6x1x16xf32, #tpu.memory_space<vmem>>, vector<1x1x16xf32>
    %65 = vector.shape_cast %64 : vector<1x1x16xf32> to vector<1x16xf32>
    %66 = vector.broadcast %65 : vector<1x16xf32> to vector<16x16xf32>
    %67 = arith.addf %63, %66 : vector<16x16xf32>
    %c5 = arith.constant 5 : index
    %c0_46 = arith.constant 0 : index
    %c0_47 = arith.constant 0 : index
    %68 = vector.load %arg5[%c5, %c0_46, %c0_47] : memref<6x32x16xbf16, #tpu.memory_space<vmem>>, vector<1x32x16xbf16>
    %69 = vector.shape_cast %68 : vector<1x32x16xbf16> to vector<32x16xbf16>
    %cst_48 = arith.constant dense<0.000000e+00> : vector<16x16xf32>
    %70 = tpu.matmul %4, %69, %cst_48 {dimension_numbers = #tpu.dot_dimension_numbers<[1], [0], [0], [1], [0, 0, 1, 1], [], []>} : vector<16x32xbf16>, vector<32x16xbf16>, vector<16x16xf32> -> vector<16x16xf32>
    %c5_49 = arith.constant 5 : index
    %c0_50 = arith.constant 0 : index
    %c0_51 = arith.constant 0 : index
    %71 = vector.load %arg6[%c5_49, %c0_50, %c0_51] : memref<6x1x16xf32, #tpu.memory_space<vmem>>, vector<1x1x16xf32>
    %72 = vector.shape_cast %71 : vector<1x1x16xf32> to vector<1x16xf32>
    %73 = vector.broadcast %72 : vector<1x16xf32> to vector<16x16xf32>
    %74 = arith.addf %70, %73 : vector<16x16xf32>
    %75 = arith.truncf %60 : vector<16x16xf32> to vector<16x16xbf16>
    %76 = arith.truncf %67 : vector<16x16xf32> to vector<16x16xbf16>
    %cst_52 = arith.constant dense<0.000000e+00> : vector<16x16xf32>
    %77 = tpu.matmul %75, %76, %cst_52 {dimension_numbers = #tpu.dot_dimension_numbers<[1], [1], [0], [0], [0, 0, 1, 0], [], []>} : vector<16x16xbf16>, vector<16x16xbf16>, vector<16x16xf32> -> vector<16x16xf32>
    %cst_53 = arith.constant 2.500000e-01 : f32
    %78 = vector.broadcast %cst_53 : f32 to vector<16x16xf32>
    %79 = arith.mulf %77, %78 : vector<16x16xf32>
    %80 = arith.addf %79, %5 : vector<16x16xf32>
    %cst_54 = arith.constant dense<0xFF800000> : vector<16xf32>
    %81 = vector.multi_reduction <maximumf>, %80, %cst_54 [1] : vector<16x16xf32> to vector<16xf32>
    %82 = vector.shape_cast %81 : vector<16xf32> to vector<16x1xf32>
    %83 = vector.broadcast %82 : vector<16x1xf32> to vector<16x16xf32>
    %84 = arith.subf %80, %83 : vector<16x16xf32>
    %85 = math.exp %84 : vector<16x16xf32>
    %cst_55 = arith.constant dense<0.000000e+00> : vector<16xf32>
    %86 = vector.multi_reduction <add>, %85, %cst_55 [1] : vector<16x16xf32> to vector<16xf32>
    %87 = vector.shape_cast %86 : vector<16xf32> to vector<16x1xf32>
    %88 = tpu.reciprocal %87 {approx = true} : vector<16x1xf32> -> vector<16x1xf32>
    %89 = vector.broadcast %88 : vector<16x1xf32> to vector<16x16xf32>
    %90 = arith.mulf %85, %89 : vector<16x16xf32>
    %91 = arith.truncf %90 : vector<16x16xf32> to vector<16x16xbf16>
    %92 = arith.truncf %74 : vector<16x16xf32> to vector<16x16xbf16>
    %cst_56 = arith.constant dense<0.000000e+00> : vector<16x16xf32>
    %93 = tpu.matmul %91, %92, %cst_56 {dimension_numbers = #tpu.dot_dimension_numbers<[1], [0], [0], [1], [0, 0, 1, 1], [], []>} : vector<16x16xbf16>, vector<16x16xbf16>, vector<16x16xf32> -> vector<16x16xf32>
    %94 = arith.truncf %93 : vector<16x16xf32> to vector<16x16xbf16>
    %c1_57 = arith.constant 1 : index
    %c0_58 = arith.constant 0 : index
    %c0_59 = arith.constant 0 : index
    %95 = vector.load %arg7[%c1_57, %c0_58, %c0_59] : memref<2x16x32xbf16, #tpu.memory_space<vmem>>, vector<1x16x32xbf16>
    %96 = vector.shape_cast %95 : vector<1x16x32xbf16> to vector<16x32xbf16>
    %cst_60 = arith.constant dense<0.000000e+00> : vector<16x32xf32>
    %97 = tpu.matmul %94, %96, %cst_60 {dimension_numbers = #tpu.dot_dimension_numbers<[1], [0], [0], [1], [0, 0, 1, 1], [], []>} : vector<16x16xbf16>, vector<16x32xbf16>, vector<16x32xf32> -> vector<16x32xf32>
    %98 = arith.addf %53, %97 : vector<16x32xf32>
    %99 = arith.addf %3, %98 : vector<16x32xf32>
    %c0_61 = arith.constant 0 : index
    %c0_62 = arith.constant 0 : index
    %c0_63 = arith.constant 0 : index
    %100 = vector.load %arg9[%c0_61, %c0_62, %c0_63] : memref<1x1x32xf32, #tpu.memory_space<vmem>>, vector<1x1x32xf32>
    %101 = vector.shape_cast %100 : vector<1x1x32xf32> to vector<1x32xf32>
    %c0_64 = arith.constant 0 : index
    %c0_65 = arith.constant 0 : index
    %c0_66 = arith.constant 0 : index
    %102 = vector.load %arg10[%c0_64, %c0_65, %c0_66] : memref<1x1x32xf32, #tpu.memory_space<vmem>>, vector<1x1x32xf32>
    %103 = vector.shape_cast %102 : vector<1x1x32xf32> to vector<1x32xf32>
    %cst_67 = arith.constant dense<0.000000e+00> : vector<16xf32>
    %104 = vector.multi_reduction <add>, %99, %cst_67 [1] : vector<16x32xf32> to vector<16xf32>
    %105 = vector.shape_cast %104 : vector<16xf32> to vector<16x1xf32>
    %cst_68 = arith.constant 3.200000e+01 : f32
    %106 = vector.broadcast %cst_68 : f32 to vector<16x1xf32>
    %107 = arith.divf %105, %106 : vector<16x1xf32>
    %108 = vector.broadcast %107 : vector<16x1xf32> to vector<16x32xf32>
    %109 = arith.subf %99, %108 : vector<16x32xf32>
    %110 = arith.mulf %109, %109 : vector<16x32xf32>
    %cst_69 = arith.constant dense<0.000000e+00> : vector<16xf32>
    %111 = vector.multi_reduction <add>, %110, %cst_69 [1] : vector<16x32xf32> to vector<16xf32>
    %112 = vector.shape_cast %111 : vector<16xf32> to vector<16x1xf32>
    %cst_70 = arith.constant 3.200000e+01 : f32
    %113 = vector.broadcast %cst_70 : f32 to vector<16x1xf32>
    %114 = arith.divf %112, %113 : vector<16x1xf32>
    %cst_71 = arith.constant 9.99999996E-13 : f32
    %115 = vector.broadcast %cst_71 : f32 to vector<16x1xf32>
    %116 = arith.addf %114, %115 : vector<16x1xf32>
    %117 = math.rsqrt %116 : vector<16x1xf32>
    %118 = vector.broadcast %117 : vector<16x1xf32> to vector<16x32xf32>
    %119 = arith.mulf %109, %118 : vector<16x32xf32>
    %120 = vector.broadcast %101 : vector<1x32xf32> to vector<16x32xf32>
    %121 = arith.mulf %119, %120 : vector<16x32xf32>
    %122 = vector.broadcast %103 : vector<1x32xf32> to vector<16x32xf32>
    %123 = arith.addf %121, %122 : vector<16x32xf32>
    %124 = arith.truncf %123 : vector<16x32xf32> to vector<16x32xbf16>
    %c0_72 = arith.constant 0 : index
    %c0_73 = arith.constant 0 : index
    %c0_74 = arith.constant 0 : index
    %125 = vector.load %arg11[%c0_72, %c0_73, %c0_74] : memref<1x32x64xbf16, #tpu.memory_space<vmem>>, vector<1x32x64xbf16>
    %126 = vector.shape_cast %125 : vector<1x32x64xbf16> to vector<32x64xbf16>
    %cst_75 = arith.constant dense<0.000000e+00> : vector<16x64xf32>
    %127 = tpu.matmul %124, %126, %cst_75 {dimension_numbers = #tpu.dot_dimension_numbers<[1], [0], [0], [1], [0, 0, 1, 1], [], []>} : vector<16x32xbf16>, vector<32x64xbf16>, vector<16x64xf32> -> vector<16x64xf32>
    %c0_76 = arith.constant 0 : index
    %c0_77 = arith.constant 0 : index
    %c0_78 = arith.constant 0 : index
    %128 = vector.load %arg12[%c0_76, %c0_77, %c0_78] : memref<1x1x64xf32, #tpu.memory_space<vmem>>, vector<1x1x64xf32>
    %129 = vector.shape_cast %128 : vector<1x1x64xf32> to vector<1x64xf32>
    %130 = vector.broadcast %129 : vector<1x64xf32> to vector<16x64xf32>
    %131 = arith.addf %127, %130 : vector<16x64xf32>
    %cst_79 = arith.constant 5.000000e-01 : f32
    %132 = vector.broadcast %cst_79 : f32 to vector<16x64xf32>
    %133 = arith.mulf %132, %131 : vector<16x64xf32>
    %cst_80 = arith.constant 0.707106769 : f32
    %134 = vector.broadcast %cst_80 : f32 to vector<16x64xf32>
    %135 = arith.mulf %131, %134 : vector<16x64xf32>
    %136 = math.erf %135 : vector<16x64xf32>
    %cst_81 = arith.constant 1.000000e+00 : f32
    %137 = vector.broadcast %cst_81 : f32 to vector<16x64xf32>
    %138 = arith.addf %137, %136 : vector<16x64xf32>
    %139 = arith.mulf %133, %138 : vector<16x64xf32>
    %140 = arith.truncf %139 : vector<16x64xf32> to vector<16x64xbf16>
    %c0_82 = arith.constant 0 : index
    %c0_83 = arith.constant 0 : index
    %c0_84 = arith.constant 0 : index
    %141 = vector.load %arg13[%c0_82, %c0_83, %c0_84] : memref<1x64x32xbf16, #tpu.memory_space<vmem>>, vector<1x64x32xbf16>
    %142 = vector.shape_cast %141 : vector<1x64x32xbf16> to vector<64x32xbf16>
    %cst_85 = arith.constant dense<0.000000e+00> : vector<16x32xf32>
    %143 = tpu.matmul %140, %142, %cst_85 {dimension_numbers = #tpu.dot_dimension_numbers<[1], [0], [0], [1], [0, 0, 1, 1], [], []>} : vector<16x64xbf16>, vector<64x32xbf16>, vector<16x32xf32> -> vector<16x32xf32>
    %c0_86 = arith.constant 0 : index
    %c0_87 = arith.constant 0 : index
    %c0_88 = arith.constant 0 : index
    %144 = vector.load %arg14[%c0_86, %c0_87, %c0_88] : memref<1x1x32xf32, #tpu.memory_space<vmem>>, vector<1x1x32xf32>
    %145 = vector.shape_cast %144 : vector<1x1x32xf32> to vector<1x32xf32>
    %146 = vector.broadcast %145 : vector<1x32xf32> to vector<16x32xf32>
    %147 = arith.addf %143, %146 : vector<16x32xf32>
    %148 = arith.addf %123, %147 : vector<16x32xf32>
    %c0_89 = arith.constant 0 : index
    %c0_90 = arith.constant 0 : index
    %c0_91 = arith.constant 0 : index
    %149 = vector.load %arg15[%c0_89, %c0_90, %c0_91] : memref<1x1x32xf32, #tpu.memory_space<vmem>>, vector<1x1x32xf32>
    %150 = vector.shape_cast %149 : vector<1x1x32xf32> to vector<1x32xf32>
    %c0_92 = arith.constant 0 : index
    %c0_93 = arith.constant 0 : index
    %c0_94 = arith.constant 0 : index
    %151 = vector.load %arg16[%c0_92, %c0_93, %c0_94] : memref<1x1x32xf32, #tpu.memory_space<vmem>>, vector<1x1x32xf32>
    %152 = vector.shape_cast %151 : vector<1x1x32xf32> to vector<1x32xf32>
    %cst_95 = arith.constant dense<0.000000e+00> : vector<16xf32>
    %153 = vector.multi_reduction <add>, %148, %cst_95 [1] : vector<16x32xf32> to vector<16xf32>
    %154 = vector.shape_cast %153 : vector<16xf32> to vector<16x1xf32>
    %cst_96 = arith.constant 3.200000e+01 : f32
    %155 = vector.broadcast %cst_96 : f32 to vector<16x1xf32>
    %156 = arith.divf %154, %155 : vector<16x1xf32>
    %157 = vector.broadcast %156 : vector<16x1xf32> to vector<16x32xf32>
    %158 = arith.subf %148, %157 : vector<16x32xf32>
    %159 = arith.mulf %158, %158 : vector<16x32xf32>
    %cst_97 = arith.constant dense<0.000000e+00> : vector<16xf32>
    %160 = vector.multi_reduction <add>, %159, %cst_97 [1] : vector<16x32xf32> to vector<16xf32>
    %161 = vector.shape_cast %160 : vector<16xf32> to vector<16x1xf32>
    %cst_98 = arith.constant 3.200000e+01 : f32
    %162 = vector.broadcast %cst_98 : f32 to vector<16x1xf32>
    %163 = arith.divf %161, %162 : vector<16x1xf32>
    %cst_99 = arith.constant 9.99999996E-13 : f32
    %164 = vector.broadcast %cst_99 : f32 to vector<16x1xf32>
    %165 = arith.addf %163, %164 : vector<16x1xf32>
    %166 = math.rsqrt %165 : vector<16x1xf32>
    %167 = vector.broadcast %166 : vector<16x1xf32> to vector<16x32xf32>
    %168 = arith.mulf %158, %167 : vector<16x32xf32>
    %169 = vector.broadcast %150 : vector<1x32xf32> to vector<16x32xf32>
    %170 = arith.mulf %168, %169 : vector<16x32xf32>
    %171 = vector.broadcast %152 : vector<1x32xf32> to vector<16x32xf32>
    %172 = arith.addf %170, %171 : vector<16x32xf32>
    %c0_100 = arith.constant 0 : index
    %c0_101 = arith.constant 0 : index
    %173 = vector.load %arg18[%c0_100, %c0_101] : memref<16x32xf32, #tpu.memory_space<vmem>>, vector<16x32xf32>
    tpu.vector_store %arg18[%c0_100, %c0_101], %172 {strides = array<i32>} : memref<16x32xf32, #tpu.memory_space<vmem>>, vector<16x32xf32>,
    %c1_i32 = arith.constant 1 : i32
    %174 = arith.cmpi eq, %arg0, %c1_i32 : i32
    %175 = arith.extui %174 : i1 to i32
    %c0_i32_102 = arith.constant 0 : i32
    %176 = arith.cmpi ne, %175, %c0_i32_102 : i32
    scf.if %176 {
      %c0_103 = arith.constant 0 : index
      %c0_104 = arith.constant 0 : index
      %177 = vector.load %arg17[%c0_103, %c0_104] : memref<16x32xf32, #tpu.memory_space<vmem>>, vector<16x32xf32>
      tpu.vector_store %arg17[%c0_103, %c0_104], %172 {strides = array<i32>} : memref<16x32xf32, #tpu.memory_space<vmem>>, vector<16x32xf32>,
    } else {
    }
    return
  }
  func.func @transform_0(%arg0: i32) -> (i32, i32) {
    %c0_i32 = arith.constant 0 : i32
    %c0_i32_0 = arith.constant 0 : i32
    %c0_i32_1 = arith.constant 0 : i32
    return %c0_i32, %c0_i32_0 : i32, i32
  }
  func.func @transform_1(%arg0: i32) -> (i32, i32) {
    %c0_i32 = arith.constant 0 : i32
    %c0_i32_0 = arith.constant 0 : i32
    %c0_i32_1 = arith.constant 0 : i32
    return %c0_i32, %c0_i32_0 : i32, i32
  }
  func.func @transform_2(%arg0: i32) -> (i32, i32) {
    %c0_i32 = arith.constant 0 : i32
    %c0_i32_0 = arith.constant 0 : i32
    %c0_i32_1 = arith.constant 0 : i32
    return %c0_i32, %c0_i32_0 : i32, i32
  }
  func.func @transform_3(%arg0: i32) -> (i32, i32) {
    %c0_i32 = arith.constant 0 : i32
    %c0_i32_0 = arith.constant 0 : i32
    %c0_i32_1 = arith.constant 0 : i32
    return %c0_i32, %c0_i32_0 : i32, i32
  }
  func.func @transform_4(%arg0: i32) -> (i32, i32, i32) {
    %c0_i32 = arith.constant 0 : i32
    %c0_i32_0 = arith.constant 0 : i32
    %c0_i32_1 = arith.constant 0 : i32
    return %arg0, %c0_i32, %c0_i32_0 : i32, i32, i32
  }
  func.func @transform_5(%arg0: i32) -> (i32, i32, i32) {
    %c0_i32 = arith.constant 0 : i32
    %c0_i32_0 = arith.constant 0 : i32
    %c0_i32_1 = arith.constant 0 : i32
    return %arg0, %c0_i32, %c0_i32_0 : i32, i32, i32
  }
  func.func @transform_6(%arg0: i32) -> (i32, i32, i32) {
    %c0_i32 = arith.constant 0 : i32
    %c0_i32_0 = arith.constant 0 : i32
    %c0_i32_1 = arith.constant 0 : i32
    return %arg0, %c0_i32, %c0_i32_0 : i32, i32, i32
  }
  func.func @transform_7(%arg0: i32) -> (i32, i32, i32) {
    %c0_i32 = arith.constant 0 : i32
    %c0_i32_0 = arith.constant 0 : i32
    %c0_i32_1 = arith.constant 0 : i32
    return %arg0, %c0_i32, %c0_i32_0 : i32, i32, i32
  }
  func.func @transform_8(%arg0: i32) -> (i32, i32, i32) {
    %c0_i32 = arith.constant 0 : i32
    %c0_i32_0 = arith.constant 0 : i32
    %c0_i32_1 = arith.constant 0 : i32
    return %arg0, %c0_i32, %c0_i32_0 : i32, i32, i32
  }
  func.func @transform_9(%arg0: i32) -> (i32, i32, i32) {
    %c0_i32 = arith.constant 0 : i32
    %c0_i32_0 = arith.constant 0 : i32
    %c0_i32_1 = arith.constant 0 : i32
    return %arg0, %c0_i32, %c0_i32_0 : i32, i32, i32
  }
  func.func @transform_10(%arg0: i32) -> (i32, i32, i32) {
    %c0_i32 = arith.constant 0 : i32
    %c0_i32_0 = arith.constant 0 : i32
    %c0_i32_1 = arith.constant 0 : i32
    return %arg0, %c0_i32, %c0_i32_0 : i32, i32, i32
  }
  func.func @transform_11(%arg0: i32) -> (i32, i32, i32) {
    %c0_i32 = arith.constant 0 : i32
    %c0_i32_0 = arith.constant 0 : i32
    %c0_i32_1 = arith.constant 0 : i32
    return %arg0, %c0_i32, %c0_i32_0 : i32, i32, i32
  }
  func.func @transform_12(%arg0: i32) -> (i32, i32, i32) {
    %c0_i32 = arith.constant 0 : i32
    %c0_i32_0 = arith.constant 0 : i32
    %c0_i32_1 = arith.constant 0 : i32
    return %arg0, %c0_i32, %c0_i32_0 : i32, i32, i32
  }
  func.func @transform_13(%arg0: i32) -> (i32, i32, i32) {
    %c0_i32 = arith.constant 0 : i32
    %c0_i32_0 = arith.constant 0 : i32
    %c0_i32_1 = arith.constant 0 : i32
    return %arg0, %c0_i32, %c0_i32_0 : i32, i32, i32
  }
  func.func @transform_14(%arg0: i32) -> (i32, i32, i32) {
    %c0_i32 = arith.constant 0 : i32
    %c0_i32_0 = arith.constant 0 : i32
    %c0_i32_1 = arith.constant 0 : i32
    return %arg0, %c0_i32, %c0_i32_0 : i32, i32, i32
  }
  func.func @transform_15(%arg0: i32) -> (i32, i32, i32) {
    %c0_i32 = arith.constant 0 : i32
    %c0_i32_0 = arith.constant 0 : i32
    %c0_i32_1 = arith.constant 0 : i32
    return %arg0, %c0_i32, %c0_i32_0 : i32, i32, i32
  }
  func.func @transform_16(%arg0: i32) -> (i32, i32) {
    %c0_i32 = arith.constant 0 : i32
    %c0_i32_0 = arith.constant 0 : i32
    %c0_i32_1 = arith.constant 0 : i32
    return %c0_i32, %c0_i32_0 : i32, i32
  }
}

</mosaic_0001>

<llo_original>
// kernel: mul.22
$region0: #{mul.22}
  %s0 = inlined_call_operand.vmem [shape: f32[2,8], index: 0, kind: input, shape index: {}]
  %s1 = inlined_call_operand.vmem [shape: f32[16], index: 1, kind: output, shape index: {}]
  $region1: #{mul.22} parent=0
    #allocation0 [shape = 'u8[4096]{0}', space=vmem, size = 0x1000, scoped, tag = 'scoped mem for output reshape']
    #allocation1 [shape = 'u8[4096]{0}', space=vmem, size = 0x1000, scoped, tag = 'scoped mem for input reshape']
    %s3 = sshllo.u32 0, 2
    %v4 = vld [vmem:[%s0] sm:%s3]
    %5 = vst [vmem:[#allocation1] sm:%s3] %v4
    %v6 = vld [vmem:[#allocation1] sm:$0x1]
    %vm7 = vcmask 64512
    %8 = vst.msk [vmem:[#allocation0] sm:$0x1] %vm7, %v6
    %s9 = scalar_lea.vmem [#allocation1], 1
    %v10 = vld [vmem:[%s9] sm:$0x1]
    %11 = vrot.lane.b32.xlu0 %v10, 8
    %v12 = vpop.permute.xlu0 %11
    %vm13 = vcmask 130112
    %14 = vst.msk [vmem:[#allocation0] sm:$0x1] %vm13, %v12
    %s16 = sshllo.u32 0, 1
    %v18 = vld [vmem:[#allocation0] sm:%s16]
    %s19 = sshllo.u32 0, 1
    %20 = vst [vmem:[%s1] sm:%s19] %v18

// kernel: bert_for_pretraining.3
$region0: #{bert_for_pretraining.3}
  #allocation0 [shape = 'u32[]', space=smem, size = 0x4, offset = 0x4, fixed_abs, tag = 'smem constant byte address 0x4 - core index']
  #allocation1 [shape = 'u32[144,128]{1,0:T(1,128)}', space=vmem, size = 0x12000, scoped, tag = 'internal scratch']
  %s0 = inlined_call_operand.vmem [shape: f32[16,32], index: 0, kind: input, shape index: {}]
  %s1 = inlined_call_operand.vmem [shape: f32[2,32], index: 1, kind: input, shape index: {}]
  %s2 = inlined_call_operand.vmem [shape: bf16[32,32], index: 2, kind: input, shape index: {}]
  %s3 = inlined_call_operand.vmem [shape: f32[1,32], index: 3, kind: input, shape index: {}]
  %s4 = inlined_call_operand.vmem [shape: f32[1,32], index: 4, kind: input, shape index: {}]
  %s5 = inlined_call_operand.vmem [shape: f32[1,32], index: 5, kind: input, shape index: {}]
  %s6 = inlined_call_operand.vmem [shape: bf16[32,128], index: 6, kind: input, shape index: {}]
  %s7 = inlined_call_operand.vmem [shape: f32[1,128], index: 7, kind: input, shape index: {}]
  %s8 = inlined_call_operand.vmem [shape: bf16[32,32], index: 8, kind: input, shape index: {}]
  %s9 = inlined_call_operand.vmem [shape: f32[1,32], index: 9, kind: input, shape index: {}]
  %s10 = inlined_call_operand.vmem [shape: bf16[32,2], index: 10, kind: input, shape index: {}]
  %s11 = inlined_call_operand.vmem [shape: f32[1,2], index: 11, kind: input, shape index: {}]
  %s12 = inlined_call_operand.hbm [shape: f32[16,128], index: 12, kind: output, shape index: {0}]
  %s13 = inlined_call_operand.hbm [shape: f32[2,2], index: 13, kind: output, shape index: {1}]
  %14 = xla_tuple %s12, %s13
  %s15 = sld [smem:[#allocation0]]
  $region66: #{bert_for_pretraining.3} parent=0
    _
  %s17 = ssub.s32 1, %s15
  %s18 = scalar_select 0, %s17, %s15
  $region1: #{bert_for_pretraining.3} parent=0
    #allocation2 [shape = 'u8[8192]{0}', space=vmem, size = 0x2000, scoped, tag = 'output window, operand 0, single buffered']
    #allocation3 [shape = 's32[1]{0}', space=sflag, size = 0x4, scoped, tag = 'scoped memory for bert_for_pretraining.3']
    #allocation4 [shape = 'u8[1024]{0}', space=vmem, size = 0x400, scoped, tag = 'output window, operand 1, single buffered']
    #allocation5 [shape = 's32[1]{0}', space=sflag, size = 0x4, scoped, tag = 'scoped memory for bert_for_pretraining.3']
    %19 = vsyncpa [#allocation3], 0
    %20 = vsyncpa [#allocation5], 0
    // Predicated region
    $region2: #{bert_for_pretraining.3} parent=1 // pred_check
      _
    $region3: #{bert_for_pretraining.3} parent=1 // pred_check_branch
      %22 = sbr.rel (0) target = $region5
    $region4: #{bert_for_pretraining.3} parent=1 // pred_region
      _
    $region5: #{bert_for_pretraining.3} parent=1 // pred_fallthru
      _
    // Predicated region
    $region6: #{bert_for_pretraining.3} parent=1 // pred_check
      _
    $region7: #{bert_for_pretraining.3} parent=1 // pred_check_branch
      %24 = sbr.rel (0) target = $region9
    $region8: #{bert_for_pretraining.3} parent=1 // pred_region
      _
    $region9: #{bert_for_pretraining.3} parent=1 // pred_fallthru
      _
    // Predicated region
    $region10: #{bert_for_pretraining.3} parent=1 // pred_check
      _
    $region11: #{bert_for_pretraining.3} parent=1 // pred_check_branch
      %26 = sbr.rel (0) target = $region13
    $region12: #{bert_for_pretraining.3} parent=1 // pred_region
      _
    $region13: #{bert_for_pretraining.3} parent=1 // pred_fallthru
      _
    // Predicated region
    $region14: #{bert_for_pretraining.3} parent=1 // pred_check
      _
    $region15: #{bert_for_pretraining.3} parent=1 // pred_check_branch
      %28 = sbr.rel (0) target = $region17
    $region16: #{bert_for_pretraining.3} parent=1 // pred_region
      _
    $region17: #{bert_for_pretraining.3} parent=1 // pred_fallthru
      _
    // Predicated region
    $region18: #{bert_for_pretraining.3} parent=1 // pred_check
      _
    $region19: #{bert_for_pretraining.3} parent=1 // pred_check_branch
      %30 = sbr.rel (0) target = $region21
    $region20: #{bert_for_pretraining.3} parent=1 // pred_region
      _
    $region21: #{bert_for_pretraining.3} parent=1 // pred_fallthru
      _
    // Predicated region
    $region22: #{bert_for_pretraining.3} parent=1 // pred_check
      _
    $region23: #{bert_for_pretraining.3} parent=1 // pred_check_branch
      %32 = sbr.rel (0) target = $region25
    $region24: #{bert_for_pretraining.3} parent=1 // pred_region
      _
    $region25: #{bert_for_pretraining.3} parent=1 // pred_fallthru
      _
    // Predicated region
    $region26: #{bert_for_pretraining.3} parent=1 // pred_check
      _
    $region27: #{bert_for_pretraining.3} parent=1 // pred_check_branch
      %34 = sbr.rel (0) target = $region29
    $region28: #{bert_for_pretraining.3} parent=1 // pred_region
      _
    $region29: #{bert_for_pretraining.3} parent=1 // pred_fallthru
      _
    // Predicated region
    $region30: #{bert_for_pretraining.3} parent=1 // pred_check
      _
    $region31: #{bert_for_pretraining.3} parent=1 // pred_check_branch
      %36 = sbr.rel (0) target = $region33
    $region32: #{bert_for_pretraining.3} parent=1 // pred_region
      _
    $region33: #{bert_for_pretraining.3} parent=1 // pred_fallthru
      _
    // Predicated region
    $region34: #{bert_for_pretraining.3} parent=1 // pred_check
      _
    $region35: #{bert_for_pretraining.3} parent=1 // pred_check_branch
      %38 = sbr.rel (0) target = $region37
    $region36: #{bert_for_pretraining.3} parent=1 // pred_region
      _
    $region37: #{bert_for_pretraining.3} parent=1 // pred_fallthru
      _
    // Predicated region
    $region38: #{bert_for_pretraining.3} parent=1 // pred_check
      _
    $region39: #{bert_for_pretraining.3} parent=1 // pred_check_branch
      %40 = sbr.rel (0) target = $region41
    $region40: #{bert_for_pretraining.3} parent=1 // pred_region
      _
    $region41: #{bert_for_pretraining.3} parent=1 // pred_fallthru
      _
    // Predicated region
    $region42: #{bert_for_pretraining.3} parent=1 // pred_check
      _
    $region43: #{bert_for_pretraining.3} parent=1 // pred_check_branch
      %42 = sbr.rel (0) target = $region45
    $region44: #{bert_for_pretraining.3} parent=1 // pred_region
      _
    $region45: #{bert_for_pretraining.3} parent=1 // pred_fallthru
      _
    // Predicated region
    $region46: #{bert_for_pretraining.3} parent=1 // pred_check
      _
    $region47: #{bert_for_pretraining.3} parent=1 // pred_check_branch
      %44 = sbr.rel (0) target = $region49
    $region48: #{bert_for_pretraining.3} parent=1 // pred_region
      _
    $region49: #{bert_for_pretraining.3} parent=1 // pred_fallthru
      _
    %v46 = vld [vmem:[%s0] sm:$0xff]
    %v47 = vld [vmem:[%s0 + $0x8] sm:$0xff]
    %v48 = vpack.c.bf16 %v47, %v46
    %v49 = vld [vmem:[%s2] sm:$0xf]
    %v50 = vld [vmem:[%s2 + $0x4] sm:$0xf]
    %v51 = vld [vmem:[%s2 + $0x8] sm:$0xf]
    %v52 = vld [vmem:[%s2 + $0xc] sm:$0xf]
    %v53 = vld [vmem:[%s3] sm:$0x1]
    %v55 = vlaneseq
    %v56 = vshrl.u32 %v55, 7
    %v57 = vsub.s32 0, %v56
    %v58 = vrot.slane %v53, %v57
    %v64 = vunpack.c.l.b16 %v49
    %v65 = vunpack.c.l.b16 %v50
    %v66 = vunpack.c.l.b16 %v51
    %v67 = vunpack.c.l.b16 %v52
    %v68 = vpack.c.b16 %v65, %v64
    %v69 = vpack.c.b16 %v67, %v66
    %vm72 = vcmask 261120
    %v74 = vsel %vm72, %v48, 0
    %76 = vmatprep.subr.bf16.mxu0 0
    %77 = vmatpush1.bf16.msra.mxu0 %v68
    %78 = vmatprep.subr.bf16.mxu0 0
    %79 = vmatpush1.bf16.msra.mxu0 %v69
    %80 = vmatprep.subr.bf16.mxu0 0
    %81 = vmatpush1.bf16.msra.mxu0 0
    %82 = vmatprep.subr.bf16.mxu0 0
    %83 = vmatpush1.bf16.msra.mxu0 0
    %84 = vmatprep.subr.bf16.mxu0 0
    %85 = vmatpush1.bf16.msra.mxu0 0
    %86 = vmatprep.subr.bf16.mxu0 0
    %87 = vmatpush1.bf16.msra.mxu0 0
    %88 = vmatprep.subr.bf16.mxu0 0
    %89 = vmatpush1.bf16.msra.mxu0 0
    %90 = vmatprep.subr.bf16.mxu0 0
    %91 = vmatpush1.bf16.msra.mxu0 0
    %92 = vmatprep.subr.bf16.mxu0 0
    %93 = vmatpush1.bf16.msra.mxu0 0
    %94 = vmatprep.subr.bf16.mxu0 0
    %95 = vmatpush1.bf16.msra.mxu0 0
    %96 = vmatprep.subr.bf16.mxu0 0
    %97 = vmatpush1.bf16.msra.mxu0 0
    %98 = vmatprep.subr.bf16.mxu0 0
    %99 = vmatpush1.bf16.msra.mxu0 0
    %100 = vmatprep.subr.bf16.mxu0 0
    %101 = vmatpush1.bf16.msra.mxu0 0
    %102 = vmatprep.subr.bf16.mxu0 0
    %103 = vmatpush1.bf16.msra.mxu0 0
    %104 = vmatprep.subr.bf16.mxu0 0
    %105 = vmatpush1.bf16.msra.mxu0 0
    %106 = vmatprep.subr.bf16.mxu0 0
    %107 = vmatpush1.bf16.msra.mxu0 0
    %108 = vmatprep.mubr.bf16.mxu0 0
    %109 = vmatmul.mubr.bf16.gmra.mrb[0].mxu0 %v74
    %v110 = vpop.f32.mrb[0].mxu0
    %v111 = vadd.f32 %v58, %v110
    %v112 = vpop.f32.mrb[0].mxu0
    %v113 = vpop.f32.mrb[0].mxu0
    %v114 = vadd.f32 %v58, %v113
    %v115 = vpop.f32.mrb[0].mxu0
    %116 = vdwg.mxu0
    %v117 = vmul.f32 %v111, 0.5
    %v118 = vmul.f32 %v114, 0.5
    %v119 = vmul.f32 %v111, 0.70710677
    %v120 = vmul.f32 %v114, 0.70710677
    %v121 = verf.f32.pop %v119
    %v122 = verf.f32.pop %v120
    %v123 = vadd.f32 %v121, 1.0
    %v124 = vadd.f32 %v122, 1.0
    %v125 = vmul.f32 %v117, %v123
    %v126 = vmul.f32 %v118, %v124
    %v127 = vld [vmem:[%s4] sm:$0x1]
    %v128 = vld [vmem:[%s5] sm:$0x1]
    %v129 = vsel %vm72, %v125, 0.0
    %130 = vadd.xlane.f32.xlu0 %v129
    %v131 = vpop.xlane.xlu0 %130
    %v132 = vsel %vm72, %v126, 0.0
    %133 = vadd.xlane.f32.xlu0 %v132
    %v134 = vpop.xlane.xlu0 %133
    %v135 = vrcp.pop 32.0
    %v136 = vmul.f32 %v131, %v135
    %v137 = vmul.f32 %v134, %v135
    %v138 = vsub.f32 %v125, %v136
    %v139 = vsub.f32 %v126, %v137
    %v140 = vmul.f32 %v138, %v138
    %v141 = vmul.f32 %v139, %v139
    %v142 = vsel %vm72, %v140, 0.0
    %143 = vadd.xlane.f32.xlu0 %v142
    %v144 = vpop.xlane.xlu0 %143
    %v145 = vsel %vm72, %v141, 0.0
    %146 = vadd.xlane.f32.xlu0 %v145
    %v147 = vpop.xlane.xlu0 %146
    %v148 = vmul.f32 %v144, %v135
    %v149 = vmul.f32 %v147, %v135
    %v150 = vadd.f32 %v148, 1e-12
    %v151 = vadd.f32 %v149, 1e-12
    %v152 = vrsqrt.pop %v150
    %v153 = vrsqrt.pop %v151
    %v154 = vmul.f32 %v138, %v152
    %v155 = vmul.f32 %v139, %v153
    %v157 = vlaneseq
    %v158 = vshrl.u32 %v157, 7
    %v159 = vsub.s32 0, %v158
    %v160 = vrot.slane %v127, %v159
    %v162 = vmul.f32 %v154, %v160
    %v163 = vmul.f32 %v155, %v160
    %v165 = vlaneseq
    %v166 = vshrl.u32 %v165, 7
    %v167 = vsub.s32 0, %v166
    %v168 = vrot.slane %v128, %v167
    %v170 = vadd.f32 %v162, %v168
    %v171 = vadd.f32 %v163, %v168
    %v172 = vpack.c.bf16 %v171, %v170
    %v173 = vld [vmem:[%s6] sm:$0xf]
    %v174 = vld [vmem:[%s6 + $0x4] sm:$0xf]
    %v175 = vld [vmem:[%s6 + $0x8] sm:$0xf]
    %v176 = vld [vmem:[%s6 + $0xc] sm:$0xf]
    %v177 = vld [vmem:[%s7] sm:$0x1]
    %v179 = vlaneseq
    %v180 = vshrl.u32 %v179, 7
    %v181 = vsub.s32 0, %v180
    %v182 = vrot.slane %v177, %v181
    %v188 = vunpack.c.l.b16 %v173
    %v189 = vunpack.c.l.b16 %v174
    %v190 = vunpack.c.l.b16 %v175
    %v191 = vunpack.c.l.b16 %v176
    %v192 = vpack.c.b16 %v189, %v188
    %v193 = vpack.c.b16 %v191, %v190
    %v197 = vsel %vm72, %v172, 0
    %199 = vmatprep.subr.bf16.mxu0 0
    %200 = vmatpush1.bf16.msra.mxu0 %v192
    %201 = vmatprep.subr.bf16.mxu0 0
    %202 = vmatpush1.bf16.msra.mxu0 %v193
    %203 = vmatprep.subr.bf16.mxu0 0
    %204 = vmatpush1.bf16.msra.mxu0 0
    %205 = vmatprep.subr.bf16.mxu0 0
    %206 = vmatpush1.bf16.msra.mxu0 0
    %207 = vmatprep.subr.bf16.mxu0 0
    %208 = vmatpush1.bf16.msra.mxu0 0
    %209 = vmatprep.subr.bf16.mxu0 0
    %210 = vmatpush1.bf16.msra.mxu0 0
    %211 = vmatprep.subr.bf16.mxu0 0
    %212 = vmatpush1.bf16.msra.mxu0 0
    %213 = vmatprep.subr.bf16.mxu0 0
    %214 = vmatpush1.bf16.msra.mxu0 0
    %215 = vmatprep.subr.bf16.mxu0 0
    %216 = vmatpush1.bf16.msra.mxu0 0
    %217 = vmatprep.subr.bf16.mxu0 0
    %218 = vmatpush1.bf16.msra.mxu0 0
    %219 = vmatprep.subr.bf16.mxu0 0
    %220 = vmatpush1.bf16.msra.mxu0 0
    %221 = vmatprep.subr.bf16.mxu0 0
    %222 = vmatpush1.bf16.msra.mxu0 0
    %223 = vmatprep.subr.bf16.mxu0 0
    %224 = vmatpush1.bf16.msra.mxu0 0
    %225 = vmatprep.subr.bf16.mxu0 0
    %226 = vmatpush1.bf16.msra.mxu0 0
    %227 = vmatprep.subr.bf16.mxu0 0
    %228 = vmatpush1.bf16.msra.mxu0 0
    %229 = vmatprep.subr.bf16.mxu0 0
    %230 = vmatpush1.bf16.msra.mxu0 0
    %231 = vmatprep.mubr.bf16.mxu0 0
    %232 = vmatmul.mubr.bf16.gmra.mrb[0].mxu0 %v197
    %v233 = vpop.f32.mrb[0].mxu0
    %v234 = vadd.f32 %v182, %v233
    %v235 = vpop.f32.mrb[0].mxu0
    %v236 = vpop.f32.mrb[0].mxu0
    %v237 = vadd.f32 %v182, %v236
    %v238 = vpop.f32.mrb[0].mxu0
    %239 = vdwg.mxu0
    %240 = vst [vmem:[#allocation2] sm:$0xff] %v234
    %241 = vst [vmem:[#allocation2 + $0x8] sm:$0xff] %v237
    %v242 = vld [vmem:[%s1] sm:$0x3]
    %v243 = vpack.c.bf16 %v242, %v242
    %v244 = vld [vmem:[%s8] sm:$0xf]
    %v245 = vld [vmem:[%s8 + $0x4] sm:$0xf]
    %v246 = vld [vmem:[%s8 + $0x8] sm:$0xf]
    %v247 = vld [vmem:[%s8 + $0xc] sm:$0xf]
    %v248 = vld [vmem:[%s9] sm:$0x1]
    %v250 = vlaneseq
    %v251 = vshrl.u32 %v250, 7
    %v252 = vsub.s32 0, %v251
    %v253 = vrot.slane %v248, %v252
    %v259 = vunpack.c.l.b16 %v244
    %v260 = vunpack.c.l.b16 %v245
    %v261 = vunpack.c.l.b16 %v246
    %v262 = vunpack.c.l.b16 %v247
    %v263 = vpack.c.b16 %v260, %v259
    %v264 = vpack.c.b16 %v262, %v261
    %v268 = vsel %vm72, %v243, 0
    %270 = vmatprep.subr.bf16.mxu0 0
    %271 = vmatpush1.bf16.msra.mxu0 %v263
    %272 = vmatprep.subr.bf16.mxu0 0
    %273 = vmatpush1.bf16.msra.mxu0 %v264
    %274 = vmatprep.subr.bf16.mxu0 0
    %275 = vmatpush1.bf16.msra.mxu0 0
    %276 = vmatprep.subr.bf16.mxu0 0
    %277 = vmatpush1.bf16.msra.mxu0 0
    %278 = vmatprep.subr.bf16.mxu0 0
    %279 = vmatpush1.bf16.msra.mxu0 0
    %280 = vmatprep.subr.bf16.mxu0 0
    %281 = vmatpush1.bf16.msra.mxu0 0
    %282 = vmatprep.subr.bf16.mxu0 0
    %283 = vmatpush1.bf16.msra.mxu0 0
    %284 = vmatprep.subr.bf16.mxu0 0
    %285 = vmatpush1.bf16.msra.mxu0 0
    %286 = vmatprep.subr.bf16.mxu0 0
    %287 = vmatpush1.bf16.msra.mxu0 0
    %288 = vmatprep.subr.bf16.mxu0 0
    %289 = vmatpush1.bf16.msra.mxu0 0
    %290 = vmatprep.subr.bf16.mxu0 0
    %291 = vmatpush1.bf16.msra.mxu0 0
    %292 = vmatprep.subr.bf16.mxu0 0
    %293 = vmatpush1.bf16.msra.mxu0 0
    %294 = vmatprep.subr.bf16.mxu0 0
    %295 = vmatpush1.bf16.msra.mxu0 0
    %296 = vmatprep.subr.bf16.mxu0 0
    %297 = vmatpush1.bf16.msra.mxu0 0
    %298 = vmatprep.subr.bf16.mxu0 0
    %299 = vmatpush1.bf16.msra.mxu0 0
    %300 = vmatprep.subr.bf16.mxu0 0
    %301 = vmatpush1.bf16.msra.mxu0 0
    %302 = vmatprep.mubr.bf16.mxu0 0
    %303 = vmatmul.mubr.bf16.gmra.mrb[0].mxu0 %v268
    %v304 = vpop.f32.mrb[0].mxu0
    %v305 = vadd.f32 %v253, %v304
    %v306 = vpop.f32.mrb[0].mxu0
    %v307 = vpop.f32.mrb[0].mxu0
    %v308 = vpop.f32.mrb[0].mxu0
    %309 = vdwg.mxu0
    %v310 = vtanh.pop %v305
    %v311 = vpack.c.bf16 %v310, %v310
    %v312 = vld [vmem:[%s10] sm:$0xf]
    %v313 = vld [vmem:[%s10 + $0x4] sm:$0xf]
    %v314 = vld [vmem:[%s10 + $0x8] sm:$0xf]
    %v315 = vld [vmem:[%s10 + $0xc] sm:$0xf]
    %v316 = vld [vmem:[%s11] sm:$0x1]
    %v318 = vlaneseq
    %v319 = vshrl.u32 %v318, 7
    %v320 = vsub.s32 0, %v319
    %v321 = vrot.slane %v316, %v320
    %v327 = vunpack.c.l.b16 %v312
    %v328 = vunpack.c.l.b16 %v313
    %v329 = vunpack.c.l.b16 %v314
    %v330 = vunpack.c.l.b16 %v315
    %v331 = vpack.c.b16 %v328, %v327
    %v332 = vpack.c.b16 %v330, %v329
    %v336 = vsel %vm72, %v311, 0
    %338 = vmatprep.subr.bf16.mxu0 0
    %339 = vmatpush1.bf16.msra.mxu0 %v331
    %340 = vmatprep.subr.bf16.mxu0 0
    %341 = vmatpush1.bf16.msra.mxu0 %v332
    %342 = vmatprep.subr.bf16.mxu0 0
    %343 = vmatpush1.bf16.msra.mxu0 0
    %344 = vmatprep.subr.bf16.mxu0 0
    %345 = vmatpush1.bf16.msra.mxu0 0
    %346 = vmatprep.subr.bf16.mxu0 0
    %347 = vmatpush1.bf16.msra.mxu0 0
    %348 = vmatprep.subr.bf16.mxu0 0
    %349 = vmatpush1.bf16.msra.mxu0 0
    %350 = vmatprep.subr.bf16.mxu0 0
    %351 = vmatpush1.bf16.msra.mxu0 0
    %352 = vmatprep.subr.bf16.mxu0 0
    %353 = vmatpush1.bf16.msra.mxu0 0
    %354 = vmatprep.subr.bf16.mxu0 0
    %355 = vmatpush1.bf16.msra.mxu0 0
    %356 = vmatprep.subr.bf16.mxu0 0
    %357 = vmatpush1.bf16.msra.mxu0 0
    %358 = vmatprep.subr.bf16.mxu0 0
    %359 = vmatpush1.bf16.msra.mxu0 0
    %360 = vmatprep.subr.bf16.mxu0 0
    %361 = vmatpush1.bf16.msra.mxu0 0
    %362 = vmatprep.subr.bf16.mxu0 0
    %363 = vmatpush1.bf16.msra.mxu0 0
    %364 = vmatprep.subr.bf16.mxu0 0
    %365 = vmatpush1.bf16.msra.mxu0 0
    %366 = vmatprep.subr.bf16.mxu0 0
    %367 = vmatpush1.bf16.msra.mxu0 0
    %368 = vmatprep.subr.bf16.mxu0 0
    %369 = vmatpush1.bf16.msra.mxu0 0
    %370 = vmatprep.mubr.bf16.mxu0 0
    %371 = vmatmul.mubr.bf16.gmra.mrb[0].mxu0 %v336
    %v372 = vpop.f32.mrb[0].mxu0
    %v373 = vadd.f32 %v321, %v372
    %v374 = vpop.f32.mrb[0].mxu0
    %v375 = vpop.f32.mrb[0].mxu0
    %v376 = vpop.f32.mrb[0].mxu0
    %377 = vdwg.mxu0
    %vm378 = vcmask 9216
    %379 = vst.msk [vmem:[#allocation4] sm:$0x3] %vm378, %v373
    // Predicated region
    $region50: #{bert_for_pretraining.3} parent=1 // pred_check
      _
    $region51: #{bert_for_pretraining.3} parent=1 // pred_check_branch
      %381 = sbr.rel (0) target = $region53
    $region52: #{bert_for_pretraining.3} parent=1 // pred_region
      %s383 = ssub.s32 256, 256
      %384 = vsyncadd [#allocation3], %s383
      %s385 = sshll.u32 [#allocation2], 4
      %s386 = int_to_ptr.vmem [resolvable:$true] %s385
      %391 = dma.vmem_to_hbm [thread:$0]  %s386, 256, %s12, [#allocation3], 128, 128, 8
    $region53: #{bert_for_pretraining.3} parent=1 // pred_fallthru
      _
    // Predicated region
    $region54: #{bert_for_pretraining.3} parent=1 // pred_check
      _
    $region55: #{bert_for_pretraining.3} parent=1 // pred_check_branch
      %393 = sbr.rel (0) target = $region57
    $region56: #{bert_for_pretraining.3} parent=1 // pred_region
      %s395 = ssub.s32 32, 32
      %396 = vsyncadd [#allocation5], %s395
      %s398 = sshll.u32 [#allocation4], 4
      %s399 = int_to_ptr.vmem [resolvable:$true] %s398
      %401 = dma.vmem_to_hbm [thread:$0]  %s399, 32, %s13, [#allocation5]
    $region57: #{bert_for_pretraining.3} parent=1 // pred_fallthru
      _
    // Predicated region
    $region58: #{bert_for_pretraining.3} parent=1 // pred_check
      _
    $region59: #{bert_for_pretraining.3} parent=1 // pred_check_branch
      %403 = sbr.rel (0) target = $region61
    $region60: #{bert_for_pretraining.3} parent=1 // pred_region
      %404 = dma.done [#allocation3], 256
    $region61: #{bert_for_pretraining.3} parent=1 // pred_fallthru
      _
    // Predicated region
    $region62: #{bert_for_pretraining.3} parent=1 // pred_check
      _
    $region63: #{bert_for_pretraining.3} parent=1 // pred_check_branch
      %406 = sbr.rel (0) target = $region65
    $region64: #{bert_for_pretraining.3} parent=1 // pred_region
      %407 = dma.done [#allocation5], 32
    $region65: #{bert_for_pretraining.3} parent=1 // pred_fallthru
      _
    %408 = vsyncpa [#allocation3], 1
    %409 = vsyncpa [#allocation5], 1

// kernel: bert_for_pretraining.2
$region0: #{bert_for_pretraining.2}
  #allocation0 [shape = 'u32[]', space=smem, size = 0x4, offset = 0x4, fixed_abs, tag = 'smem constant byte address 0x4 - core index']
  #allocation1 [shape = 'u32[144,128]{1,0:T(1,128)}', space=vmem, size = 0x12000, scoped, tag = 'internal scratch']
  #allocation2 [shape = 'f32[16,32]{1,0:T(8,128)}', space=vmem, size = 0x2000, scoped, tag = 'scratch operand']
  %s0 = inlined_call_operand.vmem [shape: f32[16,32], index: 0, kind: input, shape index: {}]
  %s1 = inlined_call_operand.vmem [shape: f32[16,16], index: 1, kind: input, shape index: {}]
  %s2 = inlined_call_operand.vmem [shape: f32[1,32], index: 2, kind: input, shape index: {}]
  %s3 = inlined_call_operand.vmem [shape: f32[1,32], index: 3, kind: input, shape index: {}]
  %s4 = inlined_call_operand.vmem [shape: bf16[12,32,16], index: 4, kind: input, shape index: {}]
  %s5 = inlined_call_operand.vmem [shape: f32[12,1,16], index: 5, kind: input, shape index: {}]
  %s6 = inlined_call_operand.vmem [shape: bf16[4,16,32], index: 6, kind: input, shape index: {}]
  %s7 = inlined_call_operand.vmem [shape: f32[2,1,32], index: 7, kind: input, shape index: {}]
  %s8 = inlined_call_operand.vmem [shape: f32[2,1,32], index: 8, kind: input, shape index: {}]
  %s9 = inlined_call_operand.vmem [shape: f32[2,1,32], index: 9, kind: input, shape index: {}]
  %s10 = inlined_call_operand.vmem [shape: bf16[2,32,64], index: 10, kind: input, shape index: {}]
  %s11 = inlined_call_operand.vmem [shape: f32[2,1,64], index: 11, kind: input, shape index: {}]
  %s12 = inlined_call_operand.vmem [shape: bf16[2,64,32], index: 12, kind: input, shape index: {}]
  %s13 = inlined_call_operand.vmem [shape: f32[2,1,32], index: 13, kind: input, shape index: {}]
  %s14 = inlined_call_operand.vmem [shape: f32[2,1,32], index: 14, kind: input, shape index: {}]
  %s15 = inlined_call_operand.vmem [shape: f32[2,1,32], index: 15, kind: input, shape index: {}]
  %s16 = inlined_call_operand.vmem [shape: f32[16,32], index: 16, kind: output, shape index: {}]
  %s17 = sld [smem:[#allocation0]]
  $region105: #{bert_for_pretraining.2} parent=0
    _
  %s19 = ssub.s32 1, %s17
  %s20 = scalar_select 0, %s19, %s17
  loop: start=0, step=1, limit=4
  $region2: #{bert_for_pretraining.2} parent=0 // loop_pre_header
    _
  $region3: #{bert_for_pretraining.2} parent=0 // loop_header
    %s22 = sphi 0, %s26
    %p23 = scmp.ge.s32.totalorder %s22, 4
    %s30 = sphi 0, %s30
    %s32 = sphi 0, %s30
    %s33 = sphi 0, %s32
    %s47 = sphi 0, %s33
    %s51 = sphi 0, %s51
    %s53 = sphi 0, %s51
    %s54 = sphi 0, %s53
    %s68 = sphi 0, %s54
    %s72 = sphi 0, %s72
    %s74 = sphi 0, %s72
    %s75 = sphi 0, %s74
    %s89 = sphi 0, %s75
    %s93 = sphi 0, %s93
    %s95 = sphi 0, %s93
    %s96 = sphi 0, %s95
    %s110 = sphi 0, %s96
    %s116 = sphi 0, %s118
    %s119 = sphi 0, %s116
    %s120 = sphi 0, %s119
    %s136 = sphi 0, %s120
    %s142 = sphi 0, %s144
    %s145 = sphi 0, %s142
    %s146 = sphi 0, %s145
    %s162 = sphi 0, %s146
    %s168 = sphi 0, %s170
    %s171 = sphi 0, %s168
    %s172 = sphi 0, %s171
    %s188 = sphi 0, %s172
    %s194 = sphi 0, %s196
    %s197 = sphi 0, %s194
    %s198 = sphi 0, %s197
    %s214 = sphi 0, %s198
    %s220 = sphi 0, %s222
    %s223 = sphi 0, %s220
    %s224 = sphi 0, %s223
    %s240 = sphi 0, %s224
    %s246 = sphi 0, %s248
    %s249 = sphi 0, %s246
    %s250 = sphi 0, %s249
    %s266 = sphi 0, %s250
    %s272 = sphi 0, %s274
    %s275 = sphi 0, %s272
    %s276 = sphi 0, %s275
    %s292 = sphi 0, %s276
    %s298 = sphi 0, %s300
    %s301 = sphi 0, %s298
    %s302 = sphi 0, %s301
    %s318 = sphi 0, %s302
    %s324 = sphi 0, %s326
    %s327 = sphi 0, %s324
    %s328 = sphi 0, %s327
    %s344 = sphi 0, %s328
    %s350 = sphi 0, %s352
    %s353 = sphi 0, %s350
    %s354 = sphi 0, %s353
    %s370 = sphi 0, %s354
    %s376 = sphi 0, %s378
    %s379 = sphi 0, %s376
    %s380 = sphi 0, %s379
    %s396 = sphi 0, %s380
    %s402 = sphi 0, %s404
    %s405 = sphi 0, %s402
    %s406 = sphi 0, %s405
    %s422 = sphi 0, %s406
    %s426 = sphi 0, %s426
    %s428 = sphi 0, %s426
    %s429 = sphi 0, %s428
    %s443 = sphi 0, %s429
  $region4: #{bert_for_pretraining.2} parent=0 // loop_header_branch
    %25 = sbr.rel (%p23) target = $region8
  $region5: #{bert_for_pretraining.2} parent=0 // loop_body
    %s27 = ssub.s32 %s22, 1
    %s28 = ssub.s32 %s22, 2
    %s29 = sadd.s32 %s22, 1
    %s31 = sadd.s32 %s30, 1
    %p34 = scmp.eq.s32.totalorder %s22, 1
    %p35 = scmp.ne.s32.totalorder %s30, %s32
    %p36 = scmp.eq.s32.totalorder %s22, 0
    %p37 = por %p35, %p36
    %p38 = scmp.ne.s32.totalorder %s30, %s32
    %p39 = scmp.eq.s32.totalorder %s27, 1
    %p40 = por %p38, %p39
    %p41 = scmp.ne.s32.totalorder %s32, %s33
    %p42 = scmp.eq.s32.totalorder %s27, 0
    %p43 = por %p41, %p42
    %p44 = scmp.ne.s32.totalorder %s32, %s33
    %p45 = scmp.eq.s32.totalorder %s28, 1
    %p46 = por %p44, %p45
    %p48 = scmp.ne.s32.totalorder %s33, %s47
    %p49 = scmp.eq.s32.totalorder %s28, 0
    %p50 = por %p48, %p49
    %s52 = sadd.s32 %s51, 1
    %p55 = scmp.eq.s32.totalorder %s22, 1
    %p56 = scmp.ne.s32.totalorder %s51, %s53
    %p57 = scmp.eq.s32.totalorder %s22, 0
    %p58 = por %p56, %p57
    %p59 = scmp.ne.s32.totalorder %s51, %s53
    %p60 = scmp.eq.s32.totalorder %s27, 1
    %p61 = por %p59, %p60
    %p62 = scmp.ne.s32.totalorder %s53, %s54
    %p63 = scmp.eq.s32.totalorder %s27, 0
    %p64 = por %p62, %p63
    %p65 = scmp.ne.s32.totalorder %s53, %s54
    %p66 = scmp.eq.s32.totalorder %s28, 1
    %p67 = por %p65, %p66
    %p69 = scmp.ne.s32.totalorder %s54, %s68
    %p70 = scmp.eq.s32.totalorder %s28, 0
    %p71 = por %p69, %p70
    %s73 = sadd.s32 %s72, 1
    %p76 = scmp.eq.s32.totalorder %s22, 1
    %p77 = scmp.ne.s32.totalorder %s72, %s74
    %p78 = scmp.eq.s32.totalorder %s22, 0
    %p79 = por %p77, %p78
    %p80 = scmp.ne.s32.totalorder %s72, %s74
    %p81 = scmp.eq.s32.totalorder %s27, 1
    %p82 = por %p80, %p81
    %p83 = scmp.ne.s32.totalorder %s74, %s75
    %p84 = scmp.eq.s32.totalorder %s27, 0
    %p85 = por %p83, %p84
    %p86 = scmp.ne.s32.totalorder %s74, %s75
    %p87 = scmp.eq.s32.totalorder %s28, 1
    %p88 = por %p86, %p87
    %p90 = scmp.ne.s32.totalorder %s75, %s89
    %p91 = scmp.eq.s32.totalorder %s28, 0
    %p92 = por %p90, %p91
    %s94 = sadd.s32 %s93, 1
    %p97 = scmp.eq.s32.totalorder %s22, 1
    %p98 = scmp.ne.s32.totalorder %s93, %s95
    %p99 = scmp.eq.s32.totalorder %s22, 0
    %p100 = por %p98, %p99
    %p101 = scmp.ne.s32.totalorder %s93, %s95
    %p102 = scmp.eq.s32.totalorder %s27, 1
    %p103 = por %p101, %p102
    %p104 = scmp.ne.s32.totalorder %s95, %s96
    %p105 = scmp.eq.s32.totalorder %s27, 0
    %p106 = por %p104, %p105
    %p107 = scmp.ne.s32.totalorder %s95, %s96
    %p108 = scmp.eq.s32.totalorder %s28, 1
    %p109 = por %p107, %p108
    %p111 = scmp.ne.s32.totalorder %s96, %s110
    %p112 = scmp.eq.s32.totalorder %s28, 0
    %p113 = por %p111, %p112
    %s114 = ssub.s32 %s22, %s29
    %p115 = scmp.eq.s32.totalorder %s114, 0
    %s117 = sadd.s32 %s116, 1
    %s118 = scalar_select %p115, %s116, %s117
    %p121 = pneg %p115
    %p122 = scmp.eq.s32.totalorder %s22, 1
    %p123 = por %p121, %p122
    %p124 = scmp.ne.s32.totalorder %s116, %s119
    %p125 = scmp.eq.s32.totalorder %s22, 0
    %p126 = por %p124, %p125
    %p127 = scmp.ne.s32.totalorder %s116, %s119
    %p128 = scmp.eq.s32.totalorder %s27, 1
    %p129 = por %p127, %p128
    %p130 = scmp.ne.s32.totalorder %s119, %s120
    %p131 = scmp.eq.s32.totalorder %s27, 0
    %p132 = por %p130, %p131
    %p133 = scmp.ne.s32.totalorder %s119, %s120
    %p134 = scmp.eq.s32.totalorder %s28, 1
    %p135 = por %p133, %p134
    %p137 = scmp.ne.s32.totalorder %s120, %s136
    %p138 = scmp.eq.s32.totalorder %s28, 0
    %p139 = por %p137, %p138
    %s140 = ssub.s32 %s22, %s29
    %p141 = scmp.eq.s32.totalorder %s140, 0
    %s143 = sadd.s32 %s142, 1
    %s144 = scalar_select %p141, %s142, %s143
    %p147 = pneg %p141
    %p148 = scmp.eq.s32.totalorder %s22, 1
    %p149 = por %p147, %p148
    %p150 = scmp.ne.s32.totalorder %s142, %s145
    %p151 = scmp.eq.s32.totalorder %s22, 0
    %p152 = por %p150, %p151
    %p153 = scmp.ne.s32.totalorder %s142, %s145
    %p154 = scmp.eq.s32.totalorder %s27, 1
    %p155 = por %p153, %p154
    %p156 = scmp.ne.s32.totalorder %s145, %s146
    %p157 = scmp.eq.s32.totalorder %s27, 0
    %p158 = por %p156, %p157
    %p159 = scmp.ne.s32.totalorder %s145, %s146
    %p160 = scmp.eq.s32.totalorder %s28, 1
    %p161 = por %p159, %p160
    %p163 = scmp.ne.s32.totalorder %s146, %s162
    %p164 = scmp.eq.s32.totalorder %s28, 0
    %p165 = por %p163, %p164
    %s166 = ssub.s32 %s22, %s29
    %p167 = scmp.eq.s32.totalorder %s166, 0
    %s169 = sadd.s32 %s168, 1
    %s170 = scalar_select %p167, %s168, %s169
    %p173 = pneg %p167
    %p174 = scmp.eq.s32.totalorder %s22, 1
    %p175 = por %p173, %p174
    %p176 = scmp.ne.s32.totalorder %s168, %s171
    %p177 = scmp.eq.s32.totalorder %s22, 0
    %p178 = por %p176, %p177
    %p179 = scmp.ne.s32.totalorder %s168, %s171
    %p180 = scmp.eq.s32.totalorder %s27, 1
    %p181 = por %p179, %p180
    %p182 = scmp.ne.s32.totalorder %s171, %s172
    %p183 = scmp.eq.s32.totalorder %s27, 0
    %p184 = por %p182, %p183
    %p185 = scmp.ne.s32.totalorder %s171, %s172
    %p186 = scmp.eq.s32.totalorder %s28, 1
    %p187 = por %p185, %p186
    %p189 = scmp.ne.s32.totalorder %s172, %s188
    %p190 = scmp.eq.s32.totalorder %s28, 0
    %p191 = por %p189, %p190
    %s192 = ssub.s32 %s22, %s29
    %p193 = scmp.eq.s32.totalorder %s192, 0
    %s195 = sadd.s32 %s194, 1
    %s196 = scalar_select %p193, %s194, %s195
    %p199 = pneg %p193
    %p200 = scmp.eq.s32.totalorder %s22, 1
    %p201 = por %p199, %p200
    %p202 = scmp.ne.s32.totalorder %s194, %s197
    %p203 = scmp.eq.s32.totalorder %s22, 0
    %p204 = por %p202, %p203
    %p205 = scmp.ne.s32.totalorder %s194, %s197
    %p206 = scmp.eq.s32.totalorder %s27, 1
    %p207 = por %p205, %p206
    %p208 = scmp.ne.s32.totalorder %s197, %s198
    %p209 = scmp.eq.s32.totalorder %s27, 0
    %p210 = por %p208, %p209
    %p211 = scmp.ne.s32.totalorder %s197, %s198
    %p212 = scmp.eq.s32.totalorder %s28, 1
    %p213 = por %p211, %p212
    %p215 = scmp.ne.s32.totalorder %s198, %s214
    %p216 = scmp.eq.s32.totalorder %s28, 0
    %p217 = por %p215, %p216
    %s218 = ssub.s32 %s22, %s29
    %p219 = scmp.eq.s32.totalorder %s218, 0
    %s221 = sadd.s32 %s220, 1
    %s222 = scalar_select %p219, %s220, %s221
    %p225 = pneg %p219
    %p226 = scmp.eq.s32.totalorder %s22, 1
    %p227 = por %p225, %p226
    %p228 = scmp.ne.s32.totalorder %s220, %s223
    %p229 = scmp.eq.s32.totalorder %s22, 0
    %p230 = por %p228, %p229
    %p231 = scmp.ne.s32.totalorder %s220, %s223
    %p232 = scmp.eq.s32.totalorder %s27, 1
    %p233 = por %p231, %p232
    %p234 = scmp.ne.s32.totalorder %s223, %s224
    %p235 = scmp.eq.s32.totalorder %s27, 0
    %p236 = por %p234, %p235
    %p237 = scmp.ne.s32.totalorder %s223, %s224
    %p238 = scmp.eq.s32.totalorder %s28, 1
    %p239 = por %p237, %p238
    %p241 = scmp.ne.s32.totalorder %s224, %s240
    %p242 = scmp.eq.s32.totalorder %s28, 0
    %p243 = por %p241, %p242
    %s244 = ssub.s32 %s22, %s29
    %p245 = scmp.eq.s32.totalorder %s244, 0
    %s247 = sadd.s32 %s246, 1
    %s248 = scalar_select %p245, %s246, %s247
    %p251 = pneg %p245
    %p252 = scmp.eq.s32.totalorder %s22, 1
    %p253 = por %p251, %p252
    %p254 = scmp.ne.s32.totalorder %s246, %s249
    %p255 = scmp.eq.s32.totalorder %s22, 0
    %p256 = por %p254, %p255
    %p257 = scmp.ne.s32.totalorder %s246, %s249
    %p258 = scmp.eq.s32.totalorder %s27, 1
    %p259 = por %p257, %p258
    %p260 = scmp.ne.s32.totalorder %s249, %s250
    %p261 = scmp.eq.s32.totalorder %s27, 0
    %p262 = por %p260, %p261
    %p263 = scmp.ne.s32.totalorder %s249, %s250
    %p264 = scmp.eq.s32.totalorder %s28, 1
    %p265 = por %p263, %p264
    %p267 = scmp.ne.s32.totalorder %s250, %s266
    %p268 = scmp.eq.s32.totalorder %s28, 0
    %p269 = por %p267, %p268
    %s270 = ssub.s32 %s22, %s29
    %p271 = scmp.eq.s32.totalorder %s270, 0
    %s273 = sadd.s32 %s272, 1
    %s274 = scalar_select %p271, %s272, %s273
    %p277 = pneg %p271
    %p278 = scmp.eq.s32.totalorder %s22, 1
    %p279 = por %p277, %p278
    %p280 = scmp.ne.s32.totalorder %s272, %s275
    %p281 = scmp.eq.s32.totalorder %s22, 0
    %p282 = por %p280, %p281
    %p283 = scmp.ne.s32.totalorder %s272, %s275
    %p284 = scmp.eq.s32.totalorder %s27, 1
    %p285 = por %p283, %p284
    %p286 = scmp.ne.s32.totalorder %s275, %s276
    %p287 = scmp.eq.s32.totalorder %s27, 0
    %p288 = por %p286, %p287
    %p289 = scmp.ne.s32.totalorder %s275, %s276
    %p290 = scmp.eq.s32.totalorder %s28, 1
    %p291 = por %p289, %p290
    %p293 = scmp.ne.s32.totalorder %s276, %s292
    %p294 = scmp.eq.s32.totalorder %s28, 0
    %p295 = por %p293, %p294
    %s296 = ssub.s32 %s22, %s29
    %p297 = scmp.eq.s32.totalorder %s296, 0
    %s299 = sadd.s32 %s298, 1
    %s300 = scalar_select %p297, %s298, %s299
    %p303 = pneg %p297
    %p304 = scmp.eq.s32.totalorder %s22, 1
    %p305 = por %p303, %p304
    %p306 = scmp.ne.s32.totalorder %s298, %s301
    %p307 = scmp.eq.s32.totalorder %s22, 0
    %p308 = por %p306, %p307
    %p309 = scmp.ne.s32.totalorder %s298, %s301
    %p310 = scmp.eq.s32.totalorder %s27, 1
    %p311 = por %p309, %p310
    %p312 = scmp.ne.s32.totalorder %s301, %s302
    %p313 = scmp.eq.s32.totalorder %s27, 0
    %p314 = por %p312, %p313
    %p315 = scmp.ne.s32.totalorder %s301, %s302
    %p316 = scmp.eq.s32.totalorder %s28, 1
    %p317 = por %p315, %p316
    %p319 = scmp.ne.s32.totalorder %s302, %s318
    %p320 = scmp.eq.s32.totalorder %s28, 0
    %p321 = por %p319, %p320
    %s322 = ssub.s32 %s22, %s29
    %p323 = scmp.eq.s32.totalorder %s322, 0
    %s325 = sadd.s32 %s324, 1
    %s326 = scalar_select %p323, %s324, %s325
    %p329 = pneg %p323
    %p330 = scmp.eq.s32.totalorder %s22, 1
    %p331 = por %p329, %p330
    %p332 = scmp.ne.s32.totalorder %s324, %s327
    %p333 = scmp.eq.s32.totalorder %s22, 0
    %p334 = por %p332, %p333
    %p335 = scmp.ne.s32.totalorder %s324, %s327
    %p336 = scmp.eq.s32.totalorder %s27, 1
    %p337 = por %p335, %p336
    %p338 = scmp.ne.s32.totalorder %s327, %s328
    %p339 = scmp.eq.s32.totalorder %s27, 0
    %p340 = por %p338, %p339
    %p341 = scmp.ne.s32.totalorder %s327, %s328
    %p342 = scmp.eq.s32.totalorder %s28, 1
    %p343 = por %p341, %p342
    %p345 = scmp.ne.s32.totalorder %s328, %s344
    %p346 = scmp.eq.s32.totalorder %s28, 0
    %p347 = por %p345, %p346
    %s348 = ssub.s32 %s22, %s29
    %p349 = scmp.eq.s32.totalorder %s348, 0
    %s351 = sadd.s32 %s350, 1
    %s352 = scalar_select %p349, %s350, %s351
    %p355 = pneg %p349
    %p356 = scmp.eq.s32.totalorder %s22, 1
    %p357 = por %p355, %p356
    %p358 = scmp.ne.s32.totalorder %s350, %s353
    %p359 = scmp.eq.s32.totalorder %s22, 0
    %p360 = por %p358, %p359
    %p361 = scmp.ne.s32.totalorder %s350, %s353
    %p362 = scmp.eq.s32.totalorder %s27, 1
    %p363 = por %p361, %p362
    %p364 = scmp.ne.s32.totalorder %s353, %s354
    %p365 = scmp.eq.s32.totalorder %s27, 0
    %p366 = por %p364, %p365
    %p367 = scmp.ne.s32.totalorder %s353, %s354
    %p368 = scmp.eq.s32.totalorder %s28, 1
    %p369 = por %p367, %p368
    %p371 = scmp.ne.s32.totalorder %s354, %s370
    %p372 = scmp.eq.s32.totalorder %s28, 0
    %p373 = por %p371, %p372
    %s374 = ssub.s32 %s22, %s29
    %p375 = scmp.eq.s32.totalorder %s374, 0
    %s377 = sadd.s32 %s376, 1
    %s378 = scalar_select %p375, %s376, %s377
    %p381 = pneg %p375
    %p382 = scmp.eq.s32.totalorder %s22, 1
    %p383 = por %p381, %p382
    %p384 = scmp.ne.s32.totalorder %s376, %s379
    %p385 = scmp.eq.s32.totalorder %s22, 0
    %p386 = por %p384, %p385
    %p387 = scmp.ne.s32.totalorder %s376, %s379
    %p388 = scmp.eq.s32.totalorder %s27, 1
    %p389 = por %p387, %p388
    %p390 = scmp.ne.s32.totalorder %s379, %s380
    %p391 = scmp.eq.s32.totalorder %s27, 0
    %p392 = por %p390, %p391
    %p393 = scmp.ne.s32.totalorder %s379, %s380
    %p394 = scmp.eq.s32.totalorder %s28, 1
    %p395 = por %p393, %p394
    %p397 = scmp.ne.s32.totalorder %s380, %s396
    %p398 = scmp.eq.s32.totalorder %s28, 0
    %p399 = por %p397, %p398
    %s400 = ssub.s32 %s22, %s29
    %p401 = scmp.eq.s32.totalorder %s400, 0
    %s403 = sadd.s32 %s402, 1
    %s404 = scalar_select %p401, %s402, %s403
    %p407 = pneg %p401
    %p408 = scmp.eq.s32.totalorder %s22, 1
    %p409 = por %p407, %p408
    %p410 = scmp.ne.s32.totalorder %s402, %s405
    %p411 = scmp.eq.s32.totalorder %s22, 0
    %p412 = por %p410, %p411
    %p413 = scmp.ne.s32.totalorder %s402, %s405
    %p414 = scmp.eq.s32.totalorder %s27, 1
    %p415 = por %p413, %p414
    %p416 = scmp.ne.s32.totalorder %s405, %s406
    %p417 = scmp.eq.s32.totalorder %s27, 0
    %p418 = por %p416, %p417
    %p419 = scmp.ne.s32.totalorder %s405, %s406
    %p420 = scmp.eq.s32.totalorder %s28, 1
    %p421 = por %p419, %p420
    %p423 = scmp.ne.s32.totalorder %s406, %s422
    %p424 = scmp.eq.s32.totalorder %s28, 0
    %p425 = por %p423, %p424
    %s427 = sadd.s32 %s426, 1
    %p430 = scmp.eq.s32.totalorder %s22, 1
    %p431 = scmp.ne.s32.totalorder %s426, %s428
    %p432 = scmp.eq.s32.totalorder %s22, 0
    %p433 = por %p431, %p432
    %p434 = scmp.ne.s32.totalorder %s426, %s428
    %p435 = scmp.eq.s32.totalorder %s27, 1
    %p436 = por %p434, %p435
    %p437 = scmp.ne.s32.totalorder %s428, %s429
    %p438 = scmp.eq.s32.totalorder %s27, 0
    %p439 = por %p437, %p438
    %p440 = scmp.ne.s32.totalorder %s428, %s429
    %p441 = scmp.eq.s32.totalorder %s28, 1
    %p442 = por %p440, %p441
    %p444 = scmp.ne.s32.totalorder %s429, %s443
    %p445 = scmp.eq.s32.totalorder %s28, 0
    %p446 = por %p444, %p445
    %p447 = scmp.le.s32.totalorder 1, %s22
    %p448 = scmp.lt.s32.totalorder %s22, 3
    %p449 = pnand %p447, %p448
    %p450 = pneg %p449
    // Predicated region
    $region9: #{bert_for_pretraining.2} parent=5 // pred_check
      _
    $region10: #{bert_for_pretraining.2} parent=5 // pred_check_branch
      %452 = sbr.rel (%p449) target = $region12
    $region11: #{bert_for_pretraining.2} parent=5 // pred_region
      %s453 = ssub.s32 %s22, 1
      // Predicated region
      $region13: #{bert_for_pretraining.2} parent=11 // pred_check
        %p454 = pneg %p43
      $region14: #{bert_for_pretraining.2} parent=11 // pred_check_branch
        %456 = sbr.rel (%p454) target = $region16
      $region15: #{bert_for_pretraining.2} parent=11 // pred_region
        _
      $region16: #{bert_for_pretraining.2} parent=11 // pred_fallthru
        _
      // Predicated region
      $region17: #{bert_for_pretraining.2} parent=11 // pred_check
        %p457 = pneg %p64
      $region18: #{bert_for_pretraining.2} parent=11 // pred_check_branch
        %459 = sbr.rel (%p457) target = $region20
      $region19: #{bert_for_pretraining.2} parent=11 // pred_region
        _
      $region20: #{bert_for_pretraining.2} parent=11 // pred_fallthru
        _
      // Predicated region
      $region21: #{bert_for_pretraining.2} parent=11 // pred_check
        %p460 = pneg %p85
      $region22: #{bert_for_pretraining.2} parent=11 // pred_check_branch
        %462 = sbr.rel (%p460) target = $region24
      $region23: #{bert_for_pretraining.2} parent=11 // pred_region
        _
      $region24: #{bert_for_pretraining.2} parent=11 // pred_fallthru
        _
      // Predicated region
      $region25: #{bert_for_pretraining.2} parent=11 // pred_check
        %p463 = pneg %p106
      $region26: #{bert_for_pretraining.2} parent=11 // pred_check_branch
        %465 = sbr.rel (%p463) target = $region28
      $region27: #{bert_for_pretraining.2} parent=11 // pred_region
        _
      $region28: #{bert_for_pretraining.2} parent=11 // pred_fallthru
        _
    $region12: #{bert_for_pretraining.2} parent=5 // pred_fallthru
      _
    %p466 = scmp.lt.s32.totalorder %s22, 2
    // Predicated region
    $region29: #{bert_for_pretraining.2} parent=5 // pred_check
      %p467 = pneg %p466
    $region30: #{bert_for_pretraining.2} parent=5 // pred_check_branch
      %469 = sbr.rel (%p467) target = $region32
    $region31: #{bert_for_pretraining.2} parent=5 // pred_region
      // Predicated region
      $region33: #{bert_for_pretraining.2} parent=31 // pred_check
        %p470 = pneg %p126
      $region34: #{bert_for_pretraining.2} parent=31 // pred_check_branch
        %472 = sbr.rel (%p470) target = $region36
      $region35: #{bert_for_pretraining.2} parent=31 // pred_region
        %s473 = smul.u32 6, %s22
        %p474 = scmp.lt.s32.totalorder %s473, 11
        %s475 = scalar_select %p474, %s473, 11
        %s476 = smul.addr %s475, 4
        %s477 = smul.addr %s476, 4
        %s478 = scalar_lea.vmem %s4, %s477
        %s479 = smul.u32 6, %s22
      $region36: #{bert_for_pretraining.2} parent=31 // pred_fallthru
        _
      // Predicated region
      $region37: #{bert_for_pretraining.2} parent=31 // pred_check
        %p480 = pneg %p152
      $region38: #{bert_for_pretraining.2} parent=31 // pred_check_branch
        %482 = sbr.rel (%p480) target = $region40
      $region39: #{bert_for_pretraining.2} parent=31 // pred_region
        %s483 = smul.u32 6, %s22
        %p484 = scmp.lt.s32.totalorder %s483, 11
        %s485 = scalar_select %p484, %s483, 11
        %s486 = scalar_lea.vmem %s5, %s485
        %s487 = smul.u32 6, %s22
      $region40: #{bert_for_pretraining.2} parent=31 // pred_fallthru
        _
      // Predicated region
      $region41: #{bert_for_pretraining.2} parent=31 // pred_check
        %p488 = pneg %p178
      $region42: #{bert_for_pretraining.2} parent=31 // pred_check_branch
        %490 = sbr.rel (%p488) target = $region44
      $region43: #{bert_for_pretraining.2} parent=31 // pred_region
        %s491 = smul.u32 2, %s22
        %p492 = scmp.lt.s32.totalorder %s491, 3
        %s493 = scalar_select %p492, %s491, 3
        %s494 = smul.addr %s493, 2
        %s495 = smul.addr %s494, 4
        %s496 = scalar_lea.vmem %s6, %s495
        %s497 = smul.u32 2, %s22
      $region44: #{bert_for_pretraining.2} parent=31 // pred_fallthru
        _
      // Predicated region
      $region45: #{bert_for_pretraining.2} parent=31 // pred_check
        %p498 = pneg %p204
      $region46: #{bert_for_pretraining.2} parent=31 // pred_check_branch
        %500 = sbr.rel (%p498) target = $region48
      $region47: #{bert_for_pretraining.2} parent=31 // pred_region
        %p501 = scmp.lt.s32.totalorder %s22, 1
        %s502 = scalar_select %p501, %s22, 1
        %s503 = scalar_lea.vmem %s7, %s502
      $region48: #{bert_for_pretraining.2} parent=31 // pred_fallthru
        _
      // Predicated region
      $region49: #{bert_for_pretraining.2} parent=31 // pred_check
        %p504 = pneg %p230
      $region50: #{bert_for_pretraining.2} parent=31 // pred_check_branch
        %506 = sbr.rel (%p504) target = $region52
      $region51: #{bert_for_pretraining.2} parent=31 // pred_region
        %p507 = scmp.lt.s32.totalorder %s22, 1
        %s508 = scalar_select %p507, %s22, 1
        %s509 = scalar_lea.vmem %s8, %s508
      $region52: #{bert_for_pretraining.2} parent=31 // pred_fallthru
        _
      // Predicated region
      $region53: #{bert_for_pretraining.2} parent=31 // pred_check
        %p510 = pneg %p256
      $region54: #{bert_for_pretraining.2} parent=31 // pred_check_branch
        %512 = sbr.rel (%p510) target = $region56
      $region55: #{bert_for_pretraining.2} parent=31 // pred_region
        %p513 = scmp.lt.s32.totalorder %s22, 1
        %s514 = scalar_select %p513, %s22, 1
        %s515 = scalar_lea.vmem %s9, %s514
      $region56: #{bert_for_pretraining.2} parent=31 // pred_fallthru
        _
      // Predicated region
      $region57: #{bert_for_pretraining.2} parent=31 // pred_check
        %p516 = pneg %p282
      $region58: #{bert_for_pretraining.2} parent=31 // pred_check_branch
        %518 = sbr.rel (%p516) target = $region60
      $region59: #{bert_for_pretraining.2} parent=31 // pred_region
        %p519 = scmp.lt.s32.totalorder %s22, 1
        %s520 = scalar_select %p519, %s22, 1
        %s521 = smul.addr %s520, 4
        %s522 = smul.addr %s521, 4
        %s523 = scalar_lea.vmem %s10, %s522
      $region60: #{bert_for_pretraining.2} parent=31 // pred_fallthru
        _
      // Predicated region
      $region61: #{bert_for_pretraining.2} parent=31 // pred_check
        %p524 = pneg %p308
      $region62: #{bert_for_pretraining.2} parent=31 // pred_check_branch
        %526 = sbr.rel (%p524) target = $region64
      $region63: #{bert_for_pretraining.2} parent=31 // pred_region
        %p527 = scmp.lt.s32.totalorder %s22, 1
        %s528 = scalar_select %p527, %s22, 1
        %s529 = scalar_lea.vmem %s11, %s528
      $region64: #{bert_for_pretraining.2} parent=31 // pred_fallthru
        _
      // Predicated region
      $region65: #{bert_for_pretraining.2} parent=31 // pred_check
        %p530 = pneg %p334
      $region66: #{bert_for_pretraining.2} parent=31 // pred_check_branch
        %532 = sbr.rel (%p530) target = $region68
      $region67: #{bert_for_pretraining.2} parent=31 // pred_region
        %p533 = scmp.lt.s32.totalorder %s22, 1
        %s534 = scalar_select %p533, %s22, 1
        %s535 = smul.addr %s534, 8
        %s536 = smul.addr %s535, 4
        %s537 = scalar_lea.vmem %s12, %s536
      $region68: #{bert_for_pretraining.2} parent=31 // pred_fallthru
        _
      // Predicated region
      $region69: #{bert_for_pretraining.2} parent=31 // pred_check
        %p538 = pneg %p360
      $region70: #{bert_for_pretraining.2} parent=31 // pred_check_branch
        %540 = sbr.rel (%p538) target = $region72
      $region71: #{bert_for_pretraining.2} parent=31 // pred_region
        %p541 = scmp.lt.s32.totalorder %s22, 1
        %s542 = scalar_select %p541, %s22, 1
        %s543 = scalar_lea.vmem %s13, %s542
      $region72: #{bert_for_pretraining.2} parent=31 // pred_fallthru
        _
      // Predicated region
      $region73: #{bert_for_pretraining.2} parent=31 // pred_check
        %p544 = pneg %p386
      $region74: #{bert_for_pretraining.2} parent=31 // pred_check_branch
        %546 = sbr.rel (%p544) target = $region76
      $region75: #{bert_for_pretraining.2} parent=31 // pred_region
        %p547 = scmp.lt.s32.totalorder %s22, 1
        %s548 = scalar_select %p547, %s22, 1
        %s549 = scalar_lea.vmem %s14, %s548
      $region76: #{bert_for_pretraining.2} parent=31 // pred_fallthru
        _
      // Predicated region
      $region77: #{bert_for_pretraining.2} parent=31 // pred_check
        %p550 = pneg %p412
      $region78: #{bert_for_pretraining.2} parent=31 // pred_check_branch
        %552 = sbr.rel (%p550) target = $region80
      $region79: #{bert_for_pretraining.2} parent=31 // pred_region
        %p553 = scmp.lt.s32.totalorder %s22, 1
        %s554 = scalar_select %p553, %s22, 1
        %s555 = scalar_lea.vmem %s15, %s554
      $region80: #{bert_for_pretraining.2} parent=31 // pred_fallthru
        _
    $region32: #{bert_for_pretraining.2} parent=5 // pred_fallthru
      _
    %p556 = scmp.le.s32.totalorder 1, %s22
    %p557 = scmp.lt.s32.totalorder %s22, 3
    %p558 = pnand %p556, %p557
    %p559 = pneg %p558
    // Predicated region
    $region81: #{bert_for_pretraining.2} parent=5 // pred_check
      _
    $region82: #{bert_for_pretraining.2} parent=5 // pred_check_branch
      %561 = sbr.rel (%p558) target = $region84
    $region83: #{bert_for_pretraining.2} parent=5 // pred_region
      %s562 = ssub.s32 %s22, 1
      %p563 = pneg %p43
      %p564 = pneg %p40
      %p565 = pneg %p64
      %p566 = pneg %p61
      %p567 = pneg %p85
      %p568 = pneg %p82
      %p569 = pneg %p106
      %p570 = pneg %p103
      %s571 = smul.u32 6, %s27
      %p572 = scmp.lt.s32.totalorder %s571, 11
      %s573 = scalar_select %p572, %s571, 11
      %s574 = smul.addr %s573, 4
      %s575 = smul.addr %s574, 4
      %s576 = scalar_lea.vmem %s4, %s575
      %p577 = pneg %p132
      %p578 = pneg %p129
      %s579 = smul.u32 6, %s27
      %p580 = scmp.lt.s32.totalorder %s579, 11
      %s581 = scalar_select %p580, %s579, 11
      %s582 = scalar_lea.vmem %s5, %s581
      %p583 = pneg %p158
      %p584 = pneg %p155
      %s585 = smul.u32 2, %s27
      %p586 = scmp.lt.s32.totalorder %s585, 3
      %s587 = scalar_select %p586, %s585, 3
      %s588 = smul.addr %s587, 2
      %s589 = smul.addr %s588, 4
      %s590 = scalar_lea.vmem %s6, %s589
      %p591 = pneg %p184
      %p592 = pneg %p181
      %p593 = scmp.lt.s32.totalorder %s27, 1
      %s594 = scalar_select %p593, %s27, 1
      %s595 = scalar_lea.vmem %s7, %s594
      %p596 = pneg %p210
      %p597 = pneg %p207
      %p598 = scmp.lt.s32.totalorder %s27, 1
      %s599 = scalar_select %p598, %s27, 1
      %s600 = scalar_lea.vmem %s8, %s599
      %p601 = pneg %p236
      %p602 = pneg %p233
      %p603 = scmp.lt.s32.totalorder %s27, 1
      %s604 = scalar_select %p603, %s27, 1
      %s605 = scalar_lea.vmem %s9, %s604
      %p606 = pneg %p262
      %p607 = pneg %p259
      %p608 = scmp.lt.s32.totalorder %s27, 1
      %s609 = scalar_select %p608, %s27, 1
      %s610 = smul.addr %s609, 4
      %s611 = smul.addr %s610, 4
      %s612 = scalar_lea.vmem %s10, %s611
      %p613 = pneg %p288
      %p614 = pneg %p285
      %p615 = scmp.lt.s32.totalorder %s27, 1
      %s616 = scalar_select %p615, %s27, 1
      %s617 = scalar_lea.vmem %s11, %s616
      %p618 = pneg %p314
      %p619 = pneg %p311
      %p620 = scmp.lt.s32.totalorder %s27, 1
      %s621 = scalar_select %p620, %s27, 1
      %s622 = smul.addr %s621, 8
      %s623 = smul.addr %s622, 4
      %s624 = scalar_lea.vmem %s12, %s623
      %p625 = pneg %p340
      %p626 = pneg %p337
      %p627 = scmp.lt.s32.totalorder %s27, 1
      %s628 = scalar_select %p627, %s27, 1
      %s629 = scalar_lea.vmem %s13, %s628
      %p630 = pneg %p366
      %p631 = pneg %p363
      %p632 = scmp.lt.s32.totalorder %s27, 1
      %s633 = scalar_select %p632, %s27, 1
      %s634 = scalar_lea.vmem %s14, %s633
      %p635 = pneg %p392
      %p636 = pneg %p389
      %p637 = scmp.lt.s32.totalorder %s27, 1
      %s638 = scalar_select %p637, %s27, 1
      %s639 = scalar_lea.vmem %s15, %s638
      %p640 = pneg %p418
      %p641 = pneg %p415
      %p642 = pneg %p439
      %p643 = pneg %p436
      %s644 = smul.u32 6, %s27
      %p645 = scmp.lt.s32.totalorder %s644, 11
      %s646 = scalar_select %p645, %s644, 11
      %s647 = smul.addr %s646, 4
      %s648 = smul.addr %s647, 4
      %s649 = scalar_lea.vmem %s4, %s648
      %s650 = smul.u32 6, %s27
      %s651 = smul.u32 6, %s27
      %p652 = scmp.lt.s32.totalorder %s651, 11
      %s653 = scalar_select %p652, %s651, 11
      %s654 = scalar_lea.vmem %s5, %s653
      %s655 = smul.u32 6, %s27
      %s656 = smul.u32 2, %s27
      %p657 = scmp.lt.s32.totalorder %s656, 3
      %s658 = scalar_select %p657, %s656, 3
      %s659 = smul.addr %s658, 2
      %s660 = smul.addr %s659, 4
      %s661 = scalar_lea.vmem %s6, %s660
      %s662 = smul.u32 2, %s27
      %p663 = scmp.lt.s32.totalorder %s27, 1
      %s664 = scalar_select %p663, %s27, 1
      %s665 = scalar_lea.vmem %s7, %s664
      %p666 = scmp.lt.s32.totalorder %s27, 1
      %s667 = scalar_select %p666, %s27, 1
      %s668 = scalar_lea.vmem %s8, %s667
      %p669 = scmp.lt.s32.totalorder %s27, 1
      %s670 = scalar_select %p669, %s27, 1
      %s671 = scalar_lea.vmem %s9, %s670
      %p672 = scmp.lt.s32.totalorder %s27, 1
      %s673 = scalar_select %p672, %s27, 1
      %s674 = smul.addr %s673, 4
      %s675 = smul.addr %s674, 4
      %s676 = scalar_lea.vmem %s10, %s675
      %p677 = scmp.lt.s32.totalorder %s27, 1
      %s678 = scalar_select %p677, %s27, 1
      %s679 = scalar_lea.vmem %s11, %s678
      %p680 = scmp.lt.s32.totalorder %s27, 1
      %s681 = scalar_select %p680, %s27, 1
      %s682 = smul.addr %s681, 8
      %s683 = smul.addr %s682, 4
      %s684 = scalar_lea.vmem %s12, %s683
      %p685 = scmp.lt.s32.totalorder %s27, 1
      %s686 = scalar_select %p685, %s27, 1
      %s687 = scalar_lea.vmem %s13, %s686
      %p688 = scmp.lt.s32.totalorder %s27, 1
      %s689 = scalar_select %p688, %s27, 1
      %s690 = scalar_lea.vmem %s14, %s689
      %p691 = scmp.lt.s32.totalorder %s27, 1
      %s692 = scalar_select %p691, %s27, 1
      %s693 = scalar_lea.vmem %s15, %s692
      %p695 = scmp.eq.s32.totalorder %s27, 0
      // Predicated region
      $region85: #{bert_for_pretraining.2} parent=83 // pred_check
        %p696 = pneg %p695
      $region86: #{bert_for_pretraining.2} parent=83 // pred_check_branch
        %698 = sbr.rel (%p696) target = $region88
      $region87: #{bert_for_pretraining.2} parent=83 // pred_region
        %v699 = vld [vmem:[%s0] sm:$0xff]
        %v700 = vld [vmem:[%s0 + $0x8] sm:$0xff]
        %v701 = vld [vmem:[%s2] sm:$0x1]
        %v702 = vld [vmem:[%s3] sm:$0x1]
        %vm703 = vcmask 261120
        %v704 = vsel %vm703, %v699, 0.0
        %705 = vadd.xlane.f32.xlu0 %v704
        %v706 = vpop.xlane.xlu0 %705
        %v707 = vsel %vm703, %v700, 0.0
        %708 = vadd.xlane.f32.xlu0 %v707
        %v709 = vpop.xlane.xlu0 %708
        %v710 = vrcp.pop 32.0
        %v711 = vmul.f32 %v706, %v710
        %v712 = vmul.f32 %v709, %v710
        %v713 = vsub.f32 %v699, %v711
        %v714 = vsub.f32 %v700, %v712
        %v715 = vmul.f32 %v713, %v713
        %v716 = vmul.f32 %v714, %v714
        %v717 = vsel %vm703, %v715, 0.0
        %718 = vadd.xlane.f32.xlu0 %v717
        %v719 = vpop.xlane.xlu0 %718
        %v720 = vsel %vm703, %v716, 0.0
        %721 = vadd.xlane.f32.xlu0 %v720
        %v722 = vpop.xlane.xlu0 %721
        %v723 = vmul.f32 %v719, %v710
        %v724 = vmul.f32 %v722, %v710
        %v725 = vadd.f32 %v723, 1e-12
        %v726 = vadd.f32 %v724, 1e-12
        %v727 = vrsqrt.pop %v725
        %v728 = vrsqrt.pop %v726
        %v729 = vmul.f32 %v713, %v727
        %v730 = vmul.f32 %v714, %v728
        %v732 = vlaneseq
        %v733 = vshrl.u32 %v732, 7
        %v734 = vsub.s32 0, %v733
        %v735 = vrot.slane %v701, %v734
        %v737 = vmul.f32 %v729, %v735
        %v738 = vmul.f32 %v730, %v735
        %v740 = vlaneseq
        %v741 = vshrl.u32 %v740, 7
        %v742 = vsub.s32 0, %v741
        %v743 = vrot.slane %v702, %v742
        %v745 = vadd.f32 %v737, %v743
        %v746 = vadd.f32 %v738, %v743
        %747 = vst.msk [vmem:[#allocation2] sm:$0xff] %vm703, %v745
        %748 = vst.msk [vmem:[#allocation2 + $0x8] sm:$0xff] %vm703, %v746
      $region88: #{bert_for_pretraining.2} parent=83 // pred_fallthru
        _
      %v749 = vld [vmem:[#allocation2] sm:$0xff]
      %v750 = vld [vmem:[#allocation2 + $0x8] sm:$0xff]
      %v751 = vpack.c.bf16 %v750, %v749
      %v752 = vld [vmem:[%s1] sm:$0xff]
      %v753 = vld [vmem:[%s1 + $0x8] sm:$0xff]
      %v754 = vld [vmem:[%s665] sm:$0x1]
      %v755 = vld [vmem:[%s649] sm:$0xf]
      %v756 = vld [vmem:[%s649 + $0x4] sm:$0xf]
      %v757 = vld [vmem:[%s649 + $0x8] sm:$0xf]
      %v758 = vld [vmem:[%s649 + $0xc] sm:$0xf]
      %v759 = vld [vmem:[%s654] sm:$0x1]
      %v761 = vlaneseq
      %v762 = vshrl.u32 %v761, 7
      %v763 = vsub.s32 0, %v762
      %v764 = vrot.slane %v759, %v763
      %v770 = vunpack.c.l.b16 %v755
      %v771 = vunpack.c.l.b16 %v756
      %v772 = vunpack.c.l.b16 %v757
      %v773 = vunpack.c.l.b16 %v758
      %v774 = vpack.c.b16 %v771, %v770
      %v775 = vpack.c.b16 %v773, %v772
      %vm778 = vcmask 261120
      %v780 = vsel %vm778, %v751, 0
      %782 = vmatprep.subr.bf16.mxu0 0
      %783 = vmatpush1.bf16.msra.mxu0 %v774
      %784 = vmatprep.subr.bf16.mxu0 0
      %785 = vmatpush1.bf16.msra.mxu0 %v775
      %786 = vmatprep.subr.bf16.mxu0 0
      %787 = vmatpush1.bf16.msra.mxu0 0
      %788 = vmatprep.subr.bf16.mxu0 0
      %789 = vmatpush1.bf16.msra.mxu0 0
      %790 = vmatprep.subr.bf16.mxu0 0
      %791 = vmatpush1.bf16.msra.mxu0 0
      %792 = vmatprep.subr.bf16.mxu0 0
      %793 = vmatpush1.bf16.msra.mxu0 0
      %794 = vmatprep.subr.bf16.mxu0 0
      %795 = vmatpush1.bf16.msra.mxu0 0
      %796 = vmatprep.subr.bf16.mxu0 0
      %797 = vmatpush1.bf16.msra.mxu0 0
      %798 = vmatprep.subr.bf16.mxu0 0
      %799 = vmatpush1.bf16.msra.mxu0 0
      %800 = vmatprep.subr.bf16.mxu0 0
      %801 = vmatpush1.bf16.msra.mxu0 0
      %802 = vmatprep.subr.bf16.mxu0 0
      %803 = vmatpush1.bf16.msra.mxu0 0
      %804 = vmatprep.subr.bf16.mxu0 0
      %805 = vmatpush1.bf16.msra.mxu0 0
      %806 = vmatprep.subr.bf16.mxu0 0
      %807 = vmatpush1.bf16.msra.mxu0 0
      %808 = vmatprep.subr.bf16.mxu0 0
      %809 = vmatpush1.bf16.msra.mxu0 0
      %810 = vmatprep.subr.bf16.mxu0 0
      %811 = vmatpush1.bf16.msra.mxu0 0
      %812 = vmatprep.subr.bf16.mxu0 0
      %813 = vmatpush1.bf16.msra.mxu0 0
      %814 = vmatprep.mubr.bf16.mxu0 0
      %815 = vmatmul.mubr.bf16.gmra.mrb[0].mxu0 %v780
      %v816 = vpop.f32.mrb[0].mxu0
      %v817 = vadd.f32 %v764, %v816
      %v818 = vpop.f32.mrb[0].mxu0
      %v819 = vpop.f32.mrb[0].mxu0
      %v820 = vadd.f32 %v764, %v819
      %v821 = vpop.f32.mrb[0].mxu0
      %822 = vdwg.mxu0
      %s823 = scalar_lea.vmem %s649, 32
      %v824 = vld [vmem:[%s823] sm:$0xf]
      %v825 = vld [vmem:[%s823 + $0x4] sm:$0xf]
      %v826 = vld [vmem:[%s823 + $0x8] sm:$0xf]
      %v827 = vld [vmem:[%s823 + $0xc] sm:$0xf]
      %s828 = scalar_lea.vmem %s654, 2
      %v829 = vld [vmem:[%s828] sm:$0x1]
      %v831 = vlaneseq
      %v832 = vshrl.u32 %v831, 7
      %v833 = vsub.s32 0, %v832
      %v834 = vrot.slane %v829, %v833
      %v840 = vunpack.c.l.b16 %v824
      %v841 = vunpack.c.l.b16 %v825
      %v842 = vunpack.c.l.b16 %v826
      %v843 = vunpack.c.l.b16 %v827
      %v844 = vpack.c.b16 %v841, %v840
      %v845 = vpack.c.b16 %v843, %v842
      %848 = vmatprep.subr.bf16.mxu0 0
      %849 = vmatpush1.bf16.msra.mxu0 %v844
      %850 = vmatprep.subr.bf16.mxu0 0
      %851 = vmatpush1.bf16.msra.mxu0 %v845
      %852 = vmatprep.subr.bf16.mxu0 0
      %853 = vmatpush1.bf16.msra.mxu0 0
      %854 = vmatprep.subr.bf16.mxu0 0
      %855 = vmatpush1.bf16.msra.mxu0 0
      %856 = vmatprep.subr.bf16.mxu0 0
      %857 = vmatpush1.bf16.msra.mxu0 0
      %858 = vmatprep.subr.bf16.mxu0 0
      %859 = vmatpush1.bf16.msra.mxu0 0
      %860 = vmatprep.subr.bf16.mxu0 0
      %861 = vmatpush1.bf16.msra.mxu0 0
      %862 = vmatprep.subr.bf16.mxu0 0
      %863 = vmatpush1.bf16.msra.mxu0 0
      %864 = vmatprep.subr.bf16.mxu0 0
      %865 = vmatpush1.bf16.msra.mxu0 0
      %866 = vmatprep.subr.bf16.mxu0 0
      %867 = vmatpush1.bf16.msra.mxu0 0
      %868 = vmatprep.subr.bf16.mxu0 0
      %869 = vmatpush1.bf16.msra.mxu0 0
      %870 = vmatprep.subr.bf16.mxu0 0
      %871 = vmatpush1.bf16.msra.mxu0 0
      %872 = vmatprep.subr.bf16.mxu0 0
      %873 = vmatpush1.bf16.msra.mxu0 0
      %874 = vmatprep.subr.bf16.mxu0 0
      %875 = vmatpush1.bf16.msra.mxu0 0
      %876 = vmatprep.subr.bf16.mxu0 0
      %877 = vmatpush1.bf16.msra.mxu0 0
      %878 = vmatprep.subr.bf16.mxu0 0
      %879 = vmatpush1.bf16.msra.mxu0 0
      %880 = vmatprep.mubr.bf16.mxu0 0
      %881 = vmatmul.mubr.bf16.gmra.mrb[0].mxu0 %v780
      %v882 = vpop.f32.mrb[0].mxu0
      %v883 = vadd.f32 %v834, %v882
      %v884 = vpop.f32.mrb[0].mxu0
      %v885 = vpop.f32.mrb[0].mxu0
      %v886 = vadd.f32 %v834, %v885
      %v887 = vpop.f32.mrb[0].mxu0
      %888 = vdwg.mxu0
      %s889 = scalar_lea.vmem %s649, 64
      %v890 = vld [vmem:[%s889] sm:$0xf]
      %v891 = vld [vmem:[%s889 + $0x4] sm:$0xf]
      %v892 = vld [vmem:[%s889 + $0x8] sm:$0xf]
      %v893 = vld [vmem:[%s889 + $0xc] sm:$0xf]
      %s894 = scalar_lea.vmem %s654, 4
      %v895 = vld [vmem:[%s894] sm:$0x1]
      %v897 = vlaneseq
      %v898 = vshrl.u32 %v897, 7
      %v899 = vsub.s32 0, %v898
      %v900 = vrot.slane %v895, %v899
      %v906 = vunpack.c.l.b16 %v890
      %v907 = vunpack.c.l.b16 %v891
      %v908 = vunpack.c.l.b16 %v892
      %v909 = vunpack.c.l.b16 %v893
      %v910 = vpack.c.b16 %v907, %v906
      %v911 = vpack.c.b16 %v909, %v908
      %914 = vmatprep.subr.bf16.mxu0 0
      %915 = vmatpush1.bf16.msra.mxu0 %v910
      %916 = vmatprep.subr.bf16.mxu0 0
      %917 = vmatpush1.bf16.msra.mxu0 %v911
      %918 = vmatprep.subr.bf16.mxu0 0
      %919 = vmatpush1.bf16.msra.mxu0 0
      %920 = vmatprep.subr.bf16.mxu0 0
      %921 = vmatpush1.bf16.msra.mxu0 0
      %922 = vmatprep.subr.bf16.mxu0 0
      %923 = vmatpush1.bf16.msra.mxu0 0
      %924 = vmatprep.subr.bf16.mxu0 0
      %925 = vmatpush1.bf16.msra.mxu0 0
      %926 = vmatprep.subr.bf16.mxu0 0
      %927 = vmatpush1.bf16.msra.mxu0 0
      %928 = vmatprep.subr.bf16.mxu0 0
      %929 = vmatpush1.bf16.msra.mxu0 0
      %930 = vmatprep.subr.bf16.mxu0 0
      %931 = vmatpush1.bf16.msra.mxu0 0
      %932 = vmatprep.subr.bf16.mxu0 0
      %933 = vmatpush1.bf16.msra.mxu0 0
      %934 = vmatprep.subr.bf16.mxu0 0
      %935 = vmatpush1.bf16.msra.mxu0 0
      %936 = vmatprep.subr.bf16.mxu0 0
      %937 = vmatpush1.bf16.msra.mxu0 0
      %938 = vmatprep.subr.bf16.mxu0 0
      %939 = vmatpush1.bf16.msra.mxu0 0
      %940 = vmatprep.subr.bf16.mxu0 0
      %941 = vmatpush1.bf16.msra.mxu0 0
      %942 = vmatprep.subr.bf16.mxu0 0
      %943 = vmatpush1.bf16.msra.mxu0 0
      %944 = vmatprep.subr.bf16.mxu0 0
      %945 = vmatpush1.bf16.msra.mxu0 0
      %946 = vmatprep.mubr.bf16.mxu0 0
      %947 = vmatmul.mubr.bf16.gmra.mrb[0].mxu0 %v780
      %v948 = vpop.f32.mrb[0].mxu0
      %v949 = vadd.f32 %v900, %v948
      %v950 = vpop.f32.mrb[0].mxu0
      %v951 = vpop.f32.mrb[0].mxu0
      %v952 = vadd.f32 %v900, %v951
      %v953 = vpop.f32.mrb[0].mxu0
      %954 = vdwg.mxu0
      %v955 = vpack.c.bf16 %v820, %v817
      %v956 = vpack.c.bf16 %v886, %v883
      %vm957 = vcmask 130048
      %v959 = vsel %vm957, %v955, 0
      %v962 = vsel %vm957, %v956, 0
      %964 = vmatprep.subr.bf16.mxu0 0
      %965 = vmatpush1.bf16.xpose.msra.mxu0 %v962
      %966 = vmatprep.subr.bf16.mxu0 0
      %967 = vmatpush1.bf16.xpose.msra.mxu0 0
      %968 = vmatprep.subr.bf16.mxu0 0
      %969 = vmatpush1.bf16.xpose.msra.mxu0 0
      %970 = vmatprep.subr.bf16.mxu0 0
      %971 = vmatpush1.bf16.xpose.msra.mxu0 0
      %972 = vmatprep.subr.bf16.mxu0 0
      %973 = vmatpush1.bf16.xpose.msra.mxu0 0
      %974 = vmatprep.subr.bf16.mxu0 0
      %975 = vmatpush1.bf16.xpose.msra.mxu0 0
      %976 = vmatprep.subr.bf16.mxu0 0
      %977 = vmatpush1.bf16.xpose.msra.mxu0 0
      %978 = vmatprep.subr.bf16.mxu0 0
      %979 = vmatpush1.bf16.xpose.msra.mxu0 0
      %980 = vmatprep.subr.bf16.mxu0 0
      %981 = vmatpush1.bf16.xpose.msra.mxu0 0
      %982 = vmatprep.subr.bf16.mxu0 0
      %983 = vmatpush1.bf16.xpose.msra.mxu0 0
      %984 = vmatprep.subr.bf16.mxu0 0
      %985 = vmatpush1.bf16.xpose.msra.mxu0 0
      %986 = vmatprep.subr.bf16.mxu0 0
      %987 = vmatpush1.bf16.xpose.msra.mxu0 0
      %988 = vmatprep.subr.bf16.mxu0 0
      %989 = vmatpush1.bf16.xpose.msra.mxu0 0
      %990 = vmatprep.subr.bf16.mxu0 0
      %991 = vmatpush1.bf16.xpose.msra.mxu0 0
      %992 = vmatprep.subr.bf16.mxu0 0
      %993 = vmatpush1.bf16.xpose.msra.mxu0 0
      %994 = vmatprep.subr.bf16.mxu0 0
      %995 = vmatpush1.bf16.xpose.msra.mxu0 0
      %996 = vmatprep.mubr.bf16.mxu0 0
      %997 = vmatmul.mubr.bf16.gmra.mrb[0].mxu0 %v959
      %v998 = vpop.f32.mrb[0].mxu0
      %v999 = vadd.f32 0.0, %v998
      %v1000 = vpop.f32.mrb[0].mxu0
      %v1001 = vpop.f32.mrb[0].mxu0
      %v1002 = vadd.f32 0.0, %v1001
      %v1003 = vpop.f32.mrb[0].mxu0
      %1004 = vdwg.mxu0
      %v1005 = vmul.f32 %v999, 0.25
      %v1006 = vmul.f32 %v1002, 0.25
      %v1007 = vadd.f32 %v1005, %v752
      %v1008 = vadd.f32 %v1006, %v753
      %v1009 = vsel %vm957, %v1007, -inf
      %1010 = vmax.xlane.f32.xlu0 %v1009
      %v1011 = vpop.xlane.xlu0 %1010
      %v1012 = vsel %vm957, %v1008, -inf
      %1013 = vmax.xlane.f32.xlu0 %v1012
      %v1014 = vpop.xlane.xlu0 %1013
      %v1015 = vsub.f32 %v1007, %v1011
      %v1016 = vsub.f32 %v1008, %v1014
      %v1017 = vmul.f32 %v1015, 1.442695
      %v1018 = vpow.pop %v1017
      %v1019 = vmul.f32 %v1016, 1.442695
      %v1020 = vpow.pop %v1019
      %v1021 = vsel %vm957, %v1018, 0.0
      %1022 = vadd.xlane.f32.xlu0 %v1021
      %v1023 = vpop.xlane.xlu0 %1022
      %v1024 = vsel %vm957, %v1020, 0.0
      %1025 = vadd.xlane.f32.xlu0 %v1024
      %v1026 = vpop.xlane.xlu0 %1025
      %v1027 = vrcp.pop %v1023
      %v1028 = vrcp.pop %v1026
      %v1029 = vmul.f32 %v1018, %v1027
      %v1030 = vmul.f32 %v1020, %v1028
      %v1031 = vpack.c.bf16 %v1030, %v1029
      %v1032 = vpack.c.bf16 %v952, %v949
      %v1034 = vsel %vm957, %v1031, 0
      %1036 = vmatprep.subr.bf16.mxu0 0
      %1037 = vmatpush1.bf16.msra.mxu0 %v1032
      %1038 = vmatprep.subr.bf16.mxu0 0
      %1039 = vmatpush1.bf16.msra.mxu0 0
      %1040 = vmatprep.subr.bf16.mxu0 0
      %1041 = vmatpush1.bf16.msra.mxu0 0
      %1042 = vmatprep.subr.bf16.mxu0 0
      %1043 = vmatpush1.bf16.msra.mxu0 0
      %1044 = vmatprep.subr.bf16.mxu0 0
      %1045 = vmatpush1.bf16.msra.mxu0 0
      %1046 = vmatprep.subr.bf16.mxu0 0
      %1047 = vmatpush1.bf16.msra.mxu0 0
      %1048 = vmatprep.subr.bf16.mxu0 0
      %1049 = vmatpush1.bf16.msra.mxu0 0
      %1050 = vmatprep.subr.bf16.mxu0 0
      %1051 = vmatpush1.bf16.msra.mxu0 0
      %1052 = vmatprep.subr.bf16.mxu0 0
      %1053 = vmatpush1.bf16.msra.mxu0 0
      %1054 = vmatprep.subr.bf16.mxu0 0
      %1055 = vmatpush1.bf16.msra.mxu0 0
      %1056 = vmatprep.subr.bf16.mxu0 0
      %1057 = vmatpush1.bf16.msra.mxu0 0
      %1058 = vmatprep.subr.bf16.mxu0 0
      %1059 = vmatpush1.bf16.msra.mxu0 0
      %1060 = vmatprep.subr.bf16.mxu0 0
      %1061 = vmatpush1.bf16.msra.mxu0 0
      %1062 = vmatprep.subr.bf16.mxu0 0
      %1063 = vmatpush1.bf16.msra.mxu0 0
      %1064 = vmatprep.subr.bf16.mxu0 0
      %1065 = vmatpush1.bf16.msra.mxu0 0
      %1066 = vmatprep.subr.bf16.mxu0 0
      %1067 = vmatpush1.bf16.msra.mxu0 0
      %1068 = vmatprep.mubr.bf16.mxu0 0
      %1069 = vmatmul.mubr.bf16.gmra.mrb[0].mxu0 %v1034
      %v1070 = vpop.f32.mrb[0].mxu0
      %v1071 = vadd.f32 0.0, %v1070
      %v1072 = vpop.f32.mrb[0].mxu0
      %v1073 = vpop.f32.mrb[0].mxu0
      %v1074 = vadd.f32 0.0, %v1073
      %v1075 = vpop.f32.mrb[0].mxu0
      %1076 = vdwg.mxu0
      %v1077 = vpack.c.bf16 %v1074, %v1071
      %v1078 = vld [vmem:[%s661] sm:$0xf]
      %v1079 = vld [vmem:[%s661 + $0x4] sm:$0xf]
      %v1082 = vunpack.c.l.b16 %v1078
      %v1083 = vunpack.c.l.b16 %v1079
      %v1084 = vpack.c.b16 %v1083, %v1082
      %v1087 = vsel %vm957, %v1077, 0
      %1089 = vmatprep.subr.bf16.mxu0 0
      %1090 = vmatpush1.bf16.msra.mxu0 %v1084
      %1091 = vmatprep.subr.bf16.mxu0 0
      %1092 = vmatpush1.bf16.msra.mxu0 0
      %1093 = vmatprep.subr.bf16.mxu0 0
      %1094 = vmatpush1.bf16.msra.mxu0 0
      %1095 = vmatprep.subr.bf16.mxu0 0
      %1096 = vmatpush1.bf16.msra.mxu0 0
      %1097 = vmatprep.subr.bf16.mxu0 0
      %1098 = vmatpush1.bf16.msra.mxu0 0
      %1099 = vmatprep.subr.bf16.mxu0 0
      %1100 = vmatpush1.bf16.msra.mxu0 0
      %1101 = vmatprep.subr.bf16.mxu0 0
      %1102 = vmatpush1.bf16.msra.mxu0 0
      %1103 = vmatprep.subr.bf16.mxu0 0
      %1104 = vmatpush1.bf16.msra.mxu0 0
      %1105 = vmatprep.subr.bf16.mxu0 0
      %1106 = vmatpush1.bf16.msra.mxu0 0
      %1107 = vmatprep.subr.bf16.mxu0 0
      %1108 = vmatpush1.bf16.msra.mxu0 0
      %1109 = vmatprep.subr.bf16.mxu0 0
      %1110 = vmatpush1.bf16.msra.mxu0 0
      %1111 = vmatprep.subr.bf16.mxu0 0
      %1112 = vmatpush1.bf16.msra.mxu0 0
      %1113 = vmatprep.subr.bf16.mxu0 0
      %1114 = vmatpush1.bf16.msra.mxu0 0
      %1115 = vmatprep.subr.bf16.mxu0 0
      %1116 = vmatpush1.bf16.msra.mxu0 0
      %1117 = vmatprep.subr.bf16.mxu0 0
      %1118 = vmatpush1.bf16.msra.mxu0 0
      %1119 = vmatprep.subr.bf16.mxu0 0
      %1120 = vmatpush1.bf16.msra.mxu0 0
      %1121 = vmatprep.mubr.bf16.mxu0 0
      %1122 = vmatmul.mubr.bf16.gmra.mrb[0].mxu0 %v1087
      %v1123 = vpop.f32.mrb[0].mxu0
      %v1124 = vadd.f32 0.0, %v1123
      %v1125 = vpop.f32.mrb[0].mxu0
      %v1126 = vpop.f32.mrb[0].mxu0
      %v1127 = vadd.f32 0.0, %v1126
      %v1128 = vpop.f32.mrb[0].mxu0
      %1129 = vdwg.mxu0
      %v1131 = vlaneseq
      %v1132 = vshrl.u32 %v1131, 7
      %v1133 = vsub.s32 0, %v1132
      %v1134 = vrot.slane %v754, %v1133
      %v1136 = vadd.f32 %v1134, %v1124
      %v1137 = vadd.f32 %v1134, %v1127
      %s1138 = scalar_lea.vmem %s649, 16
      %v1139 = vld [vmem:[%s1138] sm:$0xf]
      %v1140 = vld [vmem:[%s1138 + $0x4] sm:$0xf]
      %v1141 = vld [vmem:[%s1138 + $0x8] sm:$0xf]
      %v1142 = vld [vmem:[%s1138 + $0xc] sm:$0xf]
      %s1143 = scalar_lea.vmem %s654, 1
      %v1144 = vld [vmem:[%s1143] sm:$0x1]
      %v1146 = vlaneseq
      %v1147 = vshrl.u32 %v1146, 7
      %v1148 = vsub.s32 0, %v1147
      %v1149 = vrot.slane %v1144, %v1148
      %v1155 = vunpack.c.l.b16 %v1139
      %v1156 = vunpack.c.l.b16 %v1140
      %v1157 = vunpack.c.l.b16 %v1141
      %v1158 = vunpack.c.l.b16 %v1142
      %v1159 = vpack.c.b16 %v1156, %v1155
      %v1160 = vpack.c.b16 %v1158, %v1157
      %1163 = vmatprep.subr.bf16.mxu0 0
      %1164 = vmatpush1.bf16.msra.mxu0 %v1159
      %1165 = vmatprep.subr.bf16.mxu0 0
      %1166 = vmatpush1.bf16.msra.mxu0 %v1160
      %1167 = vmatprep.subr.bf16.mxu0 0
      %1168 = vmatpush1.bf16.msra.mxu0 0
      %1169 = vmatprep.subr.bf16.mxu0 0
      %1170 = vmatpush1.bf16.msra.mxu0 0
      %1171 = vmatprep.subr.bf16.mxu0 0
      %1172 = vmatpush1.bf16.msra.mxu0 0
      %1173 = vmatprep.subr.bf16.mxu0 0
      %1174 = vmatpush1.bf16.msra.mxu0 0
      %1175 = vmatprep.subr.bf16.mxu0 0
      %1176 = vmatpush1.bf16.msra.mxu0 0
      %1177 = vmatprep.subr.bf16.mxu0 0
      %1178 = vmatpush1.bf16.msra.mxu0 0
      %1179 = vmatprep.subr.bf16.mxu0 0
      %1180 = vmatpush1.bf16.msra.mxu0 0
      %1181 = vmatprep.subr.bf16.mxu0 0
      %1182 = vmatpush1.bf16.msra.mxu0 0
      %1183 = vmatprep.subr.bf16.mxu0 0
      %1184 = vmatpush1.bf16.msra.mxu0 0
      %1185 = vmatprep.subr.bf16.mxu0 0
      %1186 = vmatpush1.bf16.msra.mxu0 0
      %1187 = vmatprep.subr.bf16.mxu0 0
      %1188 = vmatpush1.bf16.msra.mxu0 0
      %1189 = vmatprep.subr.bf16.mxu0 0
      %1190 = vmatpush1.bf16.msra.mxu0 0
      %1191 = vmatprep.subr.bf16.mxu0 0
      %1192 = vmatpush1.bf16.msra.mxu0 0
      %1193 = vmatprep.subr.bf16.mxu0 0
      %1194 = vmatpush1.bf16.msra.mxu0 0
      %1195 = vmatprep.mubr.bf16.mxu0 0
      %1196 = vmatmul.mubr.bf16.gmra.mrb[0].mxu0 %v780
      %v1197 = vpop.f32.mrb[0].mxu0
      %v1198 = vadd.f32 %v1149, %v1197
      %v1199 = vpop.f32.mrb[0].mxu0
      %v1200 = vpop.f32.mrb[0].mxu0
      %v1201 = vadd.f32 %v1149, %v1200
      %v1202 = vpop.f32.mrb[0].mxu0
      %1203 = vdwg.mxu0
      %s1204 = scalar_lea.vmem %s649, 48
      %v1205 = vld [vmem:[%s1204] sm:$0xf]
      %v1206 = vld [vmem:[%s1204 + $0x4] sm:$0xf]
      %v1207 = vld [vmem:[%s1204 + $0x8] sm:$0xf]
      %v1208 = vld [vmem:[%s1204 + $0xc] sm:$0xf]
      %s1209 = scalar_lea.vmem %s654, 3
      %v1210 = vld [vmem:[%s1209] sm:$0x1]
      %v1212 = vlaneseq
      %v1213 = vshrl.u32 %v1212, 7
      %v1214 = vsub.s32 0, %v1213
      %v1215 = vrot.slane %v1210, %v1214
      %v1221 = vunpack.c.l.b16 %v1205
      %v1222 = vunpack.c.l.b16 %v1206
      %v1223 = vunpack.c.l.b16 %v1207
      %v1224 = vunpack.c.l.b16 %v1208
      %v1225 = vpack.c.b16 %v1222, %v1221
      %v1226 = vpack.c.b16 %v1224, %v1223
      %1229 = vmatprep.subr.bf16.mxu0 0
      %1230 = vmatpush1.bf16.msra.mxu0 %v1225
      %1231 = vmatprep.subr.bf16.mxu0 0
      %1232 = vmatpush1.bf16.msra.mxu0 %v1226
      %1233 = vmatprep.subr.bf16.mxu0 0
      %1234 = vmatpush1.bf16.msra.mxu0 0
      %1235 = vmatprep.subr.bf16.mxu0 0
      %1236 = vmatpush1.bf16.msra.mxu0 0
      %1237 = vmatprep.subr.bf16.mxu0 0
      %1238 = vmatpush1.bf16.msra.mxu0 0
      %1239 = vmatprep.subr.bf16.mxu0 0
      %1240 = vmatpush1.bf16.msra.mxu0 0
      %1241 = vmatprep.subr.bf16.mxu0 0
      %1242 = vmatpush1.bf16.msra.mxu0 0
      %1243 = vmatprep.subr.bf16.mxu0 0
      %1244 = vmatpush1.bf16.msra.mxu0 0
      %1245 = vmatprep.subr.bf16.mxu0 0
      %1246 = vmatpush1.bf16.msra.mxu0 0
      %1247 = vmatprep.subr.bf16.mxu0 0
      %1248 = vmatpush1.bf16.msra.mxu0 0
      %1249 = vmatprep.subr.bf16.mxu0 0
      %1250 = vmatpush1.bf16.msra.mxu0 0
      %1251 = vmatprep.subr.bf16.mxu0 0
      %1252 = vmatpush1.bf16.msra.mxu0 0
      %1253 = vmatprep.subr.bf16.mxu0 0
      %1254 = vmatpush1.bf16.msra.mxu0 0
      %1255 = vmatprep.subr.bf16.mxu0 0
      %1256 = vmatpush1.bf16.msra.mxu0 0
      %1257 = vmatprep.subr.bf16.mxu0 0
      %1258 = vmatpush1.bf16.msra.mxu0 0
      %1259 = vmatprep.subr.bf16.mxu0 0
      %1260 = vmatpush1.bf16.msra.mxu0 0
      %1261 = vmatprep.mubr.bf16.mxu0 0
      %1262 = vmatmul.mubr.bf16.gmra.mrb[0].mxu0 %v780
      %v1263 = vpop.f32.mrb[0].mxu0
      %v1264 = vadd.f32 %v1215, %v1263
      %v1265 = vpop.f32.mrb[0].mxu0
      %v1266 = vpop.f32.mrb[0].mxu0
      %v1267 = vadd.f32 %v1215, %v1266
      %v1268 = vpop.f32.mrb[0].mxu0
      %1269 = vdwg.mxu0
      %s1270 = scalar_lea.vmem %s649, 80
      %v1271 = vld [vmem:[%s1270] sm:$0xf]
      %v1272 = vld [vmem:[%s1270 + $0x4] sm:$0xf]
      %v1273 = vld [vmem:[%s1270 + $0x8] sm:$0xf]
      %v1274 = vld [vmem:[%s1270 + $0xc] sm:$0xf]
      %s1275 = scalar_lea.vmem %s654, 5
      %v1276 = vld [vmem:[%s1275] sm:$0x1]
      %v1278 = vlaneseq
      %v1279 = vshrl.u32 %v1278, 7
      %v1280 = vsub.s32 0, %v1279
      %v1281 = vrot.slane %v1276, %v1280
      %v1287 = vunpack.c.l.b16 %v1271
      %v1288 = vunpack.c.l.b16 %v1272
      %v1289 = vunpack.c.l.b16 %v1273
      %v1290 = vunpack.c.l.b16 %v1274
      %v1291 = vpack.c.b16 %v1288, %v1287
      %v1292 = vpack.c.b16 %v1290, %v1289
      %1295 = vmatprep.subr.bf16.mxu0 0
      %1296 = vmatpush1.bf16.msra.mxu0 %v1291
      %1297 = vmatprep.subr.bf16.mxu0 0
      %1298 = vmatpush1.bf16.msra.mxu0 %v1292
      %1299 = vmatprep.subr.bf16.mxu0 0
      %1300 = vmatpush1.bf16.msra.mxu0 0
      %1301 = vmatprep.subr.bf16.mxu0 0
      %1302 = vmatpush1.bf16.msra.mxu0 0
      %1303 = vmatprep.subr.bf16.mxu0 0
      %1304 = vmatpush1.bf16.msra.mxu0 0
      %1305 = vmatprep.subr.bf16.mxu0 0
      %1306 = vmatpush1.bf16.msra.mxu0 0
      %1307 = vmatprep.subr.bf16.mxu0 0
      %1308 = vmatpush1.bf16.msra.mxu0 0
      %1309 = vmatprep.subr.bf16.mxu0 0
      %1310 = vmatpush1.bf16.msra.mxu0 0
      %1311 = vmatprep.subr.bf16.mxu0 0
      %1312 = vmatpush1.bf16.msra.mxu0 0
      %1313 = vmatprep.subr.bf16.mxu0 0
      %1314 = vmatpush1.bf16.msra.mxu0 0
      %1315 = vmatprep.subr.bf16.mxu0 0
      %1316 = vmatpush1.bf16.msra.mxu0 0
      %1317 = vmatprep.subr.bf16.mxu0 0
      %1318 = vmatpush1.bf16.msra.mxu0 0
      %1319 = vmatprep.subr.bf16.mxu0 0
      %1320 = vmatpush1.bf16.msra.mxu0 0
      %1321 = vmatprep.subr.bf16.mxu0 0
      %1322 = vmatpush1.bf16.msra.mxu0 0
      %1323 = vmatprep.subr.bf16.mxu0 0
      %1324 = vmatpush1.bf16.msra.mxu0 0
      %1325 = vmatprep.subr.bf16.mxu0 0
      %1326 = vmatpush1.bf16.msra.mxu0 0
      %1327 = vmatprep.mubr.bf16.mxu0 0
      %1328 = vmatmul.mubr.bf16.gmra.mrb[0].mxu0 %v780
      %v1329 = vpop.f32.mrb[0].mxu0
      %v1330 = vadd.f32 %v1281, %v1329
      %v1331 = vpop.f32.mrb[0].mxu0
      %v1332 = vpop.f32.mrb[0].mxu0
      %v1333 = vadd.f32 %v1281, %v1332
      %v1334 = vpop.f32.mrb[0].mxu0
      %1335 = vdwg.mxu0
      %v1336 = vpack.c.bf16 %v1201, %v1198
      %v1337 = vpack.c.bf16 %v1267, %v1264
      %v1339 = vsel %vm957, %v1336, 0
      %v1342 = vsel %vm957, %v1337, 0
      %1344 = vmatprep.subr.bf16.mxu0 0
      %1345 = vmatpush1.bf16.xpose.msra.mxu0 %v1342
      %1346 = vmatprep.subr.bf16.mxu0 0
      %1347 = vmatpush1.bf16.xpose.msra.mxu0 0
      %1348 = vmatprep.subr.bf16.mxu0 0
      %1349 = vmatpush1.bf16.xpose.msra.mxu0 0
      %1350 = vmatprep.subr.bf16.mxu0 0
      %1351 = vmatpush1.bf16.xpose.msra.mxu0 0
      %1352 = vmatprep.subr.bf16.mxu0 0
      %1353 = vmatpush1.bf16.xpose.msra.mxu0 0
      %1354 = vmatprep.subr.bf16.mxu0 0
      %1355 = vmatpush1.bf16.xpose.msra.mxu0 0
      %1356 = vmatprep.subr.bf16.mxu0 0
      %1357 = vmatpush1.bf16.xpose.msra.mxu0 0
      %1358 = vmatprep.subr.bf16.mxu0 0
      %1359 = vmatpush1.bf16.xpose.msra.mxu0 0
      %1360 = vmatprep.subr.bf16.mxu0 0
      %1361 = vmatpush1.bf16.xpose.msra.mxu0 0
      %1362 = vmatprep.subr.bf16.mxu0 0
      %1363 = vmatpush1.bf16.xpose.msra.mxu0 0
      %1364 = vmatprep.subr.bf16.mxu0 0
      %1365 = vmatpush1.bf16.xpose.msra.mxu0 0
      %1366 = vmatprep.subr.bf16.mxu0 0
      %1367 = vmatpush1.bf16.xpose.msra.mxu0 0
      %1368 = vmatprep.subr.bf16.mxu0 0
      %1369 = vmatpush1.bf16.xpose.msra.mxu0 0
      %1370 = vmatprep.subr.bf16.mxu0 0
      %1371 = vmatpush1.bf16.xpose.msra.mxu0 0
      %1372 = vmatprep.subr.bf16.mxu0 0
      %1373 = vmatpush1.bf16.xpose.msra.mxu0 0
      %1374 = vmatprep.subr.bf16.mxu0 0
      %1375 = vmatpush1.bf16.xpose.msra.mxu0 0
      %1376 = vmatprep.mubr.bf16.mxu0 0
      %1377 = vmatmul.mubr.bf16.gmra.mrb[0].mxu0 %v1339
      %v1378 = vpop.f32.mrb[0].mxu0
      %v1379 = vadd.f32 0.0, %v1378
      %v1380 = vpop.f32.mrb[0].mxu0
      %v1381 = vpop.f32.mrb[0].mxu0
      %v1382 = vadd.f32 0.0, %v1381
      %v1383 = vpop.f32.mrb[0].mxu0
      %1384 = vdwg.mxu0
      %v1385 = vmul.f32 %v1379, 0.25
      %v1386 = vmul.f32 %v1382, 0.25
      %v1387 = vadd.f32 %v1385, %v752
      %v1388 = vadd.f32 %v1386, %v753
      %v1389 = vsel %vm957, %v1387, -inf
      %1390 = vmax.xlane.f32.xlu0 %v1389
      %v1391 = vpop.xlane.xlu0 %1390
      %v1392 = vsel %vm957, %v1388, -inf
      %1393 = vmax.xlane.f32.xlu0 %v1392
      %v1394 = vpop.xlane.xlu0 %1393
      %v1395 = vsub.f32 %v1387, %v1391
      %v1396 = vsub.f32 %v1388, %v1394
      %v1397 = vmul.f32 %v1395, 1.442695
      %v1398 = vpow.pop %v1397
      %v1399 = vmul.f32 %v1396, 1.442695
      %v1400 = vpow.pop %v1399
      %v1401 = vsel %vm957, %v1398, 0.0
      %1402 = vadd.xlane.f32.xlu0 %v1401
      %v1403 = vpop.xlane.xlu0 %1402
      %v1404 = vsel %vm957, %v1400, 0.0
      %1405 = vadd.xlane.f32.xlu0 %v1404
      %v1406 = vpop.xlane.xlu0 %1405
      %v1407 = vrcp.pop %v1403
      %v1408 = vrcp.pop %v1406
      %v1409 = vmul.f32 %v1398, %v1407
      %v1410 = vmul.f32 %v1400, %v1408
      %v1411 = vpack.c.bf16 %v1410, %v1409
      %v1412 = vpack.c.bf16 %v1333, %v1330
      %v1414 = vsel %vm957, %v1411, 0
      %1416 = vmatprep.subr.bf16.mxu0 0
      %1417 = vmatpush1.bf16.msra.mxu0 %v1412
      %1418 = vmatprep.subr.bf16.mxu0 0
      %1419 = vmatpush1.bf16.msra.mxu0 0
      %1420 = vmatprep.subr.bf16.mxu0 0
      %1421 = vmatpush1.bf16.msra.mxu0 0
      %1422 = vmatprep.subr.bf16.mxu0 0
      %1423 = vmatpush1.bf16.msra.mxu0 0
      %1424 = vmatprep.subr.bf16.mxu0 0
      %1425 = vmatpush1.bf16.msra.mxu0 0
      %1426 = vmatprep.subr.bf16.mxu0 0
      %1427 = vmatpush1.bf16.msra.mxu0 0
      %1428 = vmatprep.subr.bf16.mxu0 0
      %1429 = vmatpush1.bf16.msra.mxu0 0
      %1430 = vmatprep.subr.bf16.mxu0 0
      %1431 = vmatpush1.bf16.msra.mxu0 0
      %1432 = vmatprep.subr.bf16.mxu0 0
      %1433 = vmatpush1.bf16.msra.mxu0 0
      %1434 = vmatprep.subr.bf16.mxu0 0
      %1435 = vmatpush1.bf16.msra.mxu0 0
      %1436 = vmatprep.subr.bf16.mxu0 0
      %1437 = vmatpush1.bf16.msra.mxu0 0
      %1438 = vmatprep.subr.bf16.mxu0 0
      %1439 = vmatpush1.bf16.msra.mxu0 0
      %1440 = vmatprep.subr.bf16.mxu0 0
      %1441 = vmatpush1.bf16.msra.mxu0 0
      %1442 = vmatprep.subr.bf16.mxu0 0
      %1443 = vmatpush1.bf16.msra.mxu0 0
      %1444 = vmatprep.subr.bf16.mxu0 0
      %1445 = vmatpush1.bf16.msra.mxu0 0
      %1446 = vmatprep.subr.bf16.mxu0 0
      %1447 = vmatpush1.bf16.msra.mxu0 0
      %1448 = vmatprep.mubr.bf16.mxu0 0
      %1449 = vmatmul.mubr.bf16.gmra.mrb[0].mxu0 %v1414
      %v1450 = vpop.f32.mrb[0].mxu0
      %v1451 = vadd.f32 0.0, %v1450
      %v1452 = vpop.f32.mrb[0].mxu0
      %v1453 = vpop.f32.mrb[0].mxu0
      %v1454 = vadd.f32 0.0, %v1453
      %v1455 = vpop.f32.mrb[0].mxu0
      %1456 = vdwg.mxu0
      %v1457 = vpack.c.bf16 %v1454, %v1451
      %s1458 = scalar_lea.vmem %s661, 8
      %v1459 = vld [vmem:[%s1458] sm:$0xf]
      %v1460 = vld [vmem:[%s1458 + $0x4] sm:$0xf]
      %v1463 = vunpack.c.l.b16 %v1459
      %v1464 = vunpack.c.l.b16 %v1460
      %v1465 = vpack.c.b16 %v1464, %v1463
      %v1468 = vsel %vm957, %v1457, 0
      %1470 = vmatprep.subr.bf16.mxu0 0
      %1471 = vmatpush1.bf16.msra.mxu0 %v1465
      %1472 = vmatprep.subr.bf16.mxu0 0
      %1473 = vmatpush1.bf16.msra.mxu0 0
      %1474 = vmatprep.subr.bf16.mxu0 0
      %1475 = vmatpush1.bf16.msra.mxu0 0
      %1476 = vmatprep.subr.bf16.mxu0 0
      %1477 = vmatpush1.bf16.msra.mxu0 0
      %1478 = vmatprep.subr.bf16.mxu0 0
      %1479 = vmatpush1.bf16.msra.mxu0 0
      %1480 = vmatprep.subr.bf16.mxu0 0
      %1481 = vmatpush1.bf16.msra.mxu0 0
      %1482 = vmatprep.subr.bf16.mxu0 0
      %1483 = vmatpush1.bf16.msra.mxu0 0
      %1484 = vmatprep.subr.bf16.mxu0 0
      %1485 = vmatpush1.bf16.msra.mxu0 0
      %1486 = vmatprep.subr.bf16.mxu0 0
      %1487 = vmatpush1.bf16.msra.mxu0 0
      %1488 = vmatprep.subr.bf16.mxu0 0
      %1489 = vmatpush1.bf16.msra.mxu0 0
      %1490 = vmatprep.subr.bf16.mxu0 0
      %1491 = vmatpush1.bf16.msra.mxu0 0
      %1492 = vmatprep.subr.bf16.mxu0 0
      %1493 = vmatpush1.bf16.msra.mxu0 0
      %1494 = vmatprep.subr.bf16.mxu0 0
      %1495 = vmatpush1.bf16.msra.mxu0 0
      %1496 = vmatprep.subr.bf16.mxu0 0
      %1497 = vmatpush1.bf16.msra.mxu0 0
      %1498 = vmatprep.subr.bf16.mxu0 0
      %1499 = vmatpush1.bf16.msra.mxu0 0
      %1500 = vmatprep.subr.bf16.mxu0 0
      %1501 = vmatpush1.bf16.msra.mxu0 0
      %1502 = vmatprep.mubr.bf16.mxu0 0
      %1503 = vmatmul.mubr.bf16.gmra.mrb[0].mxu0 %v1468
      %v1504 = vpop.f32.mrb[0].mxu0
      %v1505 = vadd.f32 0.0, %v1504
      %v1506 = vpop.f32.mrb[0].mxu0
      %v1507 = vpop.f32.mrb[0].mxu0
      %v1508 = vadd.f32 0.0, %v1507
      %v1509 = vpop.f32.mrb[0].mxu0
      %1510 = vdwg.mxu0
      %v1511 = vadd.f32 %v1136, %v1505
      %v1512 = vadd.f32 %v1137, %v1508
      %v1513 = vadd.f32 %v749, %v1511
      %v1514 = vadd.f32 %v750, %v1512
      %v1515 = vld [vmem:[%s668] sm:$0x1]
      %v1516 = vld [vmem:[%s671] sm:$0x1]
      %v1517 = vsel %vm778, %v1513, 0.0
      %1518 = vadd.xlane.f32.xlu0 %v1517
      %v1519 = vpop.xlane.xlu0 %1518
      %v1520 = vsel %vm778, %v1514, 0.0
      %1521 = vadd.xlane.f32.xlu0 %v1520
      %v1522 = vpop.xlane.xlu0 %1521
      %v1523 = vrcp.pop 32.0
      %v1524 = vmul.f32 %v1519, %v1523
      %v1525 = vmul.f32 %v1522, %v1523
      %v1526 = vsub.f32 %v1513, %v1524
      %v1527 = vsub.f32 %v1514, %v1525
      %v1528 = vmul.f32 %v1526, %v1526
      %v1529 = vmul.f32 %v1527, %v1527
      %v1530 = vsel %vm778, %v1528, 0.0
      %1531 = vadd.xlane.f32.xlu0 %v1530
      %v1532 = vpop.xlane.xlu0 %1531
      %v1533 = vsel %vm778, %v1529, 0.0
      %1534 = vadd.xlane.f32.xlu0 %v1533
      %v1535 = vpop.xlane.xlu0 %1534
      %v1536 = vmul.f32 %v1532, %v1523
      %v1537 = vmul.f32 %v1535, %v1523
      %v1538 = vadd.f32 %v1536, 1e-12
      %v1539 = vadd.f32 %v1537, 1e-12
      %v1540 = vrsqrt.pop %v1538
      %v1541 = vrsqrt.pop %v1539
      %v1542 = vmul.f32 %v1526, %v1540
      %v1543 = vmul.f32 %v1527, %v1541
      %v1545 = vlaneseq
      %v1546 = vshrl.u32 %v1545, 7
      %v1547 = vsub.s32 0, %v1546
      %v1548 = vrot.slane %v1515, %v1547
      %v1550 = vmul.f32 %v1542, %v1548
      %v1551 = vmul.f32 %v1543, %v1548
      %v1553 = vlaneseq
      %v1554 = vshrl.u32 %v1553, 7
      %v1555 = vsub.s32 0, %v1554
      %v1556 = vrot.slane %v1516, %v1555
      %v1558 = vadd.f32 %v1550, %v1556
      %v1559 = vadd.f32 %v1551, %v1556
      %v1560 = vpack.c.bf16 %v1559, %v1558
      %v1561 = vld [vmem:[%s676] sm:$0xf]
      %v1562 = vld [vmem:[%s676 + $0x4] sm:$0xf]
      %v1563 = vld [vmem:[%s676 + $0x8] sm:$0xf]
      %v1564 = vld [vmem:[%s676 + $0xc] sm:$0xf]
      %v1565 = vld [vmem:[%s679] sm:$0x1]
      %v1567 = vlaneseq
      %v1568 = vshrl.u32 %v1567, 7
      %v1569 = vsub.s32 0, %v1568
      %v1570 = vrot.slane %v1565, %v1569
      %v1576 = vunpack.c.l.b16 %v1561
      %v1577 = vunpack.c.l.b16 %v1562
      %v1578 = vunpack.c.l.b16 %v1563
      %v1579 = vunpack.c.l.b16 %v1564
      %v1580 = vpack.c.b16 %v1577, %v1576
      %v1581 = vpack.c.b16 %v1579, %v1578
      %v1585 = vsel %vm778, %v1560, 0
      %1587 = vmatprep.subr.bf16.mxu0 0
      %1588 = vmatpush1.bf16.msra.mxu0 %v1580
      %1589 = vmatprep.subr.bf16.mxu0 0
      %1590 = vmatpush1.bf16.msra.mxu0 %v1581
      %1591 = vmatprep.subr.bf16.mxu0 0
      %1592 = vmatpush1.bf16.msra.mxu0 0
      %1593 = vmatprep.subr.bf16.mxu0 0
      %1594 = vmatpush1.bf16.msra.mxu0 0
      %1595 = vmatprep.subr.bf16.mxu0 0
      %1596 = vmatpush1.bf16.msra.mxu0 0
      %1597 = vmatprep.subr.bf16.mxu0 0
      %1598 = vmatpush1.bf16.msra.mxu0 0
      %1599 = vmatprep.subr.bf16.mxu0 0
      %1600 = vmatpush1.bf16.msra.mxu0 0
      %1601 = vmatprep.subr.bf16.mxu0 0
      %1602 = vmatpush1.bf16.msra.mxu0 0
      %1603 = vmatprep.subr.bf16.mxu0 0
      %1604 = vmatpush1.bf16.msra.mxu0 0
      %1605 = vmatprep.subr.bf16.mxu0 0
      %1606 = vmatpush1.bf16.msra.mxu0 0
      %1607 = vmatprep.subr.bf16.mxu0 0
      %1608 = vmatpush1.bf16.msra.mxu0 0
      %1609 = vmatprep.subr.bf16.mxu0 0
      %1610 = vmatpush1.bf16.msra.mxu0 0
      %1611 = vmatprep.subr.bf16.mxu0 0
      %1612 = vmatpush1.bf16.msra.mxu0 0
      %1613 = vmatprep.subr.bf16.mxu0 0
      %1614 = vmatpush1.bf16.msra.mxu0 0
      %1615 = vmatprep.subr.bf16.mxu0 0
      %1616 = vmatpush1.bf16.msra.mxu0 0
      %1617 = vmatprep.subr.bf16.mxu0 0
      %1618 = vmatpush1.bf16.msra.mxu0 0
      %1619 = vmatprep.mubr.bf16.mxu0 0
      %1620 = vmatmul.mubr.bf16.gmra.mrb[0].mxu0 %v1585
      %v1621 = vpop.f32.mrb[0].mxu0
      %v1622 = vadd.f32 %v1570, %v1621
      %v1623 = vpop.f32.mrb[0].mxu0
      %v1624 = vpop.f32.mrb[0].mxu0
      %v1625 = vadd.f32 %v1570, %v1624
      %v1626 = vpop.f32.mrb[0].mxu0
      %1627 = vdwg.mxu0
      %v1628 = vmul.f32 %v1622, 0.5
      %v1629 = vmul.f32 %v1625, 0.5
      %v1630 = vmul.f32 %v1622, 0.70710677
      %v1631 = vmul.f32 %v1625, 0.70710677
      %v1632 = verf.f32.pop %v1630
      %v1633 = verf.f32.pop %v1631
      %v1634 = vadd.f32 %v1632, 1.0
      %v1635 = vadd.f32 %v1633, 1.0
      %v1636 = vmul.f32 %v1628, %v1634
      %v1637 = vmul.f32 %v1629, %v1635
      %v1638 = vpack.c.bf16 %v1637, %v1636
      %v1639 = vld [vmem:[%s684] sm:$0xf]
      %v1640 = vld [vmem:[%s684 + $0x4] sm:$0xf]
      %v1641 = vld [vmem:[%s684 + $0x8] sm:$0xf]
      %v1642 = vld [vmem:[%s684 + $0xc] sm:$0xf]
      %v1643 = vld [vmem:[%s684 + $0x10] sm:$0xf]
      %v1644 = vld [vmem:[%s684 + $0x14] sm:$0xf]
      %v1645 = vld [vmem:[%s684 + $0x18] sm:$0xf]
      %v1646 = vld [vmem:[%s684 + $0x1c] sm:$0xf]
      %v1647 = vld [vmem:[%s687] sm:$0x1]
      %v1649 = vlaneseq
      %v1650 = vshrl.u32 %v1649, 7
      %v1651 = vsub.s32 0, %v1650
      %v1652 = vrot.slane %v1647, %v1651
      %v1662 = vunpack.c.l.b16 %v1639
      %v1663 = vunpack.c.l.b16 %v1640
      %v1664 = vunpack.c.l.b16 %v1641
      %v1665 = vunpack.c.l.b16 %v1642
      %v1666 = vunpack.c.l.b16 %v1643
      %v1667 = vunpack.c.l.b16 %v1644
      %v1668 = vunpack.c.l.b16 %v1645
      %v1669 = vunpack.c.l.b16 %v1646
      %v1670 = vpack.c.b16 %v1663, %v1662
      %v1671 = vpack.c.b16 %v1665, %v1664
      %v1672 = vpack.c.b16 %v1667, %v1666
      %v1673 = vpack.c.b16 %v1669, %v1668
      %vm1678 = vcmask 523264
      %v1680 = vsel %vm1678, %v1638, 0
      %1682 = vmatprep.subr.bf16.mxu0 0
      %1683 = vmatpush1.bf16.msra.mxu0 %v1670
      %1684 = vmatprep.subr.bf16.mxu0 0
      %1685 = vmatpush1.bf16.msra.mxu0 %v1671
      %1686 = vmatprep.subr.bf16.mxu0 0
      %1687 = vmatpush1.bf16.msra.mxu0 %v1672
      %1688 = vmatprep.subr.bf16.mxu0 0
      %1689 = vmatpush1.bf16.msra.mxu0 %v1673
      %1690 = vmatprep.subr.bf16.mxu0 0
      %1691 = vmatpush1.bf16.msra.mxu0 0
      %1692 = vmatprep.subr.bf16.mxu0 0
      %1693 = vmatpush1.bf16.msra.mxu0 0
      %1694 = vmatprep.subr.bf16.mxu0 0
      %1695 = vmatpush1.bf16.msra.mxu0 0
      %1696 = vmatprep.subr.bf16.mxu0 0
      %1697 = vmatpush1.bf16.msra.mxu0 0
      %1698 = vmatprep.subr.bf16.mxu0 0
      %1699 = vmatpush1.bf16.msra.mxu0 0
      %1700 = vmatprep.subr.bf16.mxu0 0
      %1701 = vmatpush1.bf16.msra.mxu0 0
      %1702 = vmatprep.subr.bf16.mxu0 0
      %1703 = vmatpush1.bf16.msra.mxu0 0
      %1704 = vmatprep.subr.bf16.mxu0 0
      %1705 = vmatpush1.bf16.msra.mxu0 0
      %1706 = vmatprep.subr.bf16.mxu0 0
      %1707 = vmatpush1.bf16.msra.mxu0 0
      %1708 = vmatprep.subr.bf16.mxu0 0
      %1709 = vmatpush1.bf16.msra.mxu0 0
      %1710 = vmatprep.subr.bf16.mxu0 0
      %1711 = vmatpush1.bf16.msra.mxu0 0
      %1712 = vmatprep.subr.bf16.mxu0 0
      %1713 = vmatpush1.bf16.msra.mxu0 0
      %1714 = vmatprep.mubr.bf16.mxu0 0
      %1715 = vmatmul.mubr.bf16.gmra.mrb[0].mxu0 %v1680
      %v1716 = vpop.f32.mrb[0].mxu0
      %v1717 = vadd.f32 %v1652, %v1716
      %v1718 = vpop.f32.mrb[0].mxu0
      %v1719 = vpop.f32.mrb[0].mxu0
      %v1720 = vadd.f32 %v1652, %v1719
      %v1721 = vpop.f32.mrb[0].mxu0
      %1722 = vdwg.mxu0
      %v1723 = vadd.f32 %v1558, %v1717
      %v1724 = vadd.f32 %v1559, %v1720
      %v1725 = vld [vmem:[%s690] sm:$0x1]
      %v1726 = vld [vmem:[%s693] sm:$0x1]
      %v1727 = vsel %vm778, %v1723, 0.0
      %1728 = vadd.xlane.f32.xlu0 %v1727
      %v1729 = vpop.xlane.xlu0 %1728
      %v1730 = vsel %vm778, %v1724, 0.0
      %1731 = vadd.xlane.f32.xlu0 %v1730
      %v1732 = vpop.xlane.xlu0 %1731
      %v1733 = vmul.f32 %v1729, %v1523
      %v1734 = vmul.f32 %v1732, %v1523
      %v1735 = vsub.f32 %v1723, %v1733
      %v1736 = vsub.f32 %v1724, %v1734
      %v1737 = vmul.f32 %v1735, %v1735
      %v1738 = vmul.f32 %v1736, %v1736
      %v1739 = vsel %vm778, %v1737, 0.0
      %1740 = vadd.xlane.f32.xlu0 %v1739
      %v1741 = vpop.xlane.xlu0 %1740
      %v1742 = vsel %vm778, %v1738, 0.0
      %1743 = vadd.xlane.f32.xlu0 %v1742
      %v1744 = vpop.xlane.xlu0 %1743
      %v1745 = vmul.f32 %v1741, %v1523
      %v1746 = vmul.f32 %v1744, %v1523
      %v1747 = vadd.f32 %v1745, 1e-12
      %v1748 = vadd.f32 %v1746, 1e-12
      %v1749 = vrsqrt.pop %v1747
      %v1750 = vrsqrt.pop %v1748
      %v1751 = vmul.f32 %v1735, %v1749
      %v1752 = vmul.f32 %v1736, %v1750
      %v1754 = vlaneseq
      %v1755 = vshrl.u32 %v1754, 7
      %v1756 = vsub.s32 0, %v1755
      %v1757 = vrot.slane %v1725, %v1756
      %v1759 = vmul.f32 %v1751, %v1757
      %v1760 = vmul.f32 %v1752, %v1757
      %v1762 = vlaneseq
      %v1763 = vshrl.u32 %v1762, 7
      %v1764 = vsub.s32 0, %v1763
      %v1765 = vrot.slane %v1726, %v1764
      %v1767 = vadd.f32 %v1759, %v1765
      %v1768 = vadd.f32 %v1760, %v1765
      %1769 = vst.msk [vmem:[#allocation2] sm:$0xff] %vm778, %v1767
      %1770 = vst.msk [vmem:[#allocation2 + $0x8] sm:$0xff] %vm778, %v1768
      %p1771 = scmp.eq.s32.totalorder %s27, 1
      // Predicated region
      $region89: #{bert_for_pretraining.2} parent=83 // pred_check
        %p1772 = pneg %p1771
      $region90: #{bert_for_pretraining.2} parent=83 // pred_check_branch
        %1774 = sbr.rel (%p1772) target = $region92
      $region91: #{bert_for_pretraining.2} parent=83 // pred_region
        %1775 = vst.msk [vmem:[%s16] sm:$0xff] %vm778, %v1767
        %1776 = vst.msk [vmem:[%s16 + $0x8] sm:$0xff] %vm778, %v1768
      $region92: #{bert_for_pretraining.2} parent=83 // pred_fallthru
        _
      // Predicated region
      $region93: #{bert_for_pretraining.2} parent=83 // pred_check
        %p1777 = pneg %p436
      $region94: #{bert_for_pretraining.2} parent=83 // pred_check_branch
        %1779 = sbr.rel (%p1777) target = $region96
      $region95: #{bert_for_pretraining.2} parent=83 // pred_region
        _
      $region96: #{bert_for_pretraining.2} parent=83 // pred_fallthru
        _
      // Predicated region
      $region97: #{bert_for_pretraining.2} parent=83 // pred_check
        %p1780 = pneg %p436
      $region98: #{bert_for_pretraining.2} parent=83 // pred_check_branch
        %1782 = sbr.rel (%p1780) target = $region100
      $region99: #{bert_for_pretraining.2} parent=83 // pred_region
        _
      $region100: #{bert_for_pretraining.2} parent=83 // pred_fallthru
        _
    $region84: #{bert_for_pretraining.2} parent=5 // pred_fallthru
      _
    %p1783 = scmp.le.s32.totalorder 2, %s22
    // Predicated region
    $region101: #{bert_for_pretraining.2} parent=5 // pred_check
      %p1784 = pneg %p1783
    $region102: #{bert_for_pretraining.2} parent=5 // pred_check_branch
      %1786 = sbr.rel (%p1784) target = $region104
    $region103: #{bert_for_pretraining.2} parent=5 // pred_region
      %s1787 = ssub.s32 %s22, 2
    $region104: #{bert_for_pretraining.2} parent=5 // pred_fallthru
      _
  $region6: #{bert_for_pretraining.2} parent=0 // loop_footer
    %s26 = sadd.s32 1, %s22
  $region7: #{bert_for_pretraining.2} parent=0 // loop_footer_branch
    %21 = sbr.rel target = $region3
  $region8: #{bert_for_pretraining.2} parent=0 // loop_exit
    _

</llo_original>
